<compile_context>
chip_gen: v7x
topology: tpu7x:2x2x1
jax: 0.10.0
libtpu: 0.0.40
codegen_flags: <defaults>
</compile_context>

<pallas_src>
import math
from functools import partial

import jax
import jax.numpy as jnp
from jax import lax
from jax.experimental import pallas as pl
from jax.experimental.pallas import tpu as pltpu  # noqa: F401  (TPU backend assumed)

# ----------------------------- model / problem config -----------------------------
PAD_IDX, BOS_IDX, EOS_IDX = 1, 2, 3
MAX_LEN = 15

BATCH = 2
SRC_LEN = 8
EMB_SIZE = 32
NHEAD = 2
HEAD_DIM = EMB_SIZE // NHEAD
FFN_DIM = 64
NUM_ENC_LAYERS = 1
NUM_DEC_LAYERS = 1
SRC_VOCAB = 16
TGT_VOCAB = 16

NEG_INF = -1e9  # finite "-inf": stacked masks stay finite, exp underflows to exactly 0

T_PAD = MAX_LEN + 1          # fixed decoder length (16)
DEC_ROWS = BATCH * T_PAD     # decoder rows, batch-major (row = b*T_PAD + t)
ENC_ROWS = BATCH * SRC_LEN   # encoder rows, batch-major (row = b*SRC_LEN + t)


# ------------------------------- in-kernel helpers ---------------------------------
def _layer_norm(x, g, b):
    mu = jnp.mean(x, axis=-1, keepdims=True)
    var = jnp.mean(jnp.square(x - mu), axis=-1, keepdims=True)
    return (x - mu) * lax.rsqrt(var + 1e-5) * g + b


def _mha(xq, xkv, p, mask):
    """Multi-head attention on flattened batch-major row tensors.

    xq [Rq, E], xkv [Rk, E]; mask [Rq, Rk] additive (block-diagonal across batches
    with causal / src-padding already folded in).  Heads are unrolled; the output
    projection is accumulated per head, so no head-concat / scratch is needed.
    """
    E, DH = EMB_SIZE, HEAD_DIM
    wqkv = p["wqkv"][...]
    bqkv = p["bqkv"][...]
    if xq is xkv:  # self-attention: one fused [R,E]@[E,3E] projection
        qkv = jnp.dot(xq, wqkv, preferred_element_type=jnp.float32) + bqkv
        q, k, v = qkv[:, :E], qkv[:, E:2 * E], qkv[:, 2 * E:]
    else:          # cross-attention: q from xq, packed kv from xkv
        q = jnp.dot(xq, wqkv[:, :E], preferred_element_type=jnp.float32) + bqkv[:, :E]
        kv = jnp.dot(xkv, wqkv[:, E:], preferred_element_type=jnp.float32) + bqkv[:, E:]
        k, v = kv[:, :E], kv[:, E:]

    wo = p["wo"][...]
    scale = 1.0 / math.sqrt(DH)
    out = None
    for h in range(NHEAD):
        qh = q[:, h * DH:(h + 1) * DH]
        kh = k[:, h * DH:(h + 1) * DH]
        vh = v[:, h * DH:(h + 1) * DH]
        s = jnp.dot(qh, kh.T, preferred_element_type=jnp.float32) * scale + mask
        s = s - jnp.max(s, axis=-1, keepdims=True)
        ph = jnp.exp(s)
        ph = ph / jnp.sum(ph, axis=-1, keepdims=True)
        ctx = jnp.dot(ph, vh, preferred_element_type=jnp.float32)
        oh = jnp.dot(ctx, wo[h * DH:(h + 1) * DH, :], preferred_element_type=jnp.float32)
        out = oh if out is None else out + oh
    return out + p["bo"][...]


def _ffn(x, p):
    h = jnp.maximum(
        jnp.dot(x, p["ff_w1"][...], preferred_element_type=jnp.float32) + p["ff_b1"][...],
        0.0)
    return jnp.dot(h, p["ff_w2"][...], preferred_element_type=jnp.float32) + p["ff_b2"][...]


def _encoder_layer(x, p, mask):
    sa = _mha(x, x, p["self_attn"], mask)
    x = _layer_norm(x + sa, p["n1_g"][...], p["n1_b"][...])
    ff = _ffn(x, p)
    return _layer_norm(x + ff, p["n2_g"][...], p["n2_b"][...])


def _decoder_layer(x, memory, p, self_mask, cross_mask):
    sa = _mha(x, x, p["self_attn"], self_mask)
    x = _layer_norm(x + sa, p["n1_g"][...], p["n1_b"][...])
    ca = _mha(x, memory, p["cross_attn"], cross_mask)
    x = _layer_norm(x + ca, p["n2_g"][...], p["n2_b"][...])
    ff = _ffn(x, p)
    return _layer_norm(x + ff, p["n3_g"][...], p["n3_b"][...])


# ------------------------------- fused forward kernel ------------------------------
def _fused_greedy_kernel(treedef, n_in, *args):
    refs = jax.tree_util.tree_unflatten(treedef, args[:n_in])
    tok_out = args[n_in]
    data = refs["data"]

    # ------------- encoder: runs once; memory stays resident for the decode -------------
    x = data["src_x"][...]
    enc_mask = data["enc_mask"][...]
    for lp in refs["enc_layers"]:
        x = _encoder_layer(x, lp, enc_mask)
    memory = _layer_norm(x, refs["enc_norm_g"][...], refs["enc_norm_b"][...])

    cross_mask = data["cross_mask"][...]        # [R, ENC_ROWS] (block-diag + src pad)
    dec_base_mask = data["dec_base_mask"][...]  # [R, R]        (block-diag + causal)
    emb_t = data["tgt_emb_scaled"][...]         # [V, E]
    pe_rows = data["pe_tgt_rows"][...]          # [R, E]
    t_of_row = data["t_of_row"][...]            # [R, 1] int32  (position of each row)
    b_onehot = data["b_onehot_rows"][...]       # [R, B] f32    (batch one-hot per row)
    gen_w = refs["gen_w"][...]
    gen_b = refs["gen_b"][...]
    dng = refs["dec_norm_g"][...]
    dnb = refs["dec_norm_b"][...]
    dec_layers = refs["dec_layers"]

    R, V = DEC_ROWS, TGT_VOCAB
    vocab_iota = lax.broadcasted_iota(jnp.int32, (R, V), 1)
    col_i = lax.broadcasted_iota(jnp.int32, (BATCH, R), 1)
    row_b = lax.broadcasted_iota(jnp.int32, (BATCH, R), 0)
    out_vocab_iota = lax.broadcasted_iota(jnp.int32, (BATCH, V), 1).astype(jnp.float32)

    def step_fn(step, tok):
        # tok: [R, 1] int32 token buffer; positions > step hold PAD placeholders that
        # are causally masked away for the only row that is consumed (t == step).
        onehot = (tok == vocab_iota).astype(jnp.float32)                       # [R, V]
        y = jnp.dot(onehot, emb_t, preferred_element_type=jnp.float32) + pe_rows

        key_pad = jnp.where(tok == PAD_IDX, NEG_INF, 0.0)                       # [R, 1]
        self_mask = dec_base_mask + jnp.transpose(key_pad)                      # [R, R]

        for lp in dec_layers:
            y = _decoder_layer(y, memory, lp, self_mask, cross_mask)
        y = _layer_norm(y, dng, dnb)

        # only the last valid position (t == step) goes through the generator
        sel = (col_i == row_b * T_PAD + step).astype(jnp.float32)               # [B, R]
        x_last = jnp.dot(sel, y, preferred_element_type=jnp.float32)            # [B, E]
        logits = jnp.dot(x_last, gen_w, preferred_element_type=jnp.float32) + gen_b
        vmax = jnp.max(logits, axis=-1, keepdims=True)
        cand = jnp.where(logits >= vmax, out_vocab_iota, float(V))
        nxt = jnp.min(cand, axis=-1, keepdims=True)                             # [B, 1]
        nxt_rows = jnp.dot(b_onehot, nxt, preferred_element_type=jnp.float32)   # [R, 1]
        nxt_rows = (nxt_rows + 0.5).astype(jnp.int32)
        return jnp.where(t_of_row == step + 1, nxt_rows, tok)

    tok_out[...] = lax.fori_loop(0, MAX_LEN, step_fn, data["tok_init"][...])


# --------------------------------- wrapper / glue -----------------------------------
def _pack_kernel_inputs(params, src_batch_first):
    B, S, E = BATCH, SRC_LEN, EMB_SIZE
    pe = params["pe"]

    # encoder input: emb * sqrt(E) + positional encoding, batch-major rows
    src_x = (params["src_emb"][src_batch_first] * math.sqrt(E)
             + pe[None, :S, :]).reshape(B * S, E).astype(jnp.float32)

    # additive masks (block-diagonal across batches; src padding folded in once)
    src_pad = (src_batch_first == PAD_IDX).reshape(B * S)
    key_ok = jnp.logical_not(src_pad)
    bk = jnp.arange(B * S) // S
    bq_dec = jnp.arange(DEC_ROWS) // T_PAD
    tq_dec = jnp.arange(DEC_ROWS) % T_PAD

    enc_mask = jnp.where((bk[:, None] == bk[None, :]) & key_ok[None, :],
                         0.0, NEG_INF).astype(jnp.float32)
    cross_mask = jnp.where((bq_dec[:, None] == bk[None, :]) & key_ok[None, :],
                           0.0, NEG_INF).astype(jnp.float32)
    dec_base_mask = jnp.where(
        (bq_dec[:, None] == bq_dec[None, :]) & (tq_dec[None, :] <= tq_dec[:, None]),
        0.0, NEG_INF).astype(jnp.float32)

    data = dict(
        src_x=src_x,
        enc_mask=enc_mask,
        cross_mask=cross_mask,
        dec_base_mask=dec_base_mask,
        tgt_emb_scaled=(params["tgt_emb"] * math.sqrt(E)).astype(jnp.float32),
        pe_tgt_rows=jnp.tile(pe[:T_PAD, :], (B, 1)).astype(jnp.float32),
        tok_init=jnp.where(tq_dec == 0, BOS_IDX, PAD_IDX).astype(jnp.int32).reshape(DEC_ROWS, 1),
        t_of_row=tq_dec.astype(jnp.int32).reshape(DEC_ROWS, 1),
        b_onehot_rows=(bq_dec[:, None] == jnp.arange(B)[None, :]).astype(jnp.float32),
    )
    return dict(
        data=data,
        enc_layers=params["enc_layers"],
        enc_norm_g=params["enc_norm_g"], enc_norm_b=params["enc_norm_b"],
        dec_layers=params["dec_layers"],
        dec_norm_g=params["dec_norm_g"], dec_norm_b=params["dec_norm_b"],
        gen_w=params["gen_w"], gen_b=params["gen_b"],
    )


@jax.jit
def seq2seq_trainer_forward(params, src_batch_first):
    """Greedy decode, identical semantics to Seq2SeqTrainer.forward (no EOS early stop)."""
    tree = _pack_kernel_inputs(params, src_batch_first)
    flat, treedef = jax.tree_util.tree_flatten(tree)
    n_in = len(flat)
    tok = pl.pallas_call(
        partial(_fused_greedy_kernel, treedef, n_in),
        out_shape=jax.ShapeDtypeStruct((DEC_ROWS, 1), jnp.int32),
    )(*flat)
    decoded = tok.reshape(BATCH, T_PAD).T            # [MAX_LEN+1, B], seq-first like torch
    return decoded, None


# ----------------------------------- parameters -------------------------------------
def init_params(key):
    keys = iter(jax.random.split(key, 256))

    def nrm(shape, scale=0.1):
        return jax.random.normal(next(keys), shape, jnp.float32) * scale

    def linear_p(din, dout):
        return nrm((din, dout)), jnp.zeros((1, dout), jnp.float32)

    def attn_p():
        wqkv, bqkv = linear_p(EMB_SIZE, 3 * EMB_SIZE)      # packed Q|K|V projection
        wo, bo = linear_p(EMB_SIZE, EMB_SIZE)
        return dict(wqkv=wqkv, bqkv=bqkv, wo=wo, bo=bo)

    def enc_layer_p():
        w1, b1 = linear_p(EMB_SIZE, FFN_DIM)
        w2, b2 = linear_p(FFN_DIM, EMB_SIZE)
        ones = lambda: jnp.ones((1, EMB_SIZE), jnp.float32)
        zeros = lambda: jnp.zeros((1, EMB_SIZE), jnp.float32)
        return dict(self_attn=attn_p(), ff_w1=w1, ff_b1=b1, ff_w2=w2, ff_b2=b2,
                    n1_g=ones(), n1_b=zeros(), n2_g=ones(), n2_b=zeros())

    def dec_layer_p():
        p = enc_layer_p()
        p["cross_attn"] = attn_p()
        p["n3_g"] = jnp.ones((1, EMB_SIZE), jnp.float32)
        p["n3_b"] = jnp.zeros((1, EMB_SIZE), jnp.float32)
        return p

    def pe_table(maxlen, emb):
        den = jnp.exp(-jnp.arange(0, emb, 2, dtype=jnp.float32) * (math.log(10000.0) / emb))
        pos = jnp.arange(maxlen, dtype=jnp.float32)[:, None]
        pe = jnp.zeros((maxlen, emb), jnp.float32)
        pe = pe.at[:, 0::2].set(jnp.sin(pos * den))
        pe = pe.at[:, 1::2].set(jnp.cos(pos * den))
        return pe

    gen_w, gen_b = linear_p(EMB_SIZE, TGT_VOCAB)
    return dict(
        src_emb=nrm((SRC_VOCAB, EMB_SIZE), 1.0),
        tgt_emb=nrm((TGT_VOCAB, EMB_SIZE), 1.0),
        pe=pe_table(64, EMB_SIZE),
        enc_layers=[enc_layer_p() for _ in range(NUM_ENC_LAYERS)],
        dec_layers=[dec_layer_p() for _ in range(NUM_DEC_LAYERS)],
        enc_norm_g=jnp.ones((1, EMB_SIZE), jnp.float32),
        enc_norm_b=jnp.zeros((1, EMB_SIZE), jnp.float32),
        dec_norm_g=jnp.ones((1, EMB_SIZE), jnp.float32),
        dec_norm_b=jnp.zeros((1, EMB_SIZE), jnp.float32),
        gen_w=gen_w, gen_b=gen_b,
    )


# --------------------------------------- main ---------------------------------------
if __name__ == "__main__":
    key = jax.random.PRNGKey(0)
    pkey, dkey = jax.random.split(key)
    params = init_params(pkey)

    # src tokens in [4, SRC_VOCAB) so they are neither PAD/BOS/EOS
    src = jax.random.randint(dkey, (BATCH, SRC_LEN), minval=4, maxval=SRC_VOCAB,
                             dtype=jnp.int32)

    decoded, _ = seq2seq_trainer_forward(params, src)
    decoded = jax.block_until_ready(decoded)
    assert decoded.shape == (MAX_LEN + 1, BATCH)
    assert bool(jnp.all(decoded[0] == BOS_IDX))
    print("KERNEL_OK")
</pallas_src>

<mosaic_0001>
module attributes {stable_mosaic.version = 11 : i64} {
  func.func @_fused_greedy_kernel(%arg0: memref<32x2xf32, #tpu.memory_space<vmem>>, %arg1: memref<32x16xf32, #tpu.memory_space<vmem>>, %arg2: memref<32x32xf32, #tpu.memory_space<vmem>>, %arg3: memref<16x16xf32, #tpu.memory_space<vmem>>, %arg4: memref<32x32xf32, #tpu.memory_space<vmem>>, %arg5: memref<16x32xf32, #tpu.memory_space<vmem>>, %arg6: memref<32x1xi32, #tpu.memory_space<vmem>>, %arg7: memref<16x32xf32, #tpu.memory_space<vmem>>, %arg8: memref<32x1xi32, #tpu.memory_space<vmem>>, %arg9: memref<1x32xf32, #tpu.memory_space<vmem>>, %arg10: memref<1x96xf32, #tpu.memory_space<vmem>>, %arg11: memref<32x32xf32, #tpu.memory_space<vmem>>, %arg12: memref<32x96xf32, #tpu.memory_space<vmem>>, %arg13: memref<1x64xf32, #tpu.memory_space<vmem>>, %arg14: memref<1x32xf32, #tpu.memory_space<vmem>>, %arg15: memref<32x64xf32, #tpu.memory_space<vmem>>, %arg16: memref<64x32xf32, #tpu.memory_space<vmem>>, %arg17: memref<1x32xf32, #tpu.memory_space<vmem>>, %arg18: memref<1x32xf32, #tpu.memory_space<vmem>>, %arg19: memref<1x32xf32, #tpu.memory_space<vmem>>, %arg20: memref<1x32xf32, #tpu.memory_space<vmem>>, %arg21: memref<1x32xf32, #tpu.memory_space<vmem>>, %arg22: memref<1x32xf32, #tpu.memory_space<vmem>>, %arg23: memref<1x32xf32, #tpu.memory_space<vmem>>, %arg24: memref<1x96xf32, #tpu.memory_space<vmem>>, %arg25: memref<32x32xf32, #tpu.memory_space<vmem>>, %arg26: memref<32x96xf32, #tpu.memory_space<vmem>>, %arg27: memref<1x32xf32, #tpu.memory_space<vmem>>, %arg28: memref<1x32xf32, #tpu.memory_space<vmem>>, %arg29: memref<1x64xf32, #tpu.memory_space<vmem>>, %arg30: memref<1x32xf32, #tpu.memory_space<vmem>>, %arg31: memref<32x64xf32, #tpu.memory_space<vmem>>, %arg32: memref<64x32xf32, #tpu.memory_space<vmem>>, %arg33: memref<1x32xf32, #tpu.memory_space<vmem>>, %arg34: memref<1x32xf32, #tpu.memory_space<vmem>>, %arg35: memref<1x32xf32, #tpu.memory_space<vmem>>, %arg36: memref<1x32xf32, #tpu.memory_space<vmem>>, %arg37: memref<1x32xf32, #tpu.memory_space<vmem>>, %arg38: memref<1x96xf32, #tpu.memory_space<vmem>>, %arg39: memref<32x32xf32, #tpu.memory_space<vmem>>, %arg40: memref<32x96xf32, #tpu.memory_space<vmem>>, %arg41: memref<1x32xf32, #tpu.memory_space<vmem>>, %arg42: memref<1x32xf32, #tpu.memory_space<vmem>>, %arg43: memref<1x16xf32, #tpu.memory_space<vmem>>, %arg44: memref<32x16xf32, #tpu.memory_space<vmem>>, %arg45: memref<32x1xi32, #tpu.memory_space<vmem>>) attributes {dimension_semantics = [], scalar_prefetch = 0 : i64, scratch_operands = 0 : i64, tpu.core_type = #tpu.core_type<tc>} {
    %c0 = arith.constant 0 : index
    %c0_0 = arith.constant 0 : index
    %0 = vector.load %arg5[%c0, %c0_0] : memref<16x32xf32, #tpu.memory_space<vmem>>, vector<16x32xf32>
    %c0_1 = arith.constant 0 : index
    %c0_2 = arith.constant 0 : index
    %1 = vector.load %arg3[%c0_1, %c0_2] : memref<16x16xf32, #tpu.memory_space<vmem>>, vector<16x16xf32>
    %c0_3 = arith.constant 0 : index
    %c0_4 = arith.constant 0 : index
    %2 = vector.load %arg40[%c0_3, %c0_4] : memref<32x96xf32, #tpu.memory_space<vmem>>, vector<32x96xf32>
    %c0_5 = arith.constant 0 : index
    %c0_6 = arith.constant 0 : index
    %3 = vector.load %arg38[%c0_5, %c0_6] : memref<1x96xf32, #tpu.memory_space<vmem>>, vector<1x96xf32>
    %cst = arith.constant dense<0.000000e+00> : vector<16x96xf32>
    %4 = tpu.matmul %0, %2, %cst {dimension_numbers = #tpu.dot_dimension_numbers<[1], [0], [0], [1], [0, 0, 1, 1], [], []>} : vector<16x32xf32>, vector<32x96xf32>, vector<16x96xf32> -> vector<16x96xf32>
    %5 = vector.broadcast %3 : vector<1x96xf32> to vector<16x96xf32>
    %6 = arith.addf %4, %5 : vector<16x96xf32>
    %7 = vector.extract_strided_slice %6 {offsets = [0, 0], sizes = [16, 32], strides = [1, 1]} : vector<16x96xf32> to vector<16x32xf32>
    %8 = vector.extract_strided_slice %6 {offsets = [0, 32], sizes = [16, 32], strides = [1, 1]} : vector<16x96xf32> to vector<16x32xf32>
    %9 = vector.extract_strided_slice %6 {offsets = [0, 64], sizes = [16, 32], strides = [1, 1]} : vector<16x96xf32> to vector<16x32xf32>
    %c0_7 = arith.constant 0 : index
    %c0_8 = arith.constant 0 : index
    %10 = vector.load %arg39[%c0_7, %c0_8] : memref<32x32xf32, #tpu.memory_space<vmem>>, vector<32x32xf32>
    %11 = vector.extract_strided_slice %7 {offsets = [0, 0], sizes = [16, 16], strides = [1, 1]} : vector<16x32xf32> to vector<16x16xf32>
    %12 = vector.extract_strided_slice %8 {offsets = [0, 0], sizes = [16, 16], strides = [1, 1]} : vector<16x32xf32> to vector<16x16xf32>
    %13 = vector.extract_strided_slice %9 {offsets = [0, 0], sizes = [16, 16], strides = [1, 1]} : vector<16x32xf32> to vector<16x16xf32>
    %14 = tpu.transpose %12, [1, 0] : vector<16x16xf32> -> vector<16x16xf32>
    %cst_9 = arith.constant dense<0.000000e+00> : vector<16x16xf32>
    %15 = tpu.matmul %11, %14, %cst_9 {dimension_numbers = #tpu.dot_dimension_numbers<[1], [0], [0], [1], [0, 0, 1, 1], [], []>} : vector<16x16xf32>, vector<16x16xf32>, vector<16x16xf32> -> vector<16x16xf32>
    %cst_10 = arith.constant 2.500000e-01 : f32
    %16 = vector.broadcast %cst_10 : f32 to vector<16x16xf32>
    %17 = arith.mulf %15, %16 : vector<16x16xf32>
    %18 = arith.addf %17, %1 : vector<16x16xf32>
    %cst_11 = arith.constant dense<0xFF800000> : vector<16xf32>
    %19 = vector.multi_reduction <maximumf>, %18, %cst_11 [1] : vector<16x16xf32> to vector<16xf32>
    %20 = vector.shape_cast %19 : vector<16xf32> to vector<16x1xf32>
    %21 = vector.broadcast %20 : vector<16x1xf32> to vector<16x16xf32>
    %22 = arith.subf %18, %21 : vector<16x16xf32>
    %23 = math.exp %22 : vector<16x16xf32>
    %cst_12 = arith.constant dense<0.000000e+00> : vector<16xf32>
    %24 = vector.multi_reduction <add>, %23, %cst_12 [1] : vector<16x16xf32> to vector<16xf32>
    %25 = vector.shape_cast %24 : vector<16xf32> to vector<16x1xf32>
    %26 = vector.broadcast %25 : vector<16x1xf32> to vector<16x16xf32>
    %27 = arith.divf %23, %26 : vector<16x16xf32>
    %cst_13 = arith.constant dense<0.000000e+00> : vector<16x16xf32>
    %28 = tpu.matmul %27, %13, %cst_13 {dimension_numbers = #tpu.dot_dimension_numbers<[1], [0], [0], [1], [0, 0, 1, 1], [], []>} : vector<16x16xf32>, vector<16x16xf32>, vector<16x16xf32> -> vector<16x16xf32>
    %29 = vector.extract_strided_slice %10 {offsets = [0, 0], sizes = [16, 32], strides = [1, 1]} : vector<32x32xf32> to vector<16x32xf32>
    %cst_14 = arith.constant dense<0.000000e+00> : vector<16x32xf32>
    %30 = tpu.matmul %28, %29, %cst_14 {dimension_numbers = #tpu.dot_dimension_numbers<[1], [0], [0], [1], [0, 0, 1, 1], [], []>} : vector<16x16xf32>, vector<16x32xf32>, vector<16x32xf32> -> vector<16x32xf32>
    %31 = vector.extract_strided_slice %7 {offsets = [0, 16], sizes = [16, 16], strides = [1, 1]} : vector<16x32xf32> to vector<16x16xf32>
    %32 = vector.extract_strided_slice %8 {offsets = [0, 16], sizes = [16, 16], strides = [1, 1]} : vector<16x32xf32> to vector<16x16xf32>
    %33 = vector.extract_strided_slice %9 {offsets = [0, 16], sizes = [16, 16], strides = [1, 1]} : vector<16x32xf32> to vector<16x16xf32>
    %34 = tpu.transpose %32, [1, 0] : vector<16x16xf32> -> vector<16x16xf32>
    %cst_15 = arith.constant dense<0.000000e+00> : vector<16x16xf32>
    %35 = tpu.matmul %31, %34, %cst_15 {dimension_numbers = #tpu.dot_dimension_numbers<[1], [0], [0], [1], [0, 0, 1, 1], [], []>} : vector<16x16xf32>, vector<16x16xf32>, vector<16x16xf32> -> vector<16x16xf32>
    %cst_16 = arith.constant 2.500000e-01 : f32
    %36 = vector.broadcast %cst_16 : f32 to vector<16x16xf32>
    %37 = arith.mulf %35, %36 : vector<16x16xf32>
    %38 = arith.addf %37, %1 : vector<16x16xf32>
    %cst_17 = arith.constant dense<0xFF800000> : vector<16xf32>
    %39 = vector.multi_reduction <maximumf>, %38, %cst_17 [1] : vector<16x16xf32> to vector<16xf32>
    %40 = vector.shape_cast %39 : vector<16xf32> to vector<16x1xf32>
    %41 = vector.broadcast %40 : vector<16x1xf32> to vector<16x16xf32>
    %42 = arith.subf %38, %41 : vector<16x16xf32>
    %43 = math.exp %42 : vector<16x16xf32>
    %cst_18 = arith.constant dense<0.000000e+00> : vector<16xf32>
    %44 = vector.multi_reduction <add>, %43, %cst_18 [1] : vector<16x16xf32> to vector<16xf32>
    %45 = vector.shape_cast %44 : vector<16xf32> to vector<16x1xf32>
    %46 = vector.broadcast %45 : vector<16x1xf32> to vector<16x16xf32>
    %47 = arith.divf %43, %46 : vector<16x16xf32>
    %cst_19 = arith.constant dense<0.000000e+00> : vector<16x16xf32>
    %48 = tpu.matmul %47, %33, %cst_19 {dimension_numbers = #tpu.dot_dimension_numbers<[1], [0], [0], [1], [0, 0, 1, 1], [], []>} : vector<16x16xf32>, vector<16x16xf32>, vector<16x16xf32> -> vector<16x16xf32>
    %49 = vector.extract_strided_slice %10 {offsets = [16, 0], sizes = [16, 32], strides = [1, 1]} : vector<32x32xf32> to vector<16x32xf32>
    %cst_20 = arith.constant dense<0.000000e+00> : vector<16x32xf32>
    %50 = tpu.matmul %48, %49, %cst_20 {dimension_numbers = #tpu.dot_dimension_numbers<[1], [0], [0], [1], [0, 0, 1, 1], [], []>} : vector<16x16xf32>, vector<16x32xf32>, vector<16x32xf32> -> vector<16x32xf32>
    %51 = arith.addf %30, %50 : vector<16x32xf32>
    %c0_21 = arith.constant 0 : index
    %c0_22 = arith.constant 0 : index
    %52 = vector.load %arg37[%c0_21, %c0_22] : memref<1x32xf32, #tpu.memory_space<vmem>>, vector<1x32xf32>
    %53 = vector.broadcast %52 : vector<1x32xf32> to vector<16x32xf32>
    %54 = arith.addf %51, %53 : vector<16x32xf32>
    %55 = arith.addf %0, %54 : vector<16x32xf32>
    %c0_23 = arith.constant 0 : index
    %c0_24 = arith.constant 0 : index
    %56 = vector.load %arg34[%c0_23, %c0_24] : memref<1x32xf32, #tpu.memory_space<vmem>>, vector<1x32xf32>
    %c0_25 = arith.constant 0 : index
    %c0_26 = arith.constant 0 : index
    %57 = vector.load %arg33[%c0_25, %c0_26] : memref<1x32xf32, #tpu.memory_space<vmem>>, vector<1x32xf32>
    %cst_27 = arith.constant dense<0.000000e+00> : vector<16xf32>
    %58 = vector.multi_reduction <add>, %55, %cst_27 [1] : vector<16x32xf32> to vector<16xf32>
    %59 = vector.shape_cast %58 : vector<16xf32> to vector<16x1xf32>
    %cst_28 = arith.constant 3.200000e+01 : f32
    %60 = vector.broadcast %cst_28 : f32 to vector<16x1xf32>
    %61 = arith.divf %59, %60 : vector<16x1xf32>
    %62 = vector.broadcast %61 : vector<16x1xf32> to vector<16x32xf32>
    %63 = arith.subf %55, %62 : vector<16x32xf32>
    %64 = arith.mulf %63, %63 : vector<16x32xf32>
    %cst_29 = arith.constant dense<0.000000e+00> : vector<16xf32>
    %65 = vector.multi_reduction <add>, %64, %cst_29 [1] : vector<16x32xf32> to vector<16xf32>
    %66 = vector.shape_cast %65 : vector<16xf32> to vector<16x1xf32>
    %cst_30 = arith.constant 3.200000e+01 : f32
    %67 = vector.broadcast %cst_30 : f32 to vector<16x1xf32>
    %68 = arith.divf %66, %67 : vector<16x1xf32>
    %69 = vector.broadcast %61 : vector<16x1xf32> to vector<16x32xf32>
    %70 = arith.subf %55, %69 : vector<16x32xf32>
    %cst_31 = arith.constant 9.99999974E-6 : f32
    %71 = vector.broadcast %cst_31 : f32 to vector<16x1xf32>
    %72 = arith.addf %68, %71 : vector<16x1xf32>
    %73 = math.rsqrt %72 : vector<16x1xf32>
    %74 = vector.broadcast %73 : vector<16x1xf32> to vector<16x32xf32>
    %75 = arith.mulf %70, %74 : vector<16x32xf32>
    %76 = vector.broadcast %56 : vector<1x32xf32> to vector<16x32xf32>
    %77 = arith.mulf %75, %76 : vector<16x32xf32>
    %78 = vector.broadcast %57 : vector<1x32xf32> to vector<16x32xf32>
    %79 = arith.addf %77, %78 : vector<16x32xf32>
    %c0_32 = arith.constant 0 : index
    %c0_33 = arith.constant 0 : index
    %80 = vector.load %arg31[%c0_32, %c0_33] : memref<32x64xf32, #tpu.memory_space<vmem>>, vector<32x64xf32>
    %cst_34 = arith.constant dense<0.000000e+00> : vector<16x64xf32>
    %81 = tpu.matmul %79, %80, %cst_34 {dimension_numbers = #tpu.dot_dimension_numbers<[1], [0], [0], [1], [0, 0, 1, 1], [], []>} : vector<16x32xf32>, vector<32x64xf32>, vector<16x64xf32> -> vector<16x64xf32>
    %c0_35 = arith.constant 0 : index
    %c0_36 = arith.constant 0 : index
    %82 = vector.load %arg29[%c0_35, %c0_36] : memref<1x64xf32, #tpu.memory_space<vmem>>, vector<1x64xf32>
    %83 = vector.broadcast %82 : vector<1x64xf32> to vector<16x64xf32>
    %84 = arith.addf %81, %83 : vector<16x64xf32>
    %cst_37 = arith.constant 0.000000e+00 : f32
    %85 = vector.broadcast %cst_37 : f32 to vector<16x64xf32>
    %86 = arith.maximumf %84, %85 : vector<16x64xf32>
    %c0_38 = arith.constant 0 : index
    %c0_39 = arith.constant 0 : index
    %87 = vector.load %arg32[%c0_38, %c0_39] : memref<64x32xf32, #tpu.memory_space<vmem>>, vector<64x32xf32>
    %cst_40 = arith.constant dense<0.000000e+00> : vector<16x32xf32>
    %88 = tpu.matmul %86, %87, %cst_40 {dimension_numbers = #tpu.dot_dimension_numbers<[1], [0], [0], [1], [0, 0, 1, 1], [], []>} : vector<16x64xf32>, vector<64x32xf32>, vector<16x32xf32> -> vector<16x32xf32>
    %c0_41 = arith.constant 0 : index
    %c0_42 = arith.constant 0 : index
    %89 = vector.load %arg30[%c0_41, %c0_42] : memref<1x32xf32, #tpu.memory_space<vmem>>, vector<1x32xf32>
    %90 = vector.broadcast %89 : vector<1x32xf32> to vector<16x32xf32>
    %91 = arith.addf %88, %90 : vector<16x32xf32>
    %92 = arith.addf %79, %91 : vector<16x32xf32>
    %c0_43 = arith.constant 0 : index
    %c0_44 = arith.constant 0 : index
    %93 = vector.load %arg36[%c0_43, %c0_44] : memref<1x32xf32, #tpu.memory_space<vmem>>, vector<1x32xf32>
    %c0_45 = arith.constant 0 : index
    %c0_46 = arith.constant 0 : index
    %94 = vector.load %arg35[%c0_45, %c0_46] : memref<1x32xf32, #tpu.memory_space<vmem>>, vector<1x32xf32>
    %cst_47 = arith.constant dense<0.000000e+00> : vector<16xf32>
    %95 = vector.multi_reduction <add>, %92, %cst_47 [1] : vector<16x32xf32> to vector<16xf32>
    %96 = vector.shape_cast %95 : vector<16xf32> to vector<16x1xf32>
    %cst_48 = arith.constant 3.200000e+01 : f32
    %97 = vector.broadcast %cst_48 : f32 to vector<16x1xf32>
    %98 = arith.divf %96, %97 : vector<16x1xf32>
    %99 = vector.broadcast %98 : vector<16x1xf32> to vector<16x32xf32>
    %100 = arith.subf %92, %99 : vector<16x32xf32>
    %101 = arith.mulf %100, %100 : vector<16x32xf32>
    %cst_49 = arith.constant dense<0.000000e+00> : vector<16xf32>
    %102 = vector.multi_reduction <add>, %101, %cst_49 [1] : vector<16x32xf32> to vector<16xf32>
    %103 = vector.shape_cast %102 : vector<16xf32> to vector<16x1xf32>
    %cst_50 = arith.constant 3.200000e+01 : f32
    %104 = vector.broadcast %cst_50 : f32 to vector<16x1xf32>
    %105 = arith.divf %103, %104 : vector<16x1xf32>
    %106 = vector.broadcast %98 : vector<16x1xf32> to vector<16x32xf32>
    %107 = arith.subf %92, %106 : vector<16x32xf32>
    %cst_51 = arith.constant 9.99999974E-6 : f32
    %108 = vector.broadcast %cst_51 : f32 to vector<16x1xf32>
    %109 = arith.addf %105, %108 : vector<16x1xf32>
    %110 = math.rsqrt %109 : vector<16x1xf32>
    %111 = vector.broadcast %110 : vector<16x1xf32> to vector<16x32xf32>
    %112 = arith.mulf %107, %111 : vector<16x32xf32>
    %113 = vector.broadcast %93 : vector<1x32xf32> to vector<16x32xf32>
    %114 = arith.mulf %112, %113 : vector<16x32xf32>
    %115 = vector.broadcast %94 : vector<1x32xf32> to vector<16x32xf32>
    %116 = arith.addf %114, %115 : vector<16x32xf32>
    %c0_52 = arith.constant 0 : index
    %c0_53 = arith.constant 0 : index
    %117 = vector.load %arg42[%c0_52, %c0_53] : memref<1x32xf32, #tpu.memory_space<vmem>>, vector<1x32xf32>
    %c0_54 = arith.constant 0 : index
    %c0_55 = arith.constant 0 : index
    %118 = vector.load %arg41[%c0_54, %c0_55] : memref<1x32xf32, #tpu.memory_space<vmem>>, vector<1x32xf32>
    %cst_56 = arith.constant dense<0.000000e+00> : vector<16xf32>
    %119 = vector.multi_reduction <add>, %116, %cst_56 [1] : vector<16x32xf32> to vector<16xf32>
    %120 = vector.shape_cast %119 : vector<16xf32> to vector<16x1xf32>
    %cst_57 = arith.constant 3.200000e+01 : f32
    %121 = vector.broadcast %cst_57 : f32 to vector<16x1xf32>
    %122 = arith.divf %120, %121 : vector<16x1xf32>
    %123 = vector.broadcast %122 : vector<16x1xf32> to vector<16x32xf32>
    %124 = arith.subf %116, %123 : vector<16x32xf32>
    %125 = arith.mulf %124, %124 : vector<16x32xf32>
    %cst_58 = arith.constant dense<0.000000e+00> : vector<16xf32>
    %126 = vector.multi_reduction <add>, %125, %cst_58 [1] : vector<16x32xf32> to vector<16xf32>
    %127 = vector.shape_cast %126 : vector<16xf32> to vector<16x1xf32>
    %cst_59 = arith.constant 3.200000e+01 : f32
    %128 = vector.broadcast %cst_59 : f32 to vector<16x1xf32>
    %129 = arith.divf %127, %128 : vector<16x1xf32>
    %130 = vector.broadcast %122 : vector<16x1xf32> to vector<16x32xf32>
    %131 = arith.subf %116, %130 : vector<16x32xf32>
    %cst_60 = arith.constant 9.99999974E-6 : f32
    %132 = vector.broadcast %cst_60 : f32 to vector<16x1xf32>
    %133 = arith.addf %129, %132 : vector<16x1xf32>
    %134 = math.rsqrt %133 : vector<16x1xf32>
    %135 = vector.broadcast %134 : vector<16x1xf32> to vector<16x32xf32>
    %136 = arith.mulf %131, %135 : vector<16x32xf32>
    %137 = vector.broadcast %117 : vector<1x32xf32> to vector<16x32xf32>
    %138 = arith.mulf %136, %137 : vector<16x32xf32>
    %139 = vector.broadcast %118 : vector<1x32xf32> to vector<16x32xf32>
    %140 = arith.addf %138, %139 : vector<16x32xf32>
    %c0_61 = arith.constant 0 : index
    %c0_62 = arith.constant 0 : index
    %141 = vector.load %arg1[%c0_61, %c0_62] : memref<32x16xf32, #tpu.memory_space<vmem>>, vector<32x16xf32>
    %c0_63 = arith.constant 0 : index
    %c0_64 = arith.constant 0 : index
    %142 = vector.load %arg2[%c0_63, %c0_64] : memref<32x32xf32, #tpu.memory_space<vmem>>, vector<32x32xf32>
    %c0_65 = arith.constant 0 : index
    %c0_66 = arith.constant 0 : index
    %143 = vector.load %arg7[%c0_65, %c0_66] : memref<16x32xf32, #tpu.memory_space<vmem>>, vector<16x32xf32>
    %c0_67 = arith.constant 0 : index
    %c0_68 = arith.constant 0 : index
    %144 = vector.load %arg4[%c0_67, %c0_68] : memref<32x32xf32, #tpu.memory_space<vmem>>, vector<32x32xf32>
    %c0_69 = arith.constant 0 : index
    %c0_70 = arith.constant 0 : index
    %145 = vector.load %arg6[%c0_69, %c0_70] : memref<32x1xi32, #tpu.memory_space<vmem>>, vector<32x1xi32>
    %c0_71 = arith.constant 0 : index
    %c0_72 = arith.constant 0 : index
    %146 = vector.load %arg0[%c0_71, %c0_72] : memref<32x2xf32, #tpu.memory_space<vmem>>, vector<32x2xf32>
    %c0_73 = arith.constant 0 : index
    %c0_74 = arith.constant 0 : index
    %147 = vector.load %arg44[%c0_73, %c0_74] : memref<32x16xf32, #tpu.memory_space<vmem>>, vector<32x16xf32>
    %c0_75 = arith.constant 0 : index
    %c0_76 = arith.constant 0 : index
    %148 = vector.load %arg43[%c0_75, %c0_76] : memref<1x16xf32, #tpu.memory_space<vmem>>, vector<1x16xf32>
    %c0_77 = arith.constant 0 : index
    %c0_78 = arith.constant 0 : index
    %149 = vector.load %arg28[%c0_77, %c0_78] : memref<1x32xf32, #tpu.memory_space<vmem>>, vector<1x32xf32>
    %c0_79 = arith.constant 0 : index
    %c0_80 = arith.constant 0 : index
    %150 = vector.load %arg27[%c0_79, %c0_80] : memref<1x32xf32, #tpu.memory_space<vmem>>, vector<1x32xf32>
    %151 = tpu.iota {dimensions = array<i32: 1>} : vector<32x16xi32>
    %152 = tpu.iota {dimensions = array<i32: 1>} : vector<2x32xi32>
    %153 = tpu.iota {dimensions = array<i32: 0>} : vector<2x32xi32>
    %154 = tpu.iota {dimensions = array<i32: 1>} : vector<2x16xi32>
    %155 = arith.sitofp %154 : vector<2x16xi32> to vector<2x16xf32>
    %c0_81 = arith.constant 0 : index
    %c0_82 = arith.constant 0 : index
    %156 = vector.load %arg8[%c0_81, %c0_82] : memref<32x1xi32, #tpu.memory_space<vmem>>, vector<32x1xi32>
    %c0_i32 = arith.constant 0 : i32
    %c15_i32 = arith.constant 15 : i32
    %157 = arith.addi %c0_i32, %c15_i32 : i32
    %c1_i32 = arith.constant 1 : i32
    %158 = scf.for %arg46 = %c0_i32 to %157 step %c1_i32 iter_args(%arg47 = %156) -> (vector<32x1xi32>)  : i32 {
      %160 = vector.broadcast %arg47 : vector<32x1xi32> to vector<32x16xi32>
      %161 = arith.cmpi eq, %160, %151 : vector<32x16xi32>
      %162 = arith.extui %161 : vector<32x16xi1> to vector<32x16xi32>
      %163 = arith.sitofp %162 : vector<32x16xi32> to vector<32x16xf32>
      %cst_86 = arith.constant dense<0.000000e+00> : vector<32x32xf32>
      %164 = tpu.matmul %163, %143, %cst_86 {dimension_numbers = #tpu.dot_dimension_numbers<[1], [0], [0], [1], [0, 0, 1, 1], [], []>} : vector<32x16xf32>, vector<16x32xf32>, vector<32x32xf32> -> vector<32x32xf32>
      %165 = arith.addf %164, %144 : vector<32x32xf32>
      %c1_i32_87 = arith.constant 1 : i32
      %166 = vector.broadcast %c1_i32_87 : i32 to vector<32x1xi32>
      %167 = arith.cmpi eq, %arg47, %166 : vector<32x1xi32>
      %cst_88 = arith.constant -1.000000e+09 : f32
      %cst_89 = arith.constant 0.000000e+00 : f32
      %168 = vector.broadcast %cst_88 : f32 to vector<32x1xf32>
      %169 = vector.broadcast %cst_89 : f32 to vector<32x1xf32>
      %170 = arith.select %167, %168, %169 : vector<32x1xi1>, vector<32x1xf32>
      %171 = tpu.transpose %170, [1, 0] : vector<32x1xf32> -> vector<1x32xf32>
      %172 = vector.broadcast %171 : vector<1x32xf32> to vector<32x32xf32>
      %173 = arith.addf %142, %172 : vector<32x32xf32>
      %c0_90 = arith.constant 0 : index
      %c0_91 = arith.constant 0 : index
      %174 = vector.load %arg26[%c0_90, %c0_91] : memref<32x96xf32, #tpu.memory_space<vmem>>, vector<32x96xf32>
      %c0_92 = arith.constant 0 : index
      %c0_93 = arith.constant 0 : index
      %175 = vector.load %arg24[%c0_92, %c0_93] : memref<1x96xf32, #tpu.memory_space<vmem>>, vector<1x96xf32>
      %cst_94 = arith.constant dense<0.000000e+00> : vector<32x96xf32>
      %176 = tpu.matmul %165, %174, %cst_94 {dimension_numbers = #tpu.dot_dimension_numbers<[1], [0], [0], [1], [0, 0, 1, 1], [], []>} : vector<32x32xf32>, vector<32x96xf32>, vector<32x96xf32> -> vector<32x96xf32>
      %177 = vector.broadcast %175 : vector<1x96xf32> to vector<32x96xf32>
      %178 = arith.addf %176, %177 : vector<32x96xf32>
      %179 = vector.extract_strided_slice %178 {offsets = [0, 0], sizes = [32, 32], strides = [1, 1]} : vector<32x96xf32> to vector<32x32xf32>
      %180 = vector.extract_strided_slice %178 {offsets = [0, 32], sizes = [32, 32], strides = [1, 1]} : vector<32x96xf32> to vector<32x32xf32>
      %181 = vector.extract_strided_slice %178 {offsets = [0, 64], sizes = [32, 32], strides = [1, 1]} : vector<32x96xf32> to vector<32x32xf32>
      %c0_95 = arith.constant 0 : index
      %c0_96 = arith.constant 0 : index
      %182 = vector.load %arg25[%c0_95, %c0_96] : memref<32x32xf32, #tpu.memory_space<vmem>>, vector<32x32xf32>
      %183 = vector.extract_strided_slice %179 {offsets = [0, 0], sizes = [32, 16], strides = [1, 1]} : vector<32x32xf32> to vector<32x16xf32>
      %184 = vector.extract_strided_slice %180 {offsets = [0, 0], sizes = [32, 16], strides = [1, 1]} : vector<32x32xf32> to vector<32x16xf32>
      %185 = vector.extract_strided_slice %181 {offsets = [0, 0], sizes = [32, 16], strides = [1, 1]} : vector<32x32xf32> to vector<32x16xf32>
      %186 = tpu.transpose %184, [1, 0] : vector<32x16xf32> -> vector<16x32xf32>
      %cst_97 = arith.constant dense<0.000000e+00> : vector<32x32xf32>
      %187 = tpu.matmul %183, %186, %cst_97 {dimension_numbers = #tpu.dot_dimension_numbers<[1], [0], [0], [1], [0, 0, 1, 1], [], []>} : vector<32x16xf32>, vector<16x32xf32>, vector<32x32xf32> -> vector<32x32xf32>
      %cst_98 = arith.constant 2.500000e-01 : f32
      %188 = vector.broadcast %cst_98 : f32 to vector<32x32xf32>
      %189 = arith.mulf %187, %188 : vector<32x32xf32>
      %190 = arith.addf %189, %173 : vector<32x32xf32>
      %cst_99 = arith.constant dense<0xFF800000> : vector<32xf32>
      %191 = vector.multi_reduction <maximumf>, %190, %cst_99 [1] : vector<32x32xf32> to vector<32xf32>
      %192 = vector.shape_cast %191 : vector<32xf32> to vector<32x1xf32>
      %193 = vector.broadcast %192 : vector<32x1xf32> to vector<32x32xf32>
      %194 = arith.subf %190, %193 : vector<32x32xf32>
      %195 = math.exp %194 : vector<32x32xf32>
      %cst_100 = arith.constant dense<0.000000e+00> : vector<32xf32>
      %196 = vector.multi_reduction <add>, %195, %cst_100 [1] : vector<32x32xf32> to vector<32xf32>
      %197 = vector.shape_cast %196 : vector<32xf32> to vector<32x1xf32>
      %198 = vector.broadcast %197 : vector<32x1xf32> to vector<32x32xf32>
      %199 = arith.divf %195, %198 : vector<32x32xf32>
      %cst_101 = arith.constant dense<0.000000e+00> : vector<32x16xf32>
      %200 = tpu.matmul %199, %185, %cst_101 {dimension_numbers = #tpu.dot_dimension_numbers<[1], [0], [0], [1], [0, 0, 1, 1], [], []>} : vector<32x32xf32>, vector<32x16xf32>, vector<32x16xf32> -> vector<32x16xf32>
      %201 = vector.extract_strided_slice %182 {offsets = [0, 0], sizes = [16, 32], strides = [1, 1]} : vector<32x32xf32> to vector<16x32xf32>
      %cst_102 = arith.constant dense<0.000000e+00> : vector<32x32xf32>
      %202 = tpu.matmul %200, %201, %cst_102 {dimension_numbers = #tpu.dot_dimension_numbers<[1], [0], [0], [1], [0, 0, 1, 1], [], []>} : vector<32x16xf32>, vector<16x32xf32>, vector<32x32xf32> -> vector<32x32xf32>
      %203 = vector.extract_strided_slice %179 {offsets = [0, 16], sizes = [32, 16], strides = [1, 1]} : vector<32x32xf32> to vector<32x16xf32>
      %204 = vector.extract_strided_slice %180 {offsets = [0, 16], sizes = [32, 16], strides = [1, 1]} : vector<32x32xf32> to vector<32x16xf32>
      %205 = vector.extract_strided_slice %181 {offsets = [0, 16], sizes = [32, 16], strides = [1, 1]} : vector<32x32xf32> to vector<32x16xf32>
      %206 = tpu.transpose %204, [1, 0] : vector<32x16xf32> -> vector<16x32xf32>
      %cst_103 = arith.constant dense<0.000000e+00> : vector<32x32xf32>
      %207 = tpu.matmul %203, %206, %cst_103 {dimension_numbers = #tpu.dot_dimension_numbers<[1], [0], [0], [1], [0, 0, 1, 1], [], []>} : vector<32x16xf32>, vector<16x32xf32>, vector<32x32xf32> -> vector<32x32xf32>
      %cst_104 = arith.constant 2.500000e-01 : f32
      %208 = vector.broadcast %cst_104 : f32 to vector<32x32xf32>
      %209 = arith.mulf %207, %208 : vector<32x32xf32>
      %210 = arith.addf %209, %173 : vector<32x32xf32>
      %cst_105 = arith.constant dense<0xFF800000> : vector<32xf32>
      %211 = vector.multi_reduction <maximumf>, %210, %cst_105 [1] : vector<32x32xf32> to vector<32xf32>
      %212 = vector.shape_cast %211 : vector<32xf32> to vector<32x1xf32>
      %213 = vector.broadcast %212 : vector<32x1xf32> to vector<32x32xf32>
      %214 = arith.subf %210, %213 : vector<32x32xf32>
      %215 = math.exp %214 : vector<32x32xf32>
      %cst_106 = arith.constant dense<0.000000e+00> : vector<32xf32>
      %216 = vector.multi_reduction <add>, %215, %cst_106 [1] : vector<32x32xf32> to vector<32xf32>
      %217 = vector.shape_cast %216 : vector<32xf32> to vector<32x1xf32>
      %218 = vector.broadcast %217 : vector<32x1xf32> to vector<32x32xf32>
      %219 = arith.divf %215, %218 : vector<32x32xf32>
      %cst_107 = arith.constant dense<0.000000e+00> : vector<32x16xf32>
      %220 = tpu.matmul %219, %205, %cst_107 {dimension_numbers = #tpu.dot_dimension_numbers<[1], [0], [0], [1], [0, 0, 1, 1], [], []>} : vector<32x32xf32>, vector<32x16xf32>, vector<32x16xf32> -> vector<32x16xf32>
      %221 = vector.extract_strided_slice %182 {offsets = [16, 0], sizes = [16, 32], strides = [1, 1]} : vector<32x32xf32> to vector<16x32xf32>
      %cst_108 = arith.constant dense<0.000000e+00> : vector<32x32xf32>
      %222 = tpu.matmul %220, %221, %cst_108 {dimension_numbers = #tpu.dot_dimension_numbers<[1], [0], [0], [1], [0, 0, 1, 1], [], []>} : vector<32x16xf32>, vector<16x32xf32>, vector<32x32xf32> -> vector<32x32xf32>
      %223 = arith.addf %202, %222 : vector<32x32xf32>
      %c0_109 = arith.constant 0 : index
      %c0_110 = arith.constant 0 : index
      %224 = vector.load %arg23[%c0_109, %c0_110] : memref<1x32xf32, #tpu.memory_space<vmem>>, vector<1x32xf32>
      %225 = vector.broadcast %224 : vector<1x32xf32> to vector<32x32xf32>
      %226 = arith.addf %223, %225 : vector<32x32xf32>
      %227 = arith.addf %165, %226 : vector<32x32xf32>
      %c0_111 = arith.constant 0 : index
      %c0_112 = arith.constant 0 : index
      %228 = vector.load %arg18[%c0_111, %c0_112] : memref<1x32xf32, #tpu.memory_space<vmem>>, vector<1x32xf32>
      %c0_113 = arith.constant 0 : index
      %c0_114 = arith.constant 0 : index
      %229 = vector.load %arg17[%c0_113, %c0_114] : memref<1x32xf32, #tpu.memory_space<vmem>>, vector<1x32xf32>
      %cst_115 = arith.constant dense<0.000000e+00> : vector<32xf32>
      %230 = vector.multi_reduction <add>, %227, %cst_115 [1] : vector<32x32xf32> to vector<32xf32>
      %231 = vector.shape_cast %230 : vector<32xf32> to vector<32x1xf32>
      %cst_116 = arith.constant 3.200000e+01 : f32
      %232 = vector.broadcast %cst_116 : f32 to vector<32x1xf32>
      %233 = arith.divf %231, %232 : vector<32x1xf32>
      %234 = vector.broadcast %233 : vector<32x1xf32> to vector<32x32xf32>
      %235 = arith.subf %227, %234 : vector<32x32xf32>
      %236 = arith.mulf %235, %235 : vector<32x32xf32>
      %cst_117 = arith.constant dense<0.000000e+00> : vector<32xf32>
      %237 = vector.multi_reduction <add>, %236, %cst_117 [1] : vector<32x32xf32> to vector<32xf32>
      %238 = vector.shape_cast %237 : vector<32xf32> to vector<32x1xf32>
      %cst_118 = arith.constant 3.200000e+01 : f32
      %239 = vector.broadcast %cst_118 : f32 to vector<32x1xf32>
      %240 = arith.divf %238, %239 : vector<32x1xf32>
      %241 = vector.broadcast %233 : vector<32x1xf32> to vector<32x32xf32>
      %242 = arith.subf %227, %241 : vector<32x32xf32>
      %cst_119 = arith.constant 9.99999974E-6 : f32
      %243 = vector.broadcast %cst_119 : f32 to vector<32x1xf32>
      %244 = arith.addf %240, %243 : vector<32x1xf32>
      %245 = math.rsqrt %244 : vector<32x1xf32>
      %246 = vector.broadcast %245 : vector<32x1xf32> to vector<32x32xf32>
      %247 = arith.mulf %242, %246 : vector<32x32xf32>
      %248 = vector.broadcast %228 : vector<1x32xf32> to vector<32x32xf32>
      %249 = arith.mulf %247, %248 : vector<32x32xf32>
      %250 = vector.broadcast %229 : vector<1x32xf32> to vector<32x32xf32>
      %251 = arith.addf %249, %250 : vector<32x32xf32>
      %c0_120 = arith.constant 0 : index
      %c0_121 = arith.constant 0 : index
      %252 = vector.load %arg12[%c0_120, %c0_121] : memref<32x96xf32, #tpu.memory_space<vmem>>, vector<32x96xf32>
      %c0_122 = arith.constant 0 : index
      %c0_123 = arith.constant 0 : index
      %253 = vector.load %arg10[%c0_122, %c0_123] : memref<1x96xf32, #tpu.memory_space<vmem>>, vector<1x96xf32>
      %254 = vector.extract_strided_slice %252 {offsets = [0, 0], sizes = [32, 32], strides = [1, 1]} : vector<32x96xf32> to vector<32x32xf32>
      %cst_124 = arith.constant dense<0.000000e+00> : vector<32x32xf32>
      %255 = tpu.matmul %251, %254, %cst_124 {dimension_numbers = #tpu.dot_dimension_numbers<[1], [0], [0], [1], [0, 0, 1, 1], [], []>} : vector<32x32xf32>, vector<32x32xf32>, vector<32x32xf32> -> vector<32x32xf32>
      %256 = vector.extract_strided_slice %253 {offsets = [0, 0], sizes = [1, 32], strides = [1, 1]} : vector<1x96xf32> to vector<1x32xf32>
      %257 = vector.broadcast %256 : vector<1x32xf32> to vector<32x32xf32>
      %258 = arith.addf %255, %257 : vector<32x32xf32>
      %259 = vector.extract_strided_slice %252 {offsets = [0, 32], sizes = [32, 64], strides = [1, 1]} : vector<32x96xf32> to vector<32x64xf32>
      %cst_125 = arith.constant dense<0.000000e+00> : vector<16x64xf32>
      %260 = tpu.matmul %140, %259, %cst_125 {dimension_numbers = #tpu.dot_dimension_numbers<[1], [0], [0], [1], [0, 0, 1, 1], [], []>} : vector<16x32xf32>, vector<32x64xf32>, vector<16x64xf32> -> vector<16x64xf32>
      %261 = vector.extract_strided_slice %253 {offsets = [0, 32], sizes = [1, 64], strides = [1, 1]} : vector<1x96xf32> to vector<1x64xf32>
      %262 = vector.broadcast %261 : vector<1x64xf32> to vector<16x64xf32>
      %263 = arith.addf %260, %262 : vector<16x64xf32>
      %264 = vector.extract_strided_slice %263 {offsets = [0, 0], sizes = [16, 32], strides = [1, 1]} : vector<16x64xf32> to vector<16x32xf32>
      %265 = vector.extract_strided_slice %263 {offsets = [0, 32], sizes = [16, 32], strides = [1, 1]} : vector<16x64xf32> to vector<16x32xf32>
      %c0_126 = arith.constant 0 : index
      %c0_127 = arith.constant 0 : index
      %266 = vector.load %arg11[%c0_126, %c0_127] : memref<32x32xf32, #tpu.memory_space<vmem>>, vector<32x32xf32>
      %267 = vector.extract_strided_slice %258 {offsets = [0, 0], sizes = [32, 16], strides = [1, 1]} : vector<32x32xf32> to vector<32x16xf32>
      %268 = vector.extract_strided_slice %264 {offsets = [0, 0], sizes = [16, 16], strides = [1, 1]} : vector<16x32xf32> to vector<16x16xf32>
      %269 = vector.extract_strided_slice %265 {offsets = [0, 0], sizes = [16, 16], strides = [1, 1]} : vector<16x32xf32> to vector<16x16xf32>
      %270 = tpu.transpose %268, [1, 0] : vector<16x16xf32> -> vector<16x16xf32>
      %cst_128 = arith.constant dense<0.000000e+00> : vector<32x16xf32>
      %271 = tpu.matmul %267, %270, %cst_128 {dimension_numbers = #tpu.dot_dimension_numbers<[1], [0], [0], [1], [0, 0, 1, 1], [], []>} : vector<32x16xf32>, vector<16x16xf32>, vector<32x16xf32> -> vector<32x16xf32>
      %cst_129 = arith.constant 2.500000e-01 : f32
      %272 = vector.broadcast %cst_129 : f32 to vector<32x16xf32>
      %273 = arith.mulf %271, %272 : vector<32x16xf32>
      %274 = arith.addf %273, %141 : vector<32x16xf32>
      %cst_130 = arith.constant dense<0xFF800000> : vector<32xf32>
      %275 = vector.multi_reduction <maximumf>, %274, %cst_130 [1] : vector<32x16xf32> to vector<32xf32>
      %276 = vector.shape_cast %275 : vector<32xf32> to vector<32x1xf32>
      %277 = vector.broadcast %276 : vector<32x1xf32> to vector<32x16xf32>
      %278 = arith.subf %274, %277 : vector<32x16xf32>
      %279 = math.exp %278 : vector<32x16xf32>
      %cst_131 = arith.constant dense<0.000000e+00> : vector<32xf32>
      %280 = vector.multi_reduction <add>, %279, %cst_131 [1] : vector<32x16xf32> to vector<32xf32>
      %281 = vector.shape_cast %280 : vector<32xf32> to vector<32x1xf32>
      %282 = vector.broadcast %281 : vector<32x1xf32> to vector<32x16xf32>
      %283 = arith.divf %279, %282 : vector<32x16xf32>
      %cst_132 = arith.constant dense<0.000000e+00> : vector<32x16xf32>
      %284 = tpu.matmul %283, %269, %cst_132 {dimension_numbers = #tpu.dot_dimension_numbers<[1], [0], [0], [1], [0, 0, 1, 1], [], []>} : vector<32x16xf32>, vector<16x16xf32>, vector<32x16xf32> -> vector<32x16xf32>
      %285 = vector.extract_strided_slice %266 {offsets = [0, 0], sizes = [16, 32], strides = [1, 1]} : vector<32x32xf32> to vector<16x32xf32>
      %cst_133 = arith.constant dense<0.000000e+00> : vector<32x32xf32>
      %286 = tpu.matmul %284, %285, %cst_133 {dimension_numbers = #tpu.dot_dimension_numbers<[1], [0], [0], [1], [0, 0, 1, 1], [], []>} : vector<32x16xf32>, vector<16x32xf32>, vector<32x32xf32> -> vector<32x32xf32>
      %287 = vector.extract_strided_slice %258 {offsets = [0, 16], sizes = [32, 16], strides = [1, 1]} : vector<32x32xf32> to vector<32x16xf32>
      %288 = vector.extract_strided_slice %264 {offsets = [0, 16], sizes = [16, 16], strides = [1, 1]} : vector<16x32xf32> to vector<16x16xf32>
      %289 = vector.extract_strided_slice %265 {offsets = [0, 16], sizes = [16, 16], strides = [1, 1]} : vector<16x32xf32> to vector<16x16xf32>
      %290 = tpu.transpose %288, [1, 0] : vector<16x16xf32> -> vector<16x16xf32>
      %cst_134 = arith.constant dense<0.000000e+00> : vector<32x16xf32>
      %291 = tpu.matmul %287, %290, %cst_134 {dimension_numbers = #tpu.dot_dimension_numbers<[1], [0], [0], [1], [0, 0, 1, 1], [], []>} : vector<32x16xf32>, vector<16x16xf32>, vector<32x16xf32> -> vector<32x16xf32>
      %cst_135 = arith.constant 2.500000e-01 : f32
      %292 = vector.broadcast %cst_135 : f32 to vector<32x16xf32>
      %293 = arith.mulf %291, %292 : vector<32x16xf32>
      %294 = arith.addf %293, %141 : vector<32x16xf32>
      %cst_136 = arith.constant dense<0xFF800000> : vector<32xf32>
      %295 = vector.multi_reduction <maximumf>, %294, %cst_136 [1] : vector<32x16xf32> to vector<32xf32>
      %296 = vector.shape_cast %295 : vector<32xf32> to vector<32x1xf32>
      %297 = vector.broadcast %296 : vector<32x1xf32> to vector<32x16xf32>
      %298 = arith.subf %294, %297 : vector<32x16xf32>
      %299 = math.exp %298 : vector<32x16xf32>
      %cst_137 = arith.constant dense<0.000000e+00> : vector<32xf32>
      %300 = vector.multi_reduction <add>, %299, %cst_137 [1] : vector<32x16xf32> to vector<32xf32>
      %301 = vector.shape_cast %300 : vector<32xf32> to vector<32x1xf32>
      %302 = vector.broadcast %301 : vector<32x1xf32> to vector<32x16xf32>
      %303 = arith.divf %299, %302 : vector<32x16xf32>
      %cst_138 = arith.constant dense<0.000000e+00> : vector<32x16xf32>
      %304 = tpu.matmul %303, %289, %cst_138 {dimension_numbers = #tpu.dot_dimension_numbers<[1], [0], [0], [1], [0, 0, 1, 1], [], []>} : vector<32x16xf32>, vector<16x16xf32>, vector<32x16xf32> -> vector<32x16xf32>
      %305 = vector.extract_strided_slice %266 {offsets = [16, 0], sizes = [16, 32], strides = [1, 1]} : vector<32x32xf32> to vector<16x32xf32>
      %cst_139 = arith.constant dense<0.000000e+00> : vector<32x32xf32>
      %306 = tpu.matmul %304, %305, %cst_139 {dimension_numbers = #tpu.dot_dimension_numbers<[1], [0], [0], [1], [0, 0, 1, 1], [], []>} : vector<32x16xf32>, vector<16x32xf32>, vector<32x32xf32> -> vector<32x32xf32>
      %307 = arith.addf %286, %306 : vector<32x32xf32>
      %c0_140 = arith.constant 0 : index
      %c0_141 = arith.constant 0 : index
      %308 = vector.load %arg9[%c0_140, %c0_141] : memref<1x32xf32, #tpu.memory_space<vmem>>, vector<1x32xf32>
      %309 = vector.broadcast %308 : vector<1x32xf32> to vector<32x32xf32>
      %310 = arith.addf %307, %309 : vector<32x32xf32>
      %311 = arith.addf %251, %310 : vector<32x32xf32>
      %c0_142 = arith.constant 0 : index
      %c0_143 = arith.constant 0 : index
      %312 = vector.load %arg20[%c0_142, %c0_143] : memref<1x32xf32, #tpu.memory_space<vmem>>, vector<1x32xf32>
      %c0_144 = arith.constant 0 : index
      %c0_145 = arith.constant 0 : index
      %313 = vector.load %arg19[%c0_144, %c0_145] : memref<1x32xf32, #tpu.memory_space<vmem>>, vector<1x32xf32>
      %cst_146 = arith.constant dense<0.000000e+00> : vector<32xf32>
      %314 = vector.multi_reduction <add>, %311, %cst_146 [1] : vector<32x32xf32> to vector<32xf32>
      %315 = vector.shape_cast %314 : vector<32xf32> to vector<32x1xf32>
      %cst_147 = arith.constant 3.200000e+01 : f32
      %316 = vector.broadcast %cst_147 : f32 to vector<32x1xf32>
      %317 = arith.divf %315, %316 : vector<32x1xf32>
      %318 = vector.broadcast %317 : vector<32x1xf32> to vector<32x32xf32>
      %319 = arith.subf %311, %318 : vector<32x32xf32>
      %320 = arith.mulf %319, %319 : vector<32x32xf32>
      %cst_148 = arith.constant dense<0.000000e+00> : vector<32xf32>
      %321 = vector.multi_reduction <add>, %320, %cst_148 [1] : vector<32x32xf32> to vector<32xf32>
      %322 = vector.shape_cast %321 : vector<32xf32> to vector<32x1xf32>
      %cst_149 = arith.constant 3.200000e+01 : f32
      %323 = vector.broadcast %cst_149 : f32 to vector<32x1xf32>
      %324 = arith.divf %322, %323 : vector<32x1xf32>
      %325 = vector.broadcast %317 : vector<32x1xf32> to vector<32x32xf32>
      %326 = arith.subf %311, %325 : vector<32x32xf32>
      %cst_150 = arith.constant 9.99999974E-6 : f32
      %327 = vector.broadcast %cst_150 : f32 to vector<32x1xf32>
      %328 = arith.addf %324, %327 : vector<32x1xf32>
      %329 = math.rsqrt %328 : vector<32x1xf32>
      %330 = vector.broadcast %329 : vector<32x1xf32> to vector<32x32xf32>
      %331 = arith.mulf %326, %330 : vector<32x32xf32>
      %332 = vector.broadcast %312 : vector<1x32xf32> to vector<32x32xf32>
      %333 = arith.mulf %331, %332 : vector<32x32xf32>
      %334 = vector.broadcast %313 : vector<1x32xf32> to vector<32x32xf32>
      %335 = arith.addf %333, %334 : vector<32x32xf32>
      %c0_151 = arith.constant 0 : index
      %c0_152 = arith.constant 0 : index
      %336 = vector.load %arg15[%c0_151, %c0_152] : memref<32x64xf32, #tpu.memory_space<vmem>>, vector<32x64xf32>
      %cst_153 = arith.constant dense<0.000000e+00> : vector<32x64xf32>
      %337 = tpu.matmul %335, %336, %cst_153 {dimension_numbers = #tpu.dot_dimension_numbers<[1], [0], [0], [1], [0, 0, 1, 1], [], []>} : vector<32x32xf32>, vector<32x64xf32>, vector<32x64xf32> -> vector<32x64xf32>
      %c0_154 = arith.constant 0 : index
      %c0_155 = arith.constant 0 : index
      %338 = vector.load %arg13[%c0_154, %c0_155] : memref<1x64xf32, #tpu.memory_space<vmem>>, vector<1x64xf32>
      %339 = vector.broadcast %338 : vector<1x64xf32> to vector<32x64xf32>
      %340 = arith.addf %337, %339 : vector<32x64xf32>
      %cst_156 = arith.constant 0.000000e+00 : f32
      %341 = vector.broadcast %cst_156 : f32 to vector<32x64xf32>
      %342 = arith.maximumf %340, %341 : vector<32x64xf32>
      %c0_157 = arith.constant 0 : index
      %c0_158 = arith.constant 0 : index
      %343 = vector.load %arg16[%c0_157, %c0_158] : memref<64x32xf32, #tpu.memory_space<vmem>>, vector<64x32xf32>
      %cst_159 = arith.constant dense<0.000000e+00> : vector<32x32xf32>
      %344 = tpu.matmul %342, %343, %cst_159 {dimension_numbers = #tpu.dot_dimension_numbers<[1], [0], [0], [1], [0, 0, 1, 1], [], []>} : vector<32x64xf32>, vector<64x32xf32>, vector<32x32xf32> -> vector<32x32xf32>
      %c0_160 = arith.constant 0 : index
      %c0_161 = arith.constant 0 : index
      %345 = vector.load %arg14[%c0_160, %c0_161] : memref<1x32xf32, #tpu.memory_space<vmem>>, vector<1x32xf32>
      %346 = vector.broadcast %345 : vector<1x32xf32> to vector<32x32xf32>
      %347 = arith.addf %344, %346 : vector<32x32xf32>
      %348 = arith.addf %335, %347 : vector<32x32xf32>
      %c0_162 = arith.constant 0 : index
      %c0_163 = arith.constant 0 : index
      %349 = vector.load %arg22[%c0_162, %c0_163] : memref<1x32xf32, #tpu.memory_space<vmem>>, vector<1x32xf32>
      %c0_164 = arith.constant 0 : index
      %c0_165 = arith.constant 0 : index
      %350 = vector.load %arg21[%c0_164, %c0_165] : memref<1x32xf32, #tpu.memory_space<vmem>>, vector<1x32xf32>
      %cst_166 = arith.constant dense<0.000000e+00> : vector<32xf32>
      %351 = vector.multi_reduction <add>, %348, %cst_166 [1] : vector<32x32xf32> to vector<32xf32>
      %352 = vector.shape_cast %351 : vector<32xf32> to vector<32x1xf32>
      %cst_167 = arith.constant 3.200000e+01 : f32
      %353 = vector.broadcast %cst_167 : f32 to vector<32x1xf32>
      %354 = arith.divf %352, %353 : vector<32x1xf32>
      %355 = vector.broadcast %354 : vector<32x1xf32> to vector<32x32xf32>
      %356 = arith.subf %348, %355 : vector<32x32xf32>
      %357 = arith.mulf %356, %356 : vector<32x32xf32>
      %cst_168 = arith.constant dense<0.000000e+00> : vector<32xf32>
      %358 = vector.multi_reduction <add>, %357, %cst_168 [1] : vector<32x32xf32> to vector<32xf32>
      %359 = vector.shape_cast %358 : vector<32xf32> to vector<32x1xf32>
      %cst_169 = arith.constant 3.200000e+01 : f32
      %360 = vector.broadcast %cst_169 : f32 to vector<32x1xf32>
      %361 = arith.divf %359, %360 : vector<32x1xf32>
      %362 = vector.broadcast %354 : vector<32x1xf32> to vector<32x32xf32>
      %363 = arith.subf %348, %362 : vector<32x32xf32>
      %cst_170 = arith.constant 9.99999974E-6 : f32
      %364 = vector.broadcast %cst_170 : f32 to vector<32x1xf32>
      %365 = arith.addf %361, %364 : vector<32x1xf32>
      %366 = math.rsqrt %365 : vector<32x1xf32>
      %367 = vector.broadcast %366 : vector<32x1xf32> to vector<32x32xf32>
      %368 = arith.mulf %363, %367 : vector<32x32xf32>
      %369 = vector.broadcast %349 : vector<1x32xf32> to vector<32x32xf32>
      %370 = arith.mulf %368, %369 : vector<32x32xf32>
      %371 = vector.broadcast %350 : vector<1x32xf32> to vector<32x32xf32>
      %372 = arith.addf %370, %371 : vector<32x32xf32>
      %cst_171 = arith.constant dense<0.000000e+00> : vector<32xf32>
      %373 = vector.multi_reduction <add>, %372, %cst_171 [1] : vector<32x32xf32> to vector<32xf32>
      %374 = vector.shape_cast %373 : vector<32xf32> to vector<32x1xf32>
      %cst_172 = arith.constant 3.200000e+01 : f32
      %375 = vector.broadcast %cst_172 : f32 to vector<32x1xf32>
      %376 = arith.divf %374, %375 : vector<32x1xf32>
      %377 = vector.broadcast %376 : vector<32x1xf32> to vector<32x32xf32>
      %378 = arith.subf %372, %377 : vector<32x32xf32>
      %379 = arith.mulf %378, %378 : vector<32x32xf32>
      %cst_173 = arith.constant dense<0.000000e+00> : vector<32xf32>
      %380 = vector.multi_reduction <add>, %379, %cst_173 [1] : vector<32x32xf32> to vector<32xf32>
      %381 = vector.shape_cast %380 : vector<32xf32> to vector<32x1xf32>
      %cst_174 = arith.constant 3.200000e+01 : f32
      %382 = vector.broadcast %cst_174 : f32 to vector<32x1xf32>
      %383 = arith.divf %381, %382 : vector<32x1xf32>
      %384 = vector.broadcast %376 : vector<32x1xf32> to vector<32x32xf32>
      %385 = arith.subf %372, %384 : vector<32x32xf32>
      %cst_175 = arith.constant 9.99999974E-6 : f32
      %386 = vector.broadcast %cst_175 : f32 to vector<32x1xf32>
      %387 = arith.addf %383, %386 : vector<32x1xf32>
      %388 = math.rsqrt %387 : vector<32x1xf32>
      %389 = vector.broadcast %388 : vector<32x1xf32> to vector<32x32xf32>
      %390 = arith.mulf %385, %389 : vector<32x32xf32>
      %391 = vector.broadcast %149 : vector<1x32xf32> to vector<32x32xf32>
      %392 = arith.mulf %390, %391 : vector<32x32xf32>
      %393 = vector.broadcast %150 : vector<1x32xf32> to vector<32x32xf32>
      %394 = arith.addf %392, %393 : vector<32x32xf32>
      %c16_i32 = arith.constant 16 : i32
      %395 = vector.broadcast %c16_i32 : i32 to vector<2x32xi32>
      %396 = arith.muli %153, %395 : vector<2x32xi32>
      %397 = vector.broadcast %arg46 : i32 to vector<2x32xi32>
      %398 = arith.addi %396, %397 : vector<2x32xi32>
      %399 = arith.cmpi eq, %152, %398 : vector<2x32xi32>
      %400 = arith.extui %399 : vector<2x32xi1> to vector<2x32xi32>
      %401 = arith.sitofp %400 : vector<2x32xi32> to vector<2x32xf32>
      %cst_176 = arith.constant dense<0.000000e+00> : vector<2x32xf32>
      %402 = tpu.matmul %401, %394, %cst_176 {dimension_numbers = #tpu.dot_dimension_numbers<[1], [0], [0], [1], [0, 0, 1, 1], [], []>} : vector<2x32xf32>, vector<32x32xf32>, vector<2x32xf32> -> vector<2x32xf32>
      %cst_177 = arith.constant dense<0.000000e+00> : vector<2x16xf32>
      %403 = tpu.matmul %402, %147, %cst_177 {dimension_numbers = #tpu.dot_dimension_numbers<[1], [0], [0], [1], [0, 0, 1, 1], [], []>} : vector<2x32xf32>, vector<32x16xf32>, vector<2x16xf32> -> vector<2x16xf32>
      %404 = vector.broadcast %148 : vector<1x16xf32> to vector<2x16xf32>
      %405 = arith.addf %403, %404 : vector<2x16xf32>
      %cst_178 = arith.constant dense<0xFF800000> : vector<2xf32>
      %406 = vector.multi_reduction <maximumf>, %405, %cst_178 [1] : vector<2x16xf32> to vector<2xf32>
      %407 = vector.shape_cast %406 : vector<2xf32> to vector<2x1xf32>
      %408 = vector.broadcast %407 : vector<2x1xf32> to vector<2x16xf32>
      %409 = arith.cmpf oge, %405, %408 : vector<2x16xf32>
      %cst_179 = arith.constant 1.600000e+01 : f32
      %410 = vector.broadcast %cst_179 : f32 to vector<2x16xf32>
      %411 = arith.select %409, %155, %410 : vector<2x16xi1>, vector<2x16xf32>
      %cst_180 = arith.constant dense<0x7F800000> : vector<2xf32>
      %412 = vector.multi_reduction <minimumf>, %411, %cst_180 [1] : vector<2x16xf32> to vector<2xf32>
      %413 = vector.shape_cast %412 : vector<2xf32> to vector<2x1xf32>
      %cst_181 = arith.constant dense<0.000000e+00> : vector<32x1xf32>
      %414 = tpu.matmul %146, %413, %cst_181 {dimension_numbers = #tpu.dot_dimension_numbers<[1], [0], [0], [1], [0, 0, 1, 1], [], []>} : vector<32x2xf32>, vector<2x1xf32>, vector<32x1xf32> -> vector<32x1xf32>
      %cst_182 = arith.constant 5.000000e-01 : f32
      %415 = vector.broadcast %cst_182 : f32 to vector<32x1xf32>
      %416 = arith.addf %414, %415 : vector<32x1xf32>
      %417 = arith.fptosi %416 : vector<32x1xf32> to vector<32x1xi32>
      %c1_i32_183 = arith.constant 1 : i32
      %418 = arith.addi %arg46, %c1_i32_183 : i32
      %419 = vector.broadcast %418 : i32 to vector<32x1xi32>
      %420 = arith.cmpi eq, %145, %419 : vector<32x1xi32>
      %421 = arith.select %420, %417, %arg47 : vector<32x1xi1>, vector<32x1xi32>
      scf.yield %421 : vector<32x1xi32>
    }
    %c15_i32_83 = arith.constant 15 : i32
    %c0_84 = arith.constant 0 : index
    %c0_85 = arith.constant 0 : index
    %159 = vector.load %arg45[%c0_84, %c0_85] : memref<32x1xi32, #tpu.memory_space<vmem>>, vector<32x1xi32>
    tpu.vector_store %arg45[%c0_84, %c0_85], %158 {strides = array<i32>} : memref<32x1xi32, #tpu.memory_space<vmem>>, vector<32x1xi32>,
    return
  }
}

</mosaic_0001>

<llo_original>
// kernel: seq2seq_trainer_forward.1
$region0: #{seq2seq_trainer_forward.1}
  #allocation0 [shape = 'u32[]', space=smem, size = 0x4, offset = 0x4, fixed_abs, tag = 'smem constant byte address 0x4 - core index']
  #allocation1 [shape = 'u32[144,128]{1,0:T(1,128)}', space=vmem, size = 0x12000, scoped, tag = 'internal scratch']
  %s0 = inlined_call_operand.smem [shape: u32[46], index: -1, kind: input, shape index: {}]
  %s1 = sld [smem:[%s0]]
  %s2 = scalar_lea.smem %s0, 1
  %s3 = sld [smem:[%s2]]
  %s4 = scalar_lea.smem %s0, 2
  %s5 = sld [smem:[%s4]]
  %s6 = scalar_lea.smem %s0, 3
  %s7 = sld [smem:[%s6]]
  %s8 = scalar_lea.smem %s0, 4
  %s9 = sld [smem:[%s8]]
  %s10 = scalar_lea.smem %s0, 5
  %s11 = sld [smem:[%s10]]
  %s12 = scalar_lea.smem %s0, 6
  %s13 = sld [smem:[%s12]]
  %s14 = scalar_lea.smem %s0, 7
  %s15 = sld [smem:[%s14]]
  %s16 = scalar_lea.smem %s0, 8
  %s17 = sld [smem:[%s16]]
  %s18 = scalar_lea.smem %s0, 9
  %s19 = sld [smem:[%s18]]
  %s20 = scalar_lea.smem %s0, 10
  %s21 = sld [smem:[%s20]]
  %s22 = scalar_lea.smem %s0, 11
  %s23 = sld [smem:[%s22]]
  %s24 = scalar_lea.smem %s0, 12
  %s25 = sld [smem:[%s24]]
  %s26 = scalar_lea.smem %s0, 13
  %s27 = sld [smem:[%s26]]
  %s28 = scalar_lea.smem %s0, 14
  %s29 = sld [smem:[%s28]]
  %s30 = scalar_lea.smem %s0, 15
  %s31 = sld [smem:[%s30]]
  %s32 = scalar_lea.smem %s0, 16
  %s33 = sld [smem:[%s32]]
  %s34 = scalar_lea.smem %s0, 17
  %s35 = sld [smem:[%s34]]
  %s36 = scalar_lea.smem %s0, 18
  %s37 = sld [smem:[%s36]]
  %s38 = scalar_lea.smem %s0, 19
  %s39 = sld [smem:[%s38]]
  %s40 = scalar_lea.smem %s0, 20
  %s41 = sld [smem:[%s40]]
  %s42 = scalar_lea.smem %s0, 21
  %s43 = sld [smem:[%s42]]
  %s44 = scalar_lea.smem %s0, 22
  %s45 = sld [smem:[%s44]]
  %s46 = scalar_lea.smem %s0, 23
  %s47 = sld [smem:[%s46]]
  %s48 = scalar_lea.smem %s0, 24
  %s49 = sld [smem:[%s48]]
  %s50 = scalar_lea.smem %s0, 25
  %s51 = sld [smem:[%s50]]
  %s52 = scalar_lea.smem %s0, 26
  %s53 = sld [smem:[%s52]]
  %s54 = scalar_lea.smem %s0, 27
  %s55 = sld [smem:[%s54]]
  %s56 = scalar_lea.smem %s0, 28
  %s57 = sld [smem:[%s56]]
  %s58 = scalar_lea.smem %s0, 29
  %s59 = sld [smem:[%s58]]
  %s60 = scalar_lea.smem %s0, 30
  %s61 = sld [smem:[%s60]]
  %s62 = scalar_lea.smem %s0, 31
  %s63 = sld [smem:[%s62]]
  %s64 = scalar_lea.smem %s0, 32
  %s65 = sld [smem:[%s64]]
  %s66 = scalar_lea.smem %s0, 33
  %s67 = sld [smem:[%s66]]
  %s68 = scalar_lea.smem %s0, 34
  %s69 = sld [smem:[%s68]]
  %s70 = scalar_lea.smem %s0, 35
  %s71 = sld [smem:[%s70]]
  %s72 = scalar_lea.smem %s0, 36
  %s73 = sld [smem:[%s72]]
  %s74 = scalar_lea.smem %s0, 37
  %s75 = sld [smem:[%s74]]
  %s76 = scalar_lea.smem %s0, 38
  %s77 = sld [smem:[%s76]]
  %s78 = scalar_lea.smem %s0, 39
  %s79 = sld [smem:[%s78]]
  %s80 = scalar_lea.smem %s0, 40
  %s81 = sld [smem:[%s80]]
  %s82 = scalar_lea.smem %s0, 41
  %s83 = sld [smem:[%s82]]
  %s84 = scalar_lea.smem %s0, 42
  %s85 = sld [smem:[%s84]]
  %s86 = scalar_lea.smem %s0, 43
  %s87 = sld [smem:[%s86]]
  %s88 = scalar_lea.smem %s0, 44
  %s89 = sld [smem:[%s88]]
  %s90 = scalar_lea.smem %s0, 45
  %s91 = sld [smem:[%s90]]
  %s92 = sld [smem:[#allocation0]]
  $region197: #{seq2seq_trainer_forward.1} parent=0
    _
  %s94 = ssub.s32 1, %s92
  %s95 = scalar_select 0, %s94, %s92
  // Predicated region
  $region2: #{seq2seq_trainer_forward.1} parent=0 // pred_check
    _
  $region3: #{seq2seq_trainer_forward.1} parent=0 // pred_check_branch
    %97 = sbr.rel (0) target = $region5
  $region4: #{seq2seq_trainer_forward.1} parent=0 // pred_region
    _
  $region5: #{seq2seq_trainer_forward.1} parent=0 // pred_fallthru
    _
  // Predicated region
  $region6: #{seq2seq_trainer_forward.1} parent=0 // pred_check
    _
  $region7: #{seq2seq_trainer_forward.1} parent=0 // pred_check_branch
    %99 = sbr.rel (0) target = $region9
  $region8: #{seq2seq_trainer_forward.1} parent=0 // pred_region
    _
  $region9: #{seq2seq_trainer_forward.1} parent=0 // pred_fallthru
    _
  // Predicated region
  $region10: #{seq2seq_trainer_forward.1} parent=0 // pred_check
    _
  $region11: #{seq2seq_trainer_forward.1} parent=0 // pred_check_branch
    %101 = sbr.rel (0) target = $region13
  $region12: #{seq2seq_trainer_forward.1} parent=0 // pred_region
    _
  $region13: #{seq2seq_trainer_forward.1} parent=0 // pred_fallthru
    _
  // Predicated region
  $region14: #{seq2seq_trainer_forward.1} parent=0 // pred_check
    _
  $region15: #{seq2seq_trainer_forward.1} parent=0 // pred_check_branch
    %103 = sbr.rel (0) target = $region17
  $region16: #{seq2seq_trainer_forward.1} parent=0 // pred_region
    _
  $region17: #{seq2seq_trainer_forward.1} parent=0 // pred_fallthru
    _
  // Predicated region
  $region18: #{seq2seq_trainer_forward.1} parent=0 // pred_check
    _
  $region19: #{seq2seq_trainer_forward.1} parent=0 // pred_check_branch
    %105 = sbr.rel (0) target = $region21
  $region20: #{seq2seq_trainer_forward.1} parent=0 // pred_region
    _
  $region21: #{seq2seq_trainer_forward.1} parent=0 // pred_fallthru
    _
  // Predicated region
  $region22: #{seq2seq_trainer_forward.1} parent=0 // pred_check
    _
  $region23: #{seq2seq_trainer_forward.1} parent=0 // pred_check_branch
    %107 = sbr.rel (0) target = $region25
  $region24: #{seq2seq_trainer_forward.1} parent=0 // pred_region
    _
  $region25: #{seq2seq_trainer_forward.1} parent=0 // pred_fallthru
    _
  // Predicated region
  $region26: #{seq2seq_trainer_forward.1} parent=0 // pred_check
    _
  $region27: #{seq2seq_trainer_forward.1} parent=0 // pred_check_branch
    %109 = sbr.rel (0) target = $region29
  $region28: #{seq2seq_trainer_forward.1} parent=0 // pred_region
    _
  $region29: #{seq2seq_trainer_forward.1} parent=0 // pred_fallthru
    _
  // Predicated region
  $region30: #{seq2seq_trainer_forward.1} parent=0 // pred_check
    _
  $region31: #{seq2seq_trainer_forward.1} parent=0 // pred_check_branch
    %111 = sbr.rel (0) target = $region33
  $region32: #{seq2seq_trainer_forward.1} parent=0 // pred_region
    _
  $region33: #{seq2seq_trainer_forward.1} parent=0 // pred_fallthru
    _
  // Predicated region
  $region34: #{seq2seq_trainer_forward.1} parent=0 // pred_check
    _
  $region35: #{seq2seq_trainer_forward.1} parent=0 // pred_check_branch
    %113 = sbr.rel (0) target = $region37
  $region36: #{seq2seq_trainer_forward.1} parent=0 // pred_region
    _
  $region37: #{seq2seq_trainer_forward.1} parent=0 // pred_fallthru
    _
  // Predicated region
  $region38: #{seq2seq_trainer_forward.1} parent=0 // pred_check
    _
  $region39: #{seq2seq_trainer_forward.1} parent=0 // pred_check_branch
    %115 = sbr.rel (0) target = $region41
  $region40: #{seq2seq_trainer_forward.1} parent=0 // pred_region
    _
  $region41: #{seq2seq_trainer_forward.1} parent=0 // pred_fallthru
    _
  // Predicated region
  $region42: #{seq2seq_trainer_forward.1} parent=0 // pred_check
    _
  $region43: #{seq2seq_trainer_forward.1} parent=0 // pred_check_branch
    %117 = sbr.rel (0) target = $region45
  $region44: #{seq2seq_trainer_forward.1} parent=0 // pred_region
    _
  $region45: #{seq2seq_trainer_forward.1} parent=0 // pred_fallthru
    _
  // Predicated region
  $region46: #{seq2seq_trainer_forward.1} parent=0 // pred_check
    _
  $region47: #{seq2seq_trainer_forward.1} parent=0 // pred_check_branch
    %119 = sbr.rel (0) target = $region49
  $region48: #{seq2seq_trainer_forward.1} parent=0 // pred_region
    _
  $region49: #{seq2seq_trainer_forward.1} parent=0 // pred_fallthru
    _
  // Predicated region
  $region50: #{seq2seq_trainer_forward.1} parent=0 // pred_check
    _
  $region51: #{seq2seq_trainer_forward.1} parent=0 // pred_check_branch
    %121 = sbr.rel (0) target = $region53
  $region52: #{seq2seq_trainer_forward.1} parent=0 // pred_region
    _
  $region53: #{seq2seq_trainer_forward.1} parent=0 // pred_fallthru
    _
  // Predicated region
  $region54: #{seq2seq_trainer_forward.1} parent=0 // pred_check
    _
  $region55: #{seq2seq_trainer_forward.1} parent=0 // pred_check_branch
    %123 = sbr.rel (0) target = $region57
  $region56: #{seq2seq_trainer_forward.1} parent=0 // pred_region
    _
  $region57: #{seq2seq_trainer_forward.1} parent=0 // pred_fallthru
    _
  // Predicated region
  $region58: #{seq2seq_trainer_forward.1} parent=0 // pred_check
    _
  $region59: #{seq2seq_trainer_forward.1} parent=0 // pred_check_branch
    %125 = sbr.rel (0) target = $region61
  $region60: #{seq2seq_trainer_forward.1} parent=0 // pred_region
    _
  $region61: #{seq2seq_trainer_forward.1} parent=0 // pred_fallthru
    _
  // Predicated region
  $region62: #{seq2seq_trainer_forward.1} parent=0 // pred_check
    _
  $region63: #{seq2seq_trainer_forward.1} parent=0 // pred_check_branch
    %127 = sbr.rel (0) target = $region65
  $region64: #{seq2seq_trainer_forward.1} parent=0 // pred_region
    _
  $region65: #{seq2seq_trainer_forward.1} parent=0 // pred_fallthru
    _
  // Predicated region
  $region66: #{seq2seq_trainer_forward.1} parent=0 // pred_check
    _
  $region67: #{seq2seq_trainer_forward.1} parent=0 // pred_check_branch
    %129 = sbr.rel (0) target = $region69
  $region68: #{seq2seq_trainer_forward.1} parent=0 // pred_region
    _
  $region69: #{seq2seq_trainer_forward.1} parent=0 // pred_fallthru
    _
  // Predicated region
  $region70: #{seq2seq_trainer_forward.1} parent=0 // pred_check
    _
  $region71: #{seq2seq_trainer_forward.1} parent=0 // pred_check_branch
    %131 = sbr.rel (0) target = $region73
  $region72: #{seq2seq_trainer_forward.1} parent=0 // pred_region
    _
  $region73: #{seq2seq_trainer_forward.1} parent=0 // pred_fallthru
    _
  // Predicated region
  $region74: #{seq2seq_trainer_forward.1} parent=0 // pred_check
    _
  $region75: #{seq2seq_trainer_forward.1} parent=0 // pred_check_branch
    %133 = sbr.rel (0) target = $region77
  $region76: #{seq2seq_trainer_forward.1} parent=0 // pred_region
    _
  $region77: #{seq2seq_trainer_forward.1} parent=0 // pred_fallthru
    _
  // Predicated region
  $region78: #{seq2seq_trainer_forward.1} parent=0 // pred_check
    _
  $region79: #{seq2seq_trainer_forward.1} parent=0 // pred_check_branch
    %135 = sbr.rel (0) target = $region81
  $region80: #{seq2seq_trainer_forward.1} parent=0 // pred_region
    _
  $region81: #{seq2seq_trainer_forward.1} parent=0 // pred_fallthru
    _
  // Predicated region
  $region82: #{seq2seq_trainer_forward.1} parent=0 // pred_check
    _
  $region83: #{seq2seq_trainer_forward.1} parent=0 // pred_check_branch
    %137 = sbr.rel (0) target = $region85
  $region84: #{seq2seq_trainer_forward.1} parent=0 // pred_region
    _
  $region85: #{seq2seq_trainer_forward.1} parent=0 // pred_fallthru
    _
  // Predicated region
  $region86: #{seq2seq_trainer_forward.1} parent=0 // pred_check
    _
  $region87: #{seq2seq_trainer_forward.1} parent=0 // pred_check_branch
    %139 = sbr.rel (0) target = $region89
  $region88: #{seq2seq_trainer_forward.1} parent=0 // pred_region
    _
  $region89: #{seq2seq_trainer_forward.1} parent=0 // pred_fallthru
    _
  // Predicated region
  $region90: #{seq2seq_trainer_forward.1} parent=0 // pred_check
    _
  $region91: #{seq2seq_trainer_forward.1} parent=0 // pred_check_branch
    %141 = sbr.rel (0) target = $region93
  $region92: #{seq2seq_trainer_forward.1} parent=0 // pred_region
    _
  $region93: #{seq2seq_trainer_forward.1} parent=0 // pred_fallthru
    _
  // Predicated region
  $region94: #{seq2seq_trainer_forward.1} parent=0 // pred_check
    _
  $region95: #{seq2seq_trainer_forward.1} parent=0 // pred_check_branch
    %143 = sbr.rel (0) target = $region97
  $region96: #{seq2seq_trainer_forward.1} parent=0 // pred_region
    _
  $region97: #{seq2seq_trainer_forward.1} parent=0 // pred_fallthru
    _
  // Predicated region
  $region98: #{seq2seq_trainer_forward.1} parent=0 // pred_check
    _
  $region99: #{seq2seq_trainer_forward.1} parent=0 // pred_check_branch
    %145 = sbr.rel (0) target = $region101
  $region100: #{seq2seq_trainer_forward.1} parent=0 // pred_region
    _
  $region101: #{seq2seq_trainer_forward.1} parent=0 // pred_fallthru
    _
  // Predicated region
  $region102: #{seq2seq_trainer_forward.1} parent=0 // pred_check
    _
  $region103: #{seq2seq_trainer_forward.1} parent=0 // pred_check_branch
    %147 = sbr.rel (0) target = $region105
  $region104: #{seq2seq_trainer_forward.1} parent=0 // pred_region
    _
  $region105: #{seq2seq_trainer_forward.1} parent=0 // pred_fallthru
    _
  // Predicated region
  $region106: #{seq2seq_trainer_forward.1} parent=0 // pred_check
    _
  $region107: #{seq2seq_trainer_forward.1} parent=0 // pred_check_branch
    %149 = sbr.rel (0) target = $region109
  $region108: #{seq2seq_trainer_forward.1} parent=0 // pred_region
    _
  $region109: #{seq2seq_trainer_forward.1} parent=0 // pred_fallthru
    _
  // Predicated region
  $region110: #{seq2seq_trainer_forward.1} parent=0 // pred_check
    _
  $region111: #{seq2seq_trainer_forward.1} parent=0 // pred_check_branch
    %151 = sbr.rel (0) target = $region113
  $region112: #{seq2seq_trainer_forward.1} parent=0 // pred_region
    _
  $region113: #{seq2seq_trainer_forward.1} parent=0 // pred_fallthru
    _
  // Predicated region
  $region114: #{seq2seq_trainer_forward.1} parent=0 // pred_check
    _
  $region115: #{seq2seq_trainer_forward.1} parent=0 // pred_check_branch
    %153 = sbr.rel (0) target = $region117
  $region116: #{seq2seq_trainer_forward.1} parent=0 // pred_region
    _
  $region117: #{seq2seq_trainer_forward.1} parent=0 // pred_fallthru
    _
  // Predicated region
  $region118: #{seq2seq_trainer_forward.1} parent=0 // pred_check
    _
  $region119: #{seq2seq_trainer_forward.1} parent=0 // pred_check_branch
    %155 = sbr.rel (0) target = $region121
  $region120: #{seq2seq_trainer_forward.1} parent=0 // pred_region
    _
  $region121: #{seq2seq_trainer_forward.1} parent=0 // pred_fallthru
    _
  // Predicated region
  $region122: #{seq2seq_trainer_forward.1} parent=0 // pred_check
    _
  $region123: #{seq2seq_trainer_forward.1} parent=0 // pred_check_branch
    %157 = sbr.rel (0) target = $region125
  $region124: #{seq2seq_trainer_forward.1} parent=0 // pred_region
    _
  $region125: #{seq2seq_trainer_forward.1} parent=0 // pred_fallthru
    _
  // Predicated region
  $region126: #{seq2seq_trainer_forward.1} parent=0 // pred_check
    _
  $region127: #{seq2seq_trainer_forward.1} parent=0 // pred_check_branch
    %159 = sbr.rel (0) target = $region129
  $region128: #{seq2seq_trainer_forward.1} parent=0 // pred_region
    _
  $region129: #{seq2seq_trainer_forward.1} parent=0 // pred_fallthru
    _
  // Predicated region
  $region130: #{seq2seq_trainer_forward.1} parent=0 // pred_check
    _
  $region131: #{seq2seq_trainer_forward.1} parent=0 // pred_check_branch
    %161 = sbr.rel (0) target = $region133
  $region132: #{seq2seq_trainer_forward.1} parent=0 // pred_region
    _
  $region133: #{seq2seq_trainer_forward.1} parent=0 // pred_fallthru
    _
  // Predicated region
  $region134: #{seq2seq_trainer_forward.1} parent=0 // pred_check
    _
  $region135: #{seq2seq_trainer_forward.1} parent=0 // pred_check_branch
    %163 = sbr.rel (0) target = $region137
  $region136: #{seq2seq_trainer_forward.1} parent=0 // pred_region
    _
  $region137: #{seq2seq_trainer_forward.1} parent=0 // pred_fallthru
    _
  // Predicated region
  $region138: #{seq2seq_trainer_forward.1} parent=0 // pred_check
    _
  $region139: #{seq2seq_trainer_forward.1} parent=0 // pred_check_branch
    %165 = sbr.rel (0) target = $region141
  $region140: #{seq2seq_trainer_forward.1} parent=0 // pred_region
    _
  $region141: #{seq2seq_trainer_forward.1} parent=0 // pred_fallthru
    _
  // Predicated region
  $region142: #{seq2seq_trainer_forward.1} parent=0 // pred_check
    _
  $region143: #{seq2seq_trainer_forward.1} parent=0 // pred_check_branch
    %167 = sbr.rel (0) target = $region145
  $region144: #{seq2seq_trainer_forward.1} parent=0 // pred_region
    _
  $region145: #{seq2seq_trainer_forward.1} parent=0 // pred_fallthru
    _
  // Predicated region
  $region146: #{seq2seq_trainer_forward.1} parent=0 // pred_check
    _
  $region147: #{seq2seq_trainer_forward.1} parent=0 // pred_check_branch
    %169 = sbr.rel (0) target = $region149
  $region148: #{seq2seq_trainer_forward.1} parent=0 // pred_region
    _
  $region149: #{seq2seq_trainer_forward.1} parent=0 // pred_fallthru
    _
  // Predicated region
  $region150: #{seq2seq_trainer_forward.1} parent=0 // pred_check
    _
  $region151: #{seq2seq_trainer_forward.1} parent=0 // pred_check_branch
    %171 = sbr.rel (0) target = $region153
  $region152: #{seq2seq_trainer_forward.1} parent=0 // pred_region
    _
  $region153: #{seq2seq_trainer_forward.1} parent=0 // pred_fallthru
    _
  // Predicated region
  $region154: #{seq2seq_trainer_forward.1} parent=0 // pred_check
    _
  $region155: #{seq2seq_trainer_forward.1} parent=0 // pred_check_branch
    %173 = sbr.rel (0) target = $region157
  $region156: #{seq2seq_trainer_forward.1} parent=0 // pred_region
    _
  $region157: #{seq2seq_trainer_forward.1} parent=0 // pred_fallthru
    _
  // Predicated region
  $region158: #{seq2seq_trainer_forward.1} parent=0 // pred_check
    _
  $region159: #{seq2seq_trainer_forward.1} parent=0 // pred_check_branch
    %175 = sbr.rel (0) target = $region161
  $region160: #{seq2seq_trainer_forward.1} parent=0 // pred_region
    _
  $region161: #{seq2seq_trainer_forward.1} parent=0 // pred_fallthru
    _
  // Predicated region
  $region162: #{seq2seq_trainer_forward.1} parent=0 // pred_check
    _
  $region163: #{seq2seq_trainer_forward.1} parent=0 // pred_check_branch
    %177 = sbr.rel (0) target = $region165
  $region164: #{seq2seq_trainer_forward.1} parent=0 // pred_region
    _
  $region165: #{seq2seq_trainer_forward.1} parent=0 // pred_fallthru
    _
  // Predicated region
  $region166: #{seq2seq_trainer_forward.1} parent=0 // pred_check
    _
  $region167: #{seq2seq_trainer_forward.1} parent=0 // pred_check_branch
    %179 = sbr.rel (0) target = $region169
  $region168: #{seq2seq_trainer_forward.1} parent=0 // pred_region
    _
  $region169: #{seq2seq_trainer_forward.1} parent=0 // pred_fallthru
    _
  // Predicated region
  $region170: #{seq2seq_trainer_forward.1} parent=0 // pred_check
    _
  $region171: #{seq2seq_trainer_forward.1} parent=0 // pred_check_branch
    %181 = sbr.rel (0) target = $region173
  $region172: #{seq2seq_trainer_forward.1} parent=0 // pred_region
    _
  $region173: #{seq2seq_trainer_forward.1} parent=0 // pred_fallthru
    _
  // Predicated region
  $region174: #{seq2seq_trainer_forward.1} parent=0 // pred_check
    _
  $region175: #{seq2seq_trainer_forward.1} parent=0 // pred_check_branch
    %183 = sbr.rel (0) target = $region177
  $region176: #{seq2seq_trainer_forward.1} parent=0 // pred_region
    _
  $region177: #{seq2seq_trainer_forward.1} parent=0 // pred_fallthru
    _
  // Predicated region
  $region178: #{seq2seq_trainer_forward.1} parent=0 // pred_check
    _
  $region179: #{seq2seq_trainer_forward.1} parent=0 // pred_check_branch
    %185 = sbr.rel (0) target = $region181
  $region180: #{seq2seq_trainer_forward.1} parent=0 // pred_region
    _
  $region181: #{seq2seq_trainer_forward.1} parent=0 // pred_fallthru
    _
  %v186 = vld [vmem:[%s11] sm:$0xff]
  %v187 = vld [vmem:[%s11 + $0x8] sm:$0xff]
  %v188 = vld [vmem:[%s7] sm:$0xff]
  %v189 = vld [vmem:[%s7 + $0x8] sm:$0xff]
  %v190 = vld [vmem:[%s81] sm:$0xff]
  %v191 = vld [vmem:[%s81 + $0x8] sm:$0xff]
  %v192 = vld [vmem:[%s81 + $0x10] sm:$0xff]
  %v193 = vld [vmem:[%s81 + $0x18] sm:$0xff]
  %v194 = vld [vmem:[%s77] sm:$0x1]
  %v196 = vlaneseq
  %v197 = vshrl.u32 %v196, 7
  %v198 = vsub.s32 0, %v197
  %v199 = vrot.slane %v194, %v198
  %vm201 = vcmask 261120
  %v203 = vsel %vm201, %v186, 0
  %v206 = vsel %vm201, %v187, 0
  %208 = vmatprep.subr.mxu0 0.0
  %209 = vmatpush1.msra.mxu0 %v190
  %210 = vmatprep.subr.mxu0 0.0
  %211 = vmatpush1.msra.mxu0 %v191
  %212 = vmatprep.subr.mxu0 0.0
  %213 = vmatpush1.msra.mxu0 %v192
  %214 = vmatprep.subr.mxu0 0.0
  %215 = vmatpush1.msra.mxu0 %v193
  %216 = vmatprep.subr.mxu0 0.0
  %217 = vmatpush1.msra.mxu0 0.0
  %218 = vmatprep.subr.mxu0 0.0
  %219 = vmatpush1.msra.mxu0 0.0
  %220 = vmatprep.subr.mxu0 0.0
  %221 = vmatpush1.msra.mxu0 0.0
  %222 = vmatprep.subr.mxu0 0.0
  %223 = vmatpush1.msra.mxu0 0.0
  %224 = vmatprep.subr.mxu0 0.0
  %225 = vmatpush1.msra.mxu0 0.0
  %226 = vmatprep.subr.mxu0 0.0
  %227 = vmatpush1.msra.mxu0 0.0
  %228 = vmatprep.subr.mxu0 0.0
  %229 = vmatpush1.msra.mxu0 0.0
  %230 = vmatprep.subr.mxu0 0.0
  %231 = vmatpush1.msra.mxu0 0.0
  %232 = vmatprep.subr.mxu0 0.0
  %233 = vmatpush1.msra.mxu0 0.0
  %234 = vmatprep.subr.mxu0 0.0
  %235 = vmatpush1.msra.mxu0 0.0
  %236 = vmatprep.subr.mxu0 0.0
  %237 = vmatpush1.msra.mxu0 0.0
  %238 = vmatprep.subr.mxu0 0.0
  %239 = vmatpush1.msra.mxu0 0.0
  %240 = vmatprep.subr.mxu0 0.0
  %241 = vmatpush1.msra.mxu0 0.0
  %242 = vmatprep.subr.mxu0 0.0
  %243 = vmatpush1.msra.mxu0 0.0
  %244 = vmatprep.subr.mxu0 0.0
  %245 = vmatpush1.msra.mxu0 0.0
  %246 = vmatprep.subr.mxu0 0.0
  %247 = vmatpush1.msra.mxu0 0.0
  %248 = vmatprep.subr.mxu0 0.0
  %249 = vmatpush1.msra.mxu0 0.0
  %250 = vmatprep.subr.mxu0 0.0
  %251 = vmatpush1.msra.mxu0 0.0
  %252 = vmatprep.subr.mxu0 0.0
  %253 = vmatpush1.msra.mxu0 0.0
  %254 = vmatprep.subr.mxu0 0.0
  %255 = vmatpush1.msra.mxu0 0.0
  %256 = vmatprep.subr.mxu0 0.0
  %257 = vmatpush1.msra.mxu0 0.0
  %258 = vmatprep.subr.mxu0 0.0
  %259 = vmatpush1.msra.mxu0 0.0
  %260 = vmatprep.subr.mxu0 0.0
  %261 = vmatpush1.msra.mxu0 0.0
  %262 = vmatprep.subr.mxu0 0.0
  %263 = vmatpush1.msra.mxu0 0.0
  %264 = vmatprep.subr.mxu0 0.0
  %265 = vmatpush1.msra.mxu0 0.0
  %266 = vmatprep.subr.mxu0 0.0
  %267 = vmatpush1.msra.mxu0 0.0
  %268 = vmatprep.subr.mxu0 0.0
  %269 = vmatpush1.msra.mxu0 0.0
  %270 = vmatprep.subr.mxu0 0.0
  %271 = vmatpush1.msra.mxu0 0.0
  %272 = vmatprep.mubr.f32.mxu0 0.0
  %273 = vmatmul.mubr.f32.gmra.mrb[0].mxu0 %v203
  %v274 = vpop.f32.mrb[0].mxu0
  %v275 = vadd.f32 %v199, %v274
  %v276 = vpop.f32.mrb[0].mxu0
  %277 = vmatprep.mubr.f32.mxu0 0.0
  %278 = vmatmul.mubr.f32.gmra.mrb[0].mxu0 %v206
  %v279 = vpop.f32.mrb[0].mxu0
  %v280 = vadd.f32 %v199, %v279
  %v281 = vpop.f32.mrb[0].mxu0
  %282 = vdwg.mxu0
  %v283 = vld [vmem:[%s79] sm:$0xff]
  %v284 = vld [vmem:[%s79 + $0x8] sm:$0xff]
  %v285 = vld [vmem:[%s79 + $0x10] sm:$0xff]
  %v286 = vld [vmem:[%s79 + $0x18] sm:$0xff]
  %289 = vrot.lane.b32.xlu0 %v275, 96
  %v290 = vpop.permute.xlu0 %289
  %291 = vrot.lane.b32.xlu0 %v280, 96
  %v292 = vpop.permute.xlu0 %291
  %vm293 = vcmask 130048
  %v294 = vsel %vm293, %v275, 0
  %v296 = vsel %vm293, %v280, 0
  %v298 = vsel %vm293, %v290, 0
  %v300 = vsel %vm293, %v292, 0
  %302 = vmatprep.subr.mxu0 0.0
  %303 = vmatpush1.xpose.msra.mxu0 %v298
  %304 = vmatprep.subr.mxu0 0.0
  %305 = vmatpush1.xpose.msra.mxu0 %v300
  %306 = vmatprep.subr.mxu0 0.0
  %307 = vmatpush1.xpose.msra.mxu0 0.0
  %308 = vmatprep.subr.mxu0 0.0
  %309 = vmatpush1.xpose.msra.mxu0 0.0
  %310 = vmatprep.subr.mxu0 0.0
  %311 = vmatpush1.xpose.msra.mxu0 0.0
  %312 = vmatprep.subr.mxu0 0.0
  %313 = vmatpush1.xpose.msra.mxu0 0.0
  %314 = vmatprep.subr.mxu0 0.0
  %315 = vmatpush1.xpose.msra.mxu0 0.0
  %316 = vmatprep.subr.mxu0 0.0
  %317 = vmatpush1.xpose.msra.mxu0 0.0
  %318 = vmatprep.subr.mxu0 0.0
  %319 = vmatpush1.xpose.msra.mxu0 0.0
  %320 = vmatprep.subr.mxu0 0.0
  %321 = vmatpush1.xpose.msra.mxu0 0.0
  %322 = vmatprep.subr.mxu0 0.0
  %323 = vmatpush1.xpose.msra.mxu0 0.0
  %324 = vmatprep.subr.mxu0 0.0
  %325 = vmatpush1.xpose.msra.mxu0 0.0
  %326 = vmatprep.subr.mxu0 0.0
  %327 = vmatpush1.xpose.msra.mxu0 0.0
  %328 = vmatprep.subr.mxu0 0.0
  %329 = vmatpush1.xpose.msra.mxu0 0.0
  %330 = vmatprep.subr.mxu0 0.0
  %331 = vmatpush1.xpose.msra.mxu0 0.0
  %332 = vmatprep.subr.mxu0 0.0
  %333 = vmatpush1.xpose.msra.mxu0 0.0
  %334 = vmatprep.subr.mxu0 0.0
  %335 = vmatpush1.xpose.msra.mxu0 0.0
  %336 = vmatprep.subr.mxu0 0.0
  %337 = vmatpush1.xpose.msra.mxu0 0.0
  %338 = vmatprep.subr.mxu0 0.0
  %339 = vmatpush1.xpose.msra.mxu0 0.0
  %340 = vmatprep.subr.mxu0 0.0
  %341 = vmatpush1.xpose.msra.mxu0 0.0
  %342 = vmatprep.subr.mxu0 0.0
  %343 = vmatpush1.xpose.msra.mxu0 0.0
  %344 = vmatprep.subr.mxu0 0.0
  %345 = vmatpush1.xpose.msra.mxu0 0.0
  %346 = vmatprep.subr.mxu0 0.0
  %347 = vmatpush1.xpose.msra.mxu0 0.0
  %348 = vmatprep.subr.mxu0 0.0
  %349 = vmatpush1.xpose.msra.mxu0 0.0
  %350 = vmatprep.subr.mxu0 0.0
  %351 = vmatpush1.xpose.msra.mxu0 0.0
  %352 = vmatprep.subr.mxu0 0.0
  %353 = vmatpush1.xpose.msra.mxu0 0.0
  %354 = vmatprep.subr.mxu0 0.0
  %355 = vmatpush1.xpose.msra.mxu0 0.0
  %356 = vmatprep.subr.mxu0 0.0
  %357 = vmatpush1.xpose.msra.mxu0 0.0
  %358 = vmatprep.subr.mxu0 0.0
  %359 = vmatpush1.xpose.msra.mxu0 0.0
  %360 = vmatprep.subr.mxu0 0.0
  %361 = vmatpush1.xpose.msra.mxu0 0.0
  %362 = vmatprep.subr.mxu0 0.0
  %363 = vmatpush1.xpose.msra.mxu0 0.0
  %364 = vmatprep.subr.mxu0 0.0
  %365 = vmatpush1.xpose.msra.mxu0 0.0
  %366 = vmatprep.mubr.f32.mxu0 0.0
  %367 = vmatmul.mubr.f32.gmra.mrb[0].mxu0 %v294
  %v368 = vpop.f32.mrb[0].mxu0
  %v369 = vadd.f32 0.0, %v368
  %v370 = vpop.f32.mrb[0].mxu0
  %371 = vmatprep.mubr.f32.mxu0 0.0
  %372 = vmatmul.mubr.f32.gmra.mrb[0].mxu0 %v296
  %v373 = vpop.f32.mrb[0].mxu0
  %v374 = vadd.f32 0.0, %v373
  %v375 = vpop.f32.mrb[0].mxu0
  %376 = vdwg.mxu0
  %v377 = vmul.f32 %v369, 0.25
  %v378 = vmul.f32 %v374, 0.25
  %v379 = vadd.f32 %v377, %v188
  %v380 = vadd.f32 %v378, %v189
  %v381 = vsel %vm293, %v379, -inf
  %382 = vmax.xlane.f32.xlu0 %v381
  %v383 = vpop.xlane.xlu0 %382
  %v384 = vsel %vm293, %v380, -inf
  %385 = vmax.xlane.f32.xlu0 %v384
  %v386 = vpop.xlane.xlu0 %385
  %v387 = vsub.f32 %v379, %v383
  %v388 = vsub.f32 %v380, %v386
  %v389 = vmul.f32 %v387, 1.442695
  %v390 = vpow.pop %v389
  %v391 = vmul.f32 %v388, 1.442695
  %v392 = vpow.pop %v391
  %v393 = vsel %vm293, %v390, 0.0
  %394 = vadd.xlane.f32.xlu0 %v393
  %v395 = vpop.xlane.xlu0 %394
  %v396 = vsel %vm293, %v392, 0.0
  %397 = vadd.xlane.f32.xlu0 %v396
  %v398 = vpop.xlane.xlu0 %397
  %v399 = vrcp.pop %v395
  %v400 = vmul.f32 %v390, %v399
  %v401 = vrcp.pop %v398
  %v402 = vmul.f32 %v392, %v401
  %403 = vrot.lane.b32.xlu0 %v275, 64
  %v404 = vpop.permute.xlu0 %403
  %405 = vrot.lane.b32.xlu0 %v280, 64
  %v406 = vpop.permute.xlu0 %405
  %v410 = vsel %vm293, %v400, 0
  %v413 = vsel %vm293, %v402, 0
  %415 = vmatprep.subr.mxu0 0.0
  %416 = vmatpush1.msra.mxu0 %v404
  %417 = vmatprep.subr.mxu0 0.0
  %418 = vmatpush1.msra.mxu0 %v406
  %419 = vmatprep.subr.mxu0 0.0
  %420 = vmatpush1.msra.mxu0 0.0
  %421 = vmatprep.subr.mxu0 0.0
  %422 = vmatpush1.msra.mxu0 0.0
  %423 = vmatprep.subr.mxu0 0.0
  %424 = vmatpush1.msra.mxu0 0.0
  %425 = vmatprep.subr.mxu0 0.0
  %426 = vmatpush1.msra.mxu0 0.0
  %427 = vmatprep.subr.mxu0 0.0
  %428 = vmatpush1.msra.mxu0 0.0
  %429 = vmatprep.subr.mxu0 0.0
  %430 = vmatpush1.msra.mxu0 0.0
  %431 = vmatprep.subr.mxu0 0.0
  %432 = vmatpush1.msra.mxu0 0.0
  %433 = vmatprep.subr.mxu0 0.0
  %434 = vmatpush1.msra.mxu0 0.0
  %435 = vmatprep.subr.mxu0 0.0
  %436 = vmatpush1.msra.mxu0 0.0
  %437 = vmatprep.subr.mxu0 0.0
  %438 = vmatpush1.msra.mxu0 0.0
  %439 = vmatprep.subr.mxu0 0.0
  %440 = vmatpush1.msra.mxu0 0.0
  %441 = vmatprep.subr.mxu0 0.0
  %442 = vmatpush1.msra.mxu0 0.0
  %443 = vmatprep.subr.mxu0 0.0
  %444 = vmatpush1.msra.mxu0 0.0
  %445 = vmatprep.subr.mxu0 0.0
  %446 = vmatpush1.msra.mxu0 0.0
  %447 = vmatprep.subr.mxu0 0.0
  %448 = vmatpush1.msra.mxu0 0.0
  %449 = vmatprep.subr.mxu0 0.0
  %450 = vmatpush1.msra.mxu0 0.0
  %451 = vmatprep.subr.mxu0 0.0
  %452 = vmatpush1.msra.mxu0 0.0
  %453 = vmatprep.subr.mxu0 0.0
  %454 = vmatpush1.msra.mxu0 0.0
  %455 = vmatprep.subr.mxu0 0.0
  %456 = vmatpush1.msra.mxu0 0.0
  %457 = vmatprep.subr.mxu0 0.0
  %458 = vmatpush1.msra.mxu0 0.0
  %459 = vmatprep.subr.mxu0 0.0
  %460 = vmatpush1.msra.mxu0 0.0
  %461 = vmatprep.subr.mxu0 0.0
  %462 = vmatpush1.msra.mxu0 0.0
  %463 = vmatprep.subr.mxu0 0.0
  %464 = vmatpush1.msra.mxu0 0.0
  %465 = vmatprep.subr.mxu0 0.0
  %466 = vmatpush1.msra.mxu0 0.0
  %467 = vmatprep.subr.mxu0 0.0
  %468 = vmatpush1.msra.mxu0 0.0
  %469 = vmatprep.subr.mxu0 0.0
  %470 = vmatpush1.msra.mxu0 0.0
  %471 = vmatprep.subr.mxu0 0.0
  %472 = vmatpush1.msra.mxu0 0.0
  %473 = vmatprep.subr.mxu0 0.0
  %474 = vmatpush1.msra.mxu0 0.0
  %475 = vmatprep.subr.mxu0 0.0
  %476 = vmatpush1.msra.mxu0 0.0
  %477 = vmatprep.subr.mxu0 0.0
  %478 = vmatpush1.msra.mxu0 0.0
  %479 = vmatprep.mubr.f32.mxu0 0.0
  %480 = vmatmul.mubr.f32.gmra.mrb[0].mxu0 %v410
  %v481 = vpop.f32.mrb[0].mxu0
  %v482 = vadd.f32 0.0, %v481
  %v483 = vpop.f32.mrb[0].mxu0
  %484 = vmatprep.mubr.f32.mxu0 0.0
  %485 = vmatmul.mubr.f32.gmra.mrb[0].mxu0 %v413
  %v486 = vpop.f32.mrb[0].mxu0
  %v487 = vadd.f32 0.0, %v486
  %v488 = vpop.f32.mrb[0].mxu0
  %489 = vdwg.mxu0
  %490 = vrot.lane.b32.xlu0 %v275, 112
  %v491 = vpop.permute.xlu0 %490
  %492 = vrot.lane.b32.xlu0 %v280, 112
  %v493 = vpop.permute.xlu0 %492
  %494 = vrot.lane.b32.xlu0 %v275, 80
  %v495 = vpop.permute.xlu0 %494
  %496 = vrot.lane.b32.xlu0 %v280, 80
  %v497 = vpop.permute.xlu0 %496
  %v498 = vsel %vm293, %v491, 0
  %v500 = vsel %vm293, %v493, 0
  %v502 = vsel %vm293, %v495, 0
  %v504 = vsel %vm293, %v497, 0
  %506 = vmatprep.subr.mxu0 0.0
  %507 = vmatpush1.xpose.msra.mxu0 %v502
  %508 = vmatprep.subr.mxu0 0.0
  %509 = vmatpush1.xpose.msra.mxu0 %v504
  %510 = vmatprep.subr.mxu0 0.0
  %511 = vmatpush1.xpose.msra.mxu0 0.0
  %512 = vmatprep.subr.mxu0 0.0
  %513 = vmatpush1.xpose.msra.mxu0 0.0
  %514 = vmatprep.subr.mxu0 0.0
  %515 = vmatpush1.xpose.msra.mxu0 0.0
  %516 = vmatprep.subr.mxu0 0.0
  %517 = vmatpush1.xpose.msra.mxu0 0.0
  %518 = vmatprep.subr.mxu0 0.0
  %519 = vmatpush1.xpose.msra.mxu0 0.0
  %520 = vmatprep.subr.mxu0 0.0
  %521 = vmatpush1.xpose.msra.mxu0 0.0
  %522 = vmatprep.subr.mxu0 0.0
  %523 = vmatpush1.xpose.msra.mxu0 0.0
  %524 = vmatprep.subr.mxu0 0.0
  %525 = vmatpush1.xpose.msra.mxu0 0.0
  %526 = vmatprep.subr.mxu0 0.0
  %527 = vmatpush1.xpose.msra.mxu0 0.0
  %528 = vmatprep.subr.mxu0 0.0
  %529 = vmatpush1.xpose.msra.mxu0 0.0
  %530 = vmatprep.subr.mxu0 0.0
  %531 = vmatpush1.xpose.msra.mxu0 0.0
  %532 = vmatprep.subr.mxu0 0.0
  %533 = vmatpush1.xpose.msra.mxu0 0.0
  %534 = vmatprep.subr.mxu0 0.0
  %535 = vmatpush1.xpose.msra.mxu0 0.0
  %536 = vmatprep.subr.mxu0 0.0
  %537 = vmatpush1.xpose.msra.mxu0 0.0
  %538 = vmatprep.subr.mxu0 0.0
  %539 = vmatpush1.xpose.msra.mxu0 0.0
  %540 = vmatprep.subr.mxu0 0.0
  %541 = vmatpush1.xpose.msra.mxu0 0.0
  %542 = vmatprep.subr.mxu0 0.0
  %543 = vmatpush1.xpose.msra.mxu0 0.0
  %544 = vmatprep.subr.mxu0 0.0
  %545 = vmatpush1.xpose.msra.mxu0 0.0
  %546 = vmatprep.subr.mxu0 0.0
  %547 = vmatpush1.xpose.msra.mxu0 0.0
  %548 = vmatprep.subr.mxu0 0.0
  %549 = vmatpush1.xpose.msra.mxu0 0.0
  %550 = vmatprep.subr.mxu0 0.0
  %551 = vmatpush1.xpose.msra.mxu0 0.0
  %552 = vmatprep.subr.mxu0 0.0
  %553 = vmatpush1.xpose.msra.mxu0 0.0
  %554 = vmatprep.subr.mxu0 0.0
  %555 = vmatpush1.xpose.msra.mxu0 0.0
  %556 = vmatprep.subr.mxu0 0.0
  %557 = vmatpush1.xpose.msra.mxu0 0.0
  %558 = vmatprep.subr.mxu0 0.0
  %559 = vmatpush1.xpose.msra.mxu0 0.0
  %560 = vmatprep.subr.mxu0 0.0
  %561 = vmatpush1.xpose.msra.mxu0 0.0
  %562 = vmatprep.subr.mxu0 0.0
  %563 = vmatpush1.xpose.msra.mxu0 0.0
  %564 = vmatprep.subr.mxu0 0.0
  %565 = vmatpush1.xpose.msra.mxu0 0.0
  %566 = vmatprep.subr.mxu0 0.0
  %567 = vmatpush1.xpose.msra.mxu0 0.0
  %568 = vmatprep.subr.mxu0 0.0
  %569 = vmatpush1.xpose.msra.mxu0 0.0
  %570 = vmatprep.mubr.f32.mxu0 0.0
  %571 = vmatmul.mubr.f32.gmra.mrb[0].mxu0 %v498
  %v572 = vpop.f32.mrb[0].mxu0
  %v573 = vadd.f32 0.0, %v572
  %v574 = vpop.f32.mrb[0].mxu0
  %575 = vmatprep.mubr.f32.mxu0 0.0
  %576 = vmatmul.mubr.f32.gmra.mrb[0].mxu0 %v500
  %v577 = vpop.f32.mrb[0].mxu0
  %v578 = vadd.f32 0.0, %v577
  %v579 = vpop.f32.mrb[0].mxu0
  %580 = vdwg.mxu0
  %v581 = vmul.f32 %v573, 0.25
  %v582 = vmul.f32 %v578, 0.25
  %v583 = vadd.f32 %v581, %v188
  %v584 = vadd.f32 %v582, %v189
  %v585 = vsel %vm293, %v583, -inf
  %586 = vmax.xlane.f32.xlu0 %v585
  %v587 = vpop.xlane.xlu0 %586
  %v588 = vsel %vm293, %v584, -inf
  %589 = vmax.xlane.f32.xlu0 %v588
  %v590 = vpop.xlane.xlu0 %589
  %v591 = vsub.f32 %v583, %v587
  %v592 = vsub.f32 %v584, %v590
  %v593 = vmul.f32 %v591, 1.442695
  %v594 = vpow.pop %v593
  %v595 = vmul.f32 %v592, 1.442695
  %v596 = vpow.pop %v595
  %v597 = vsel %vm293, %v594, 0.0
  %598 = vadd.xlane.f32.xlu0 %v597
  %v599 = vpop.xlane.xlu0 %598
  %v600 = vsel %vm293, %v596, 0.0
  %601 = vadd.xlane.f32.xlu0 %v600
  %v602 = vpop.xlane.xlu0 %601
  %v603 = vrcp.pop %v599
  %v604 = vmul.f32 %v594, %v603
  %v605 = vrcp.pop %v602
  %v606 = vmul.f32 %v596, %v605
  %607 = vrot.lane.b32.xlu0 %v275, 48
  %v608 = vpop.permute.xlu0 %607
  %609 = vrot.lane.b32.xlu0 %v280, 48
  %v610 = vpop.permute.xlu0 %609
  %v614 = vsel %vm293, %v604, 0
  %v617 = vsel %vm293, %v606, 0
  %619 = vmatprep.subr.mxu0 0.0
  %620 = vmatpush1.msra.mxu0 %v608
  %621 = vmatprep.subr.mxu0 0.0
  %622 = vmatpush1.msra.mxu0 %v610
  %623 = vmatprep.subr.mxu0 0.0
  %624 = vmatpush1.msra.mxu0 0.0
  %625 = vmatprep.subr.mxu0 0.0
  %626 = vmatpush1.msra.mxu0 0.0
  %627 = vmatprep.subr.mxu0 0.0
  %628 = vmatpush1.msra.mxu0 0.0
  %629 = vmatprep.subr.mxu0 0.0
  %630 = vmatpush1.msra.mxu0 0.0
  %631 = vmatprep.subr.mxu0 0.0
  %632 = vmatpush1.msra.mxu0 0.0
  %633 = vmatprep.subr.mxu0 0.0
  %634 = vmatpush1.msra.mxu0 0.0
  %635 = vmatprep.subr.mxu0 0.0
  %636 = vmatpush1.msra.mxu0 0.0
  %637 = vmatprep.subr.mxu0 0.0
  %638 = vmatpush1.msra.mxu0 0.0
  %639 = vmatprep.subr.mxu0 0.0
  %640 = vmatpush1.msra.mxu0 0.0
  %641 = vmatprep.subr.mxu0 0.0
  %642 = vmatpush1.msra.mxu0 0.0
  %643 = vmatprep.subr.mxu0 0.0
  %644 = vmatpush1.msra.mxu0 0.0
  %645 = vmatprep.subr.mxu0 0.0
  %646 = vmatpush1.msra.mxu0 0.0
  %647 = vmatprep.subr.mxu0 0.0
  %648 = vmatpush1.msra.mxu0 0.0
  %649 = vmatprep.subr.mxu0 0.0
  %650 = vmatpush1.msra.mxu0 0.0
  %651 = vmatprep.subr.mxu0 0.0
  %652 = vmatpush1.msra.mxu0 0.0
  %653 = vmatprep.subr.mxu0 0.0
  %654 = vmatpush1.msra.mxu0 0.0
  %655 = vmatprep.subr.mxu0 0.0
  %656 = vmatpush1.msra.mxu0 0.0
  %657 = vmatprep.subr.mxu0 0.0
  %658 = vmatpush1.msra.mxu0 0.0
  %659 = vmatprep.subr.mxu0 0.0
  %660 = vmatpush1.msra.mxu0 0.0
  %661 = vmatprep.subr.mxu0 0.0
  %662 = vmatpush1.msra.mxu0 0.0
  %663 = vmatprep.subr.mxu0 0.0
  %664 = vmatpush1.msra.mxu0 0.0
  %665 = vmatprep.subr.mxu0 0.0
  %666 = vmatpush1.msra.mxu0 0.0
  %667 = vmatprep.subr.mxu0 0.0
  %668 = vmatpush1.msra.mxu0 0.0
  %669 = vmatprep.subr.mxu0 0.0
  %670 = vmatpush1.msra.mxu0 0.0
  %671 = vmatprep.subr.mxu0 0.0
  %672 = vmatpush1.msra.mxu0 0.0
  %673 = vmatprep.subr.mxu0 0.0
  %674 = vmatpush1.msra.mxu0 0.0
  %675 = vmatprep.subr.mxu0 0.0
  %676 = vmatpush1.msra.mxu0 0.0
  %677 = vmatprep.subr.mxu0 0.0
  %678 = vmatpush1.msra.mxu0 0.0
  %679 = vmatprep.subr.mxu0 0.0
  %680 = vmatpush1.msra.mxu0 0.0
  %681 = vmatprep.subr.mxu0 0.0
  %682 = vmatpush1.msra.mxu0 0.0
  %683 = vmatprep.mubr.f32.mxu0 0.0
  %684 = vmatmul.mubr.f32.gmra.mrb[0].mxu0 %v614
  %v685 = vpop.f32.mrb[0].mxu0
  %v686 = vadd.f32 0.0, %v685
  %v687 = vpop.f32.mrb[0].mxu0
  %688 = vmatprep.mubr.f32.mxu0 0.0
  %689 = vmatmul.mubr.f32.gmra.mrb[0].mxu0 %v617
  %v690 = vpop.f32.mrb[0].mxu0
  %v691 = vadd.f32 0.0, %v690
  %v692 = vpop.f32.mrb[0].mxu0
  %693 = vdwg.mxu0
  %v695 = vsel %vm293, %v686, 0
  %v698 = vsel %vm293, %v691, 0
  %700 = vmatprep.subr.mxu0 0.0
  %701 = vmatpush1.msra.mxu0 %v285
  %702 = vmatprep.subr.mxu0 0.0
  %703 = vmatpush1.msra.mxu0 %v286
  %704 = vmatprep.subr.mxu0 0.0
  %705 = vmatpush1.msra.mxu0 0.0
  %706 = vmatprep.subr.mxu0 0.0
  %707 = vmatpush1.msra.mxu0 0.0
  %708 = vmatprep.subr.mxu0 0.0
  %709 = vmatpush1.msra.mxu0 0.0
  %710 = vmatprep.subr.mxu0 0.0
  %711 = vmatpush1.msra.mxu0 0.0
  %712 = vmatprep.subr.mxu0 0.0
  %713 = vmatpush1.msra.mxu0 0.0
  %714 = vmatprep.subr.mxu0 0.0
  %715 = vmatpush1.msra.mxu0 0.0
  %716 = vmatprep.subr.mxu0 0.0
  %717 = vmatpush1.msra.mxu0 0.0
  %718 = vmatprep.subr.mxu0 0.0
  %719 = vmatpush1.msra.mxu0 0.0
  %720 = vmatprep.subr.mxu0 0.0
  %721 = vmatpush1.msra.mxu0 0.0
  %722 = vmatprep.subr.mxu0 0.0
  %723 = vmatpush1.msra.mxu0 0.0
  %724 = vmatprep.subr.mxu0 0.0
  %725 = vmatpush1.msra.mxu0 0.0
  %726 = vmatprep.subr.mxu0 0.0
  %727 = vmatpush1.msra.mxu0 0.0
  %728 = vmatprep.subr.mxu0 0.0
  %729 = vmatpush1.msra.mxu0 0.0
  %730 = vmatprep.subr.mxu0 0.0
  %731 = vmatpush1.msra.mxu0 0.0
  %732 = vmatprep.subr.mxu0 0.0
  %733 = vmatpush1.msra.mxu0 0.0
  %734 = vmatprep.subr.mxu0 0.0
  %735 = vmatpush1.msra.mxu0 0.0
  %736 = vmatprep.subr.mxu0 0.0
  %737 = vmatpush1.msra.mxu0 0.0
  %738 = vmatprep.subr.mxu0 0.0
  %739 = vmatpush1.msra.mxu0 0.0
  %740 = vmatprep.subr.mxu0 0.0
  %741 = vmatpush1.msra.mxu0 0.0
  %742 = vmatprep.subr.mxu0 0.0
  %743 = vmatpush1.msra.mxu0 0.0
  %744 = vmatprep.subr.mxu0 0.0
  %745 = vmatpush1.msra.mxu0 0.0
  %746 = vmatprep.subr.mxu0 0.0
  %747 = vmatpush1.msra.mxu0 0.0
  %748 = vmatprep.subr.mxu0 0.0
  %749 = vmatpush1.msra.mxu0 0.0
  %750 = vmatprep.subr.mxu0 0.0
  %751 = vmatpush1.msra.mxu0 0.0
  %752 = vmatprep.subr.mxu0 0.0
  %753 = vmatpush1.msra.mxu0 0.0
  %754 = vmatprep.subr.mxu0 0.0
  %755 = vmatpush1.msra.mxu0 0.0
  %756 = vmatprep.subr.mxu0 0.0
  %757 = vmatpush1.msra.mxu0 0.0
  %758 = vmatprep.subr.mxu0 0.0
  %759 = vmatpush1.msra.mxu0 0.0
  %760 = vmatprep.subr.mxu0 0.0
  %761 = vmatpush1.msra.mxu0 0.0
  %762 = vmatprep.subr.mxu0 0.0
  %763 = vmatpush1.msra.mxu0 0.0
  %764 = vmatprep.mubr.f32.mxu0 0.0
  %765 = vmatmul.mubr.f32.gmra.mrb[0].mxu0 %v695
  %v766 = vpop.f32.mrb[0].mxu0
  %v767 = vadd.f32 0.0, %v766
  %v768 = vpop.f32.mrb[0].mxu0
  %769 = vmatprep.mubr.f32.mxu0 0.0
  %770 = vmatmul.mubr.f32.gmra.mrb[0].mxu0 %v698
  %v771 = vpop.f32.mrb[0].mxu0
  %v772 = vadd.f32 0.0, %v771
  %v773 = vpop.f32.mrb[0].mxu0
  %774 = vdwg.mxu0
  %v776 = vsel %vm293, %v482, 0
  %v779 = vsel %vm293, %v487, 0
  %781 = vmatprep.subr.mxu0 0.0
  %782 = vmatpush1.msra.mxu0 %v283
  %783 = vmatprep.subr.mxu0 0.0
  %784 = vmatpush1.msra.mxu0 %v284
  %785 = vmatprep.subr.mxu0 0.0
  %786 = vmatpush1.msra.mxu0 0.0
  %787 = vmatprep.subr.mxu0 0.0
  %788 = vmatpush1.msra.mxu0 0.0
  %789 = vmatprep.subr.mxu0 0.0
  %790 = vmatpush1.msra.mxu0 0.0
  %791 = vmatprep.subr.mxu0 0.0
  %792 = vmatpush1.msra.mxu0 0.0
  %793 = vmatprep.subr.mxu0 0.0
  %794 = vmatpush1.msra.mxu0 0.0
  %795 = vmatprep.subr.mxu0 0.0
  %796 = vmatpush1.msra.mxu0 0.0
  %797 = vmatprep.subr.mxu0 0.0
  %798 = vmatpush1.msra.mxu0 0.0
  %799 = vmatprep.subr.mxu0 0.0
  %800 = vmatpush1.msra.mxu0 0.0
  %801 = vmatprep.subr.mxu0 0.0
  %802 = vmatpush1.msra.mxu0 0.0
  %803 = vmatprep.subr.mxu0 0.0
  %804 = vmatpush1.msra.mxu0 0.0
  %805 = vmatprep.subr.mxu0 0.0
  %806 = vmatpush1.msra.mxu0 0.0
  %807 = vmatprep.subr.mxu0 0.0
  %808 = vmatpush1.msra.mxu0 0.0
  %809 = vmatprep.subr.mxu0 0.0
  %810 = vmatpush1.msra.mxu0 0.0
  %811 = vmatprep.subr.mxu0 0.0
  %812 = vmatpush1.msra.mxu0 0.0
  %813 = vmatprep.subr.mxu0 0.0
  %814 = vmatpush1.msra.mxu0 0.0
  %815 = vmatprep.subr.mxu0 0.0
  %816 = vmatpush1.msra.mxu0 0.0
  %817 = vmatprep.subr.mxu0 0.0
  %818 = vmatpush1.msra.mxu0 0.0
  %819 = vmatprep.subr.mxu0 0.0
  %820 = vmatpush1.msra.mxu0 0.0
  %821 = vmatprep.subr.mxu0 0.0
  %822 = vmatpush1.msra.mxu0 0.0
  %823 = vmatprep.subr.mxu0 0.0
  %824 = vmatpush1.msra.mxu0 0.0
  %825 = vmatprep.subr.mxu0 0.0
  %826 = vmatpush1.msra.mxu0 0.0
  %827 = vmatprep.subr.mxu0 0.0
  %828 = vmatpush1.msra.mxu0 0.0
  %829 = vmatprep.subr.mxu0 0.0
  %830 = vmatpush1.msra.mxu0 0.0
  %831 = vmatprep.subr.mxu0 0.0
  %832 = vmatpush1.msra.mxu0 0.0
  %833 = vmatprep.subr.mxu0 0.0
  %834 = vmatpush1.msra.mxu0 0.0
  %835 = vmatprep.subr.mxu0 0.0
  %836 = vmatpush1.msra.mxu0 0.0
  %837 = vmatprep.subr.mxu0 0.0
  %838 = vmatpush1.msra.mxu0 0.0
  %839 = vmatprep.subr.mxu0 0.0
  %840 = vmatpush1.msra.mxu0 0.0
  %841 = vmatprep.subr.mxu0 0.0
  %842 = vmatpush1.msra.mxu0 0.0
  %843 = vmatprep.subr.mxu0 0.0
  %844 = vmatpush1.msra.mxu0 0.0
  %845 = vmatprep.mubr.f32.mxu0 0.0
  %846 = vmatmul.mubr.f32.gmra.mrb[0].mxu0 %v776
  %v847 = vpop.f32.mrb[0].mxu0
  %v848 = vadd.f32 %v767, %v847
  %v849 = vpop.f32.mrb[0].mxu0
  %850 = vmatprep.mubr.f32.mxu0 0.0
  %851 = vmatmul.mubr.f32.gmra.mrb[0].mxu0 %v779
  %v852 = vpop.f32.mrb[0].mxu0
  %v853 = vadd.f32 %v772, %v852
  %v854 = vpop.f32.mrb[0].mxu0
  %855 = vdwg.mxu0
  %v856 = vld [vmem:[%s75] sm:$0x1]
  %v858 = vlaneseq
  %v859 = vshrl.u32 %v858, 7
  %v860 = vsub.s32 0, %v859
  %v861 = vrot.slane %v856, %v860
  %v863 = vadd.f32 %v848, %v861
  %v864 = vadd.f32 %v853, %v861
  %v865 = vadd.f32 %v186, %v863
  %v866 = vadd.f32 %v187, %v864
  %v867 = vld [vmem:[%s69] sm:$0x1]
  %v868 = vld [vmem:[%s67] sm:$0x1]
  %v869 = vsel %vm201, %v865, 0.0
  %870 = vadd.xlane.f32.xlu0 %v869
  %v871 = vpop.xlane.xlu0 %870
  %v872 = vsel %vm201, %v866, 0.0
  %873 = vadd.xlane.f32.xlu0 %v872
  %v874 = vpop.xlane.xlu0 %873
  %v875 = vrcp.pop 32.0
  %v876 = vmul.f32 %v871, %v875
  %v877 = vmul.f32 %v874, %v875
  %v878 = vsub.f32 %v865, %v876
  %v879 = vsub.f32 %v866, %v877
  %v880 = vmul.f32 %v878, %v878
  %v881 = vmul.f32 %v879, %v879
  %v882 = vsel %vm201, %v880, 0.0
  %883 = vadd.xlane.f32.xlu0 %v882
  %v884 = vpop.xlane.xlu0 %883
  %v885 = vsel %vm201, %v881, 0.0
  %886 = vadd.xlane.f32.xlu0 %v885
  %v887 = vpop.xlane.xlu0 %886
  %v888 = vmul.f32 %v884, %v875
  %v889 = vmul.f32 %v887, %v875
  %v890 = vadd.f32 %v888, 1e-05
  %v891 = vadd.f32 %v889, 1e-05
  %v892 = vrsqrt.pop %v890
  %v893 = vrsqrt.pop %v891
  %v894 = vmul.f32 %v878, %v892
  %v895 = vmul.f32 %v879, %v893
  %v897 = vlaneseq
  %v898 = vshrl.u32 %v897, 7
  %v899 = vsub.s32 0, %v898
  %v900 = vrot.slane %v867, %v899
  %v902 = vmul.f32 %v894, %v900
  %v903 = vmul.f32 %v895, %v900
  %v905 = vlaneseq
  %v906 = vshrl.u32 %v905, 7
  %v907 = vsub.s32 0, %v906
  %v908 = vrot.slane %v868, %v907
  %v910 = vadd.f32 %v902, %v908
  %v911 = vadd.f32 %v903, %v908
  %v912 = vld [vmem:[%s63] sm:$0xff]
  %v913 = vld [vmem:[%s63 + $0x8] sm:$0xff]
  %v914 = vld [vmem:[%s63 + $0x10] sm:$0xff]
  %v915 = vld [vmem:[%s63 + $0x18] sm:$0xff]
  %v916 = vld [vmem:[%s59] sm:$0x1]
  %v918 = vlaneseq
  %v919 = vshrl.u32 %v918, 7
  %v920 = vsub.s32 0, %v919
  %v921 = vrot.slane %v916, %v920
  %v924 = vsel %vm201, %v910, 0
  %v927 = vsel %vm201, %v911, 0
  %929 = vmatprep.subr.mxu0 0.0
  %930 = vmatpush1.msra.mxu0 %v912
  %931 = vmatprep.subr.mxu0 0.0
  %932 = vmatpush1.msra.mxu0 %v913
  %933 = vmatprep.subr.mxu0 0.0
  %934 = vmatpush1.msra.mxu0 %v914
  %935 = vmatprep.subr.mxu0 0.0
  %936 = vmatpush1.msra.mxu0 %v915
  %937 = vmatprep.subr.mxu0 0.0
  %938 = vmatpush1.msra.mxu0 0.0
  %939 = vmatprep.subr.mxu0 0.0
  %940 = vmatpush1.msra.mxu0 0.0
  %941 = vmatprep.subr.mxu0 0.0
  %942 = vmatpush1.msra.mxu0 0.0
  %943 = vmatprep.subr.mxu0 0.0
  %944 = vmatpush1.msra.mxu0 0.0
  %945 = vmatprep.subr.mxu0 0.0
  %946 = vmatpush1.msra.mxu0 0.0
  %947 = vmatprep.subr.mxu0 0.0
  %948 = vmatpush1.msra.mxu0 0.0
  %949 = vmatprep.subr.mxu0 0.0
  %950 = vmatpush1.msra.mxu0 0.0
  %951 = vmatprep.subr.mxu0 0.0
  %952 = vmatpush1.msra.mxu0 0.0
  %953 = vmatprep.subr.mxu0 0.0
  %954 = vmatpush1.msra.mxu0 0.0
  %955 = vmatprep.subr.mxu0 0.0
  %956 = vmatpush1.msra.mxu0 0.0
  %957 = vmatprep.subr.mxu0 0.0
  %958 = vmatpush1.msra.mxu0 0.0
  %959 = vmatprep.subr.mxu0 0.0
  %960 = vmatpush1.msra.mxu0 0.0
  %961 = vmatprep.subr.mxu0 0.0
  %962 = vmatpush1.msra.mxu0 0.0
  %963 = vmatprep.subr.mxu0 0.0
  %964 = vmatpush1.msra.mxu0 0.0
  %965 = vmatprep.subr.mxu0 0.0
  %966 = vmatpush1.msra.mxu0 0.0
  %967 = vmatprep.subr.mxu0 0.0
  %968 = vmatpush1.msra.mxu0 0.0
  %969 = vmatprep.subr.mxu0 0.0
  %970 = vmatpush1.msra.mxu0 0.0
  %971 = vmatprep.subr.mxu0 0.0
  %972 = vmatpush1.msra.mxu0 0.0
  %973 = vmatprep.subr.mxu0 0.0
  %974 = vmatpush1.msra.mxu0 0.0
  %975 = vmatprep.subr.mxu0 0.0
  %976 = vmatpush1.msra.mxu0 0.0
  %977 = vmatprep.subr.mxu0 0.0
  %978 = vmatpush1.msra.mxu0 0.0
  %979 = vmatprep.subr.mxu0 0.0
  %980 = vmatpush1.msra.mxu0 0.0
  %981 = vmatprep.subr.mxu0 0.0
  %982 = vmatpush1.msra.mxu0 0.0
  %983 = vmatprep.subr.mxu0 0.0
  %984 = vmatpush1.msra.mxu0 0.0
  %985 = vmatprep.subr.mxu0 0.0
  %986 = vmatpush1.msra.mxu0 0.0
  %987 = vmatprep.subr.mxu0 0.0
  %988 = vmatpush1.msra.mxu0 0.0
  %989 = vmatprep.subr.mxu0 0.0
  %990 = vmatpush1.msra.mxu0 0.0
  %991 = vmatprep.subr.mxu0 0.0
  %992 = vmatpush1.msra.mxu0 0.0
  %993 = vmatprep.mubr.f32.mxu0 0.0
  %994 = vmatmul.mubr.f32.gmra.mrb[0].mxu0 %v924
  %v995 = vpop.f32.mrb[0].mxu0
  %v996 = vadd.f32 %v921, %v995
  %v997 = vpop.f32.mrb[0].mxu0
  %998 = vmatprep.mubr.f32.mxu0 0.0
  %999 = vmatmul.mubr.f32.gmra.mrb[0].mxu0 %v927
  %v1000 = vpop.f32.mrb[0].mxu0
  %v1001 = vadd.f32 %v921, %v1000
  %v1002 = vpop.f32.mrb[0].mxu0
  %1003 = vdwg.mxu0
  %v1004 = vmax.f32 %v996, 0.0
  %v1005 = vmax.f32 %v1001, 0.0
  %v1006 = vld [vmem:[%s65] sm:$0xff]
  %v1007 = vld [vmem:[%s65 + $0x8] sm:$0xff]
  %v1008 = vld [vmem:[%s65 + $0x10] sm:$0xff]
  %v1009 = vld [vmem:[%s65 + $0x18] sm:$0xff]
  %v1010 = vld [vmem:[%s65 + $0x20] sm:$0xff]
  %v1011 = vld [vmem:[%s65 + $0x28] sm:$0xff]
  %v1012 = vld [vmem:[%s65 + $0x30] sm:$0xff]
  %v1013 = vld [vmem:[%s65 + $0x38] sm:$0xff]
  %v1014 = vld [vmem:[%s61] sm:$0x1]
  %v1016 = vlaneseq
  %v1017 = vshrl.u32 %v1016, 7
  %v1018 = vsub.s32 0, %v1017
  %v1019 = vrot.slane %v1014, %v1018
  %vm1021 = vcmask 523264
  %v1023 = vsel %vm1021, %v1004, 0
  %v1026 = vsel %vm1021, %v1005, 0
  %1028 = vmatprep.subr.mxu0 0.0
  %1029 = vmatpush1.msra.mxu0 %v1006
  %1030 = vmatprep.subr.mxu0 0.0
  %1031 = vmatpush1.msra.mxu0 %v1007
  %1032 = vmatprep.subr.mxu0 0.0
  %1033 = vmatpush1.msra.mxu0 %v1008
  %1034 = vmatprep.subr.mxu0 0.0
  %1035 = vmatpush1.msra.mxu0 %v1009
  %1036 = vmatprep.subr.mxu0 0.0
  %1037 = vmatpush1.msra.mxu0 %v1010
  %1038 = vmatprep.subr.mxu0 0.0
  %1039 = vmatpush1.msra.mxu0 %v1011
  %1040 = vmatprep.subr.mxu0 0.0
  %1041 = vmatpush1.msra.mxu0 %v1012
  %1042 = vmatprep.subr.mxu0 0.0
  %1043 = vmatpush1.msra.mxu0 %v1013
  %1044 = vmatprep.subr.mxu0 0.0
  %1045 = vmatpush1.msra.mxu0 0.0
  %1046 = vmatprep.subr.mxu0 0.0
  %1047 = vmatpush1.msra.mxu0 0.0
  %1048 = vmatprep.subr.mxu0 0.0
  %1049 = vmatpush1.msra.mxu0 0.0
  %1050 = vmatprep.subr.mxu0 0.0
  %1051 = vmatpush1.msra.mxu0 0.0
  %1052 = vmatprep.subr.mxu0 0.0
  %1053 = vmatpush1.msra.mxu0 0.0
  %1054 = vmatprep.subr.mxu0 0.0
  %1055 = vmatpush1.msra.mxu0 0.0
  %1056 = vmatprep.subr.mxu0 0.0
  %1057 = vmatpush1.msra.mxu0 0.0
  %1058 = vmatprep.subr.mxu0 0.0
  %1059 = vmatpush1.msra.mxu0 0.0
  %1060 = vmatprep.subr.mxu0 0.0
  %1061 = vmatpush1.msra.mxu0 0.0
  %1062 = vmatprep.subr.mxu0 0.0
  %1063 = vmatpush1.msra.mxu0 0.0
  %1064 = vmatprep.subr.mxu0 0.0
  %1065 = vmatpush1.msra.mxu0 0.0
  %1066 = vmatprep.subr.mxu0 0.0
  %1067 = vmatpush1.msra.mxu0 0.0
  %1068 = vmatprep.subr.mxu0 0.0
  %1069 = vmatpush1.msra.mxu0 0.0
  %1070 = vmatprep.subr.mxu0 0.0
  %1071 = vmatpush1.msra.mxu0 0.0
  %1072 = vmatprep.subr.mxu0 0.0
  %1073 = vmatpush1.msra.mxu0 0.0
  %1074 = vmatprep.subr.mxu0 0.0
  %1075 = vmatpush1.msra.mxu0 0.0
  %1076 = vmatprep.subr.mxu0 0.0
  %1077 = vmatpush1.msra.mxu0 0.0
  %1078 = vmatprep.subr.mxu0 0.0
  %1079 = vmatpush1.msra.mxu0 0.0
  %1080 = vmatprep.subr.mxu0 0.0
  %1081 = vmatpush1.msra.mxu0 0.0
  %1082 = vmatprep.subr.mxu0 0.0
  %1083 = vmatpush1.msra.mxu0 0.0
  %1084 = vmatprep.subr.mxu0 0.0
  %1085 = vmatpush1.msra.mxu0 0.0
  %1086 = vmatprep.subr.mxu0 0.0
  %1087 = vmatpush1.msra.mxu0 0.0
  %1088 = vmatprep.subr.mxu0 0.0
  %1089 = vmatpush1.msra.mxu0 0.0
  %1090 = vmatprep.subr.mxu0 0.0
  %1091 = vmatpush1.msra.mxu0 0.0
  %1092 = vmatprep.mubr.f32.mxu0 0.0
  %1093 = vmatmul.mubr.f32.gmra.mrb[0].mxu0 %v1023
  %v1094 = vpop.f32.mrb[0].mxu0
  %v1095 = vadd.f32 %v1019, %v1094
  %v1096 = vpop.f32.mrb[0].mxu0
  %1097 = vmatprep.mubr.f32.mxu0 0.0
  %1098 = vmatmul.mubr.f32.gmra.mrb[0].mxu0 %v1026
  %v1099 = vpop.f32.mrb[0].mxu0
  %v1100 = vadd.f32 %v1019, %v1099
  %v1101 = vpop.f32.mrb[0].mxu0
  %1102 = vdwg.mxu0
  %v1103 = vadd.f32 %v910, %v1095
  %v1104 = vadd.f32 %v911, %v1100
  %v1105 = vld [vmem:[%s73] sm:$0x1]
  %v1106 = vld [vmem:[%s71] sm:$0x1]
  %v1107 = vsel %vm201, %v1103, 0.0
  %1108 = vadd.xlane.f32.xlu0 %v1107
  %v1109 = vpop.xlane.xlu0 %1108
  %v1110 = vsel %vm201, %v1104, 0.0
  %1111 = vadd.xlane.f32.xlu0 %v1110
  %v1112 = vpop.xlane.xlu0 %1111
  %v1113 = vmul.f32 %v1109, %v875
  %v1114 = vmul.f32 %v1112, %v875
  %v1115 = vsub.f32 %v1103, %v1113
  %v1116 = vsub.f32 %v1104, %v1114
  %v1117 = vmul.f32 %v1115, %v1115
  %v1118 = vmul.f32 %v1116, %v1116
  %v1119 = vsel %vm201, %v1117, 0.0
  %1120 = vadd.xlane.f32.xlu0 %v1119
  %v1121 = vpop.xlane.xlu0 %1120
  %v1122 = vsel %vm201, %v1118, 0.0
  %1123 = vadd.xlane.f32.xlu0 %v1122
  %v1124 = vpop.xlane.xlu0 %1123
  %v1125 = vmul.f32 %v1121, %v875
  %v1126 = vmul.f32 %v1124, %v875
  %v1127 = vadd.f32 %v1125, 1e-05
  %v1128 = vadd.f32 %v1126, 1e-05
  %v1129 = vrsqrt.pop %v1127
  %v1130 = vrsqrt.pop %v1128
  %v1131 = vmul.f32 %v1115, %v1129
  %v1132 = vmul.f32 %v1116, %v1130
  %v1134 = vlaneseq
  %v1135 = vshrl.u32 %v1134, 7
  %v1136 = vsub.s32 0, %v1135
  %v1137 = vrot.slane %v1105, %v1136
  %v1139 = vmul.f32 %v1131, %v1137
  %v1140 = vmul.f32 %v1132, %v1137
  %v1142 = vlaneseq
  %v1143 = vshrl.u32 %v1142, 7
  %v1144 = vsub.s32 0, %v1143
  %v1145 = vrot.slane %v1106, %v1144
  %v1147 = vadd.f32 %v1139, %v1145
  %v1148 = vadd.f32 %v1140, %v1145
  %v1149 = vld [vmem:[%s85] sm:$0x1]
  %v1150 = vld [vmem:[%s83] sm:$0x1]
  %v1151 = vsel %vm201, %v1147, 0.0
  %1152 = vadd.xlane.f32.xlu0 %v1151
  %v1153 = vpop.xlane.xlu0 %1152
  %v1154 = vsel %vm201, %v1148, 0.0
  %1155 = vadd.xlane.f32.xlu0 %v1154
  %v1156 = vpop.xlane.xlu0 %1155
  %v1157 = vmul.f32 %v1153, %v875
  %v1158 = vmul.f32 %v1156, %v875
  %v1159 = vsub.f32 %v1147, %v1157
  %v1160 = vsub.f32 %v1148, %v1158
  %v1161 = vmul.f32 %v1159, %v1159
  %v1162 = vmul.f32 %v1160, %v1160
  %v1163 = vsel %vm201, %v1161, 0.0
  %1164 = vadd.xlane.f32.xlu0 %v1163
  %v1165 = vpop.xlane.xlu0 %1164
  %v1166 = vsel %vm201, %v1162, 0.0
  %1167 = vadd.xlane.f32.xlu0 %v1166
  %v1168 = vpop.xlane.xlu0 %1167
  %v1169 = vmul.f32 %v1165, %v875
  %v1170 = vmul.f32 %v1168, %v875
  %v1171 = vadd.f32 %v1169, 1e-05
  %v1172 = vadd.f32 %v1170, 1e-05
  %v1173 = vrsqrt.pop %v1171
  %v1174 = vrsqrt.pop %v1172
  %v1175 = vmul.f32 %v1159, %v1173
  %v1176 = vmul.f32 %v1160, %v1174
  %v1178 = vlaneseq
  %v1179 = vshrl.u32 %v1178, 7
  %v1180 = vsub.s32 0, %v1179
  %v1181 = vrot.slane %v1149, %v1180
  %v1183 = vmul.f32 %v1175, %v1181
  %v1184 = vmul.f32 %v1176, %v1181
  %v1186 = vlaneseq
  %v1187 = vshrl.u32 %v1186, 7
  %v1188 = vsub.s32 0, %v1187
  %v1189 = vrot.slane %v1150, %v1188
  %v1191 = vadd.f32 %v1183, %v1189
  %v1192 = vadd.f32 %v1184, %v1189
  %v1193 = vld [vmem:[%s3] sm:$0xff]
  %v1194 = vld [vmem:[%s3 + $0x8] sm:$0xff]
  %v1195 = vld [vmem:[%s3 + $0x10] sm:$0xff]
  %v1196 = vld [vmem:[%s3 + $0x18] sm:$0xff]
  %v1197 = vld [vmem:[%s5] sm:$0xff]
  %v1198 = vld [vmem:[%s5 + $0x8] sm:$0xff]
  %v1199 = vld [vmem:[%s5 + $0x10] sm:$0xff]
  %v1200 = vld [vmem:[%s5 + $0x18] sm:$0xff]
  %v1201 = vld [vmem:[%s15] sm:$0xff]
  %v1202 = vld [vmem:[%s15 + $0x8] sm:$0xff]
  %v1203 = vld [vmem:[%s9] sm:$0xff]
  %v1204 = vld [vmem:[%s9 + $0x8] sm:$0xff]
  %v1205 = vld [vmem:[%s9 + $0x10] sm:$0xff]
  %v1206 = vld [vmem:[%s9 + $0x18] sm:$0xff]
  %v1207 = vld [vmem:[%s13] sm:$0xff]
  %v1208 = vld [vmem:[%s13 + $0x8] sm:$0xff]
  %v1209 = vld [vmem:[%s13 + $0x10] sm:$0xff]
  %v1210 = vld [vmem:[%s13 + $0x18] sm:$0xff]
  %v1211 = vld [vmem:[%s1] sm:$0xff]
  %v1212 = vld [vmem:[%s1 + $0x8] sm:$0xff]
  %v1213 = vld [vmem:[%s1 + $0x10] sm:$0xff]
  %v1214 = vld [vmem:[%s1 + $0x18] sm:$0xff]
  %v1215 = vld [vmem:[%s89] sm:$0xff]
  %v1216 = vld [vmem:[%s89 + $0x8] sm:$0xff]
  %v1217 = vld [vmem:[%s89 + $0x10] sm:$0xff]
  %v1218 = vld [vmem:[%s89 + $0x18] sm:$0xff]
  %v1219 = vld [vmem:[%s87] sm:$0x1]
  %v1220 = vld [vmem:[%s57] sm:$0x1]
  %v1221 = vld [vmem:[%s55] sm:$0x1]
  %v1222 = vlaneseq
  %v1223 = vand.u32 %v1222, 127
  %v1224 = vlaneseq
  %v1225 = vshrl.u32 %v1224, 7
  %v1226 = vcvt.s32.f32 %v1223
  %v1227 = vld [vmem:[%s17] sm:$0xff]
  %v1228 = vld [vmem:[%s17 + $0x8] sm:$0xff]
  %v1229 = vld [vmem:[%s17 + $0x10] sm:$0xff]
  %v1230 = vld [vmem:[%s17 + $0x18] sm:$0xff]
  loop: start=0, step=1, limit=15
  $region182: #{seq2seq_trainer_forward.1} parent=0 // loop_pre_header
    _
  $region183: #{seq2seq_trainer_forward.1} parent=0 // loop_header
    %s1232 = sphi 0, %s1236
    %p1233 = scmp.ge.s32.totalorder %s1232, 15
    %v1237 = vphi %v1227, %v4027
    %v1238 = vphi %v1228, %v4028
    %v1239 = vphi %v1229, %v4029
    %v1240 = vphi %v1230, %v4030
  $region184: #{seq2seq_trainer_forward.1} parent=0 // loop_header_branch
    %1235 = sbr.rel (%p1233) target = $region188
  $region185: #{seq2seq_trainer_forward.1} parent=0 // loop_body
    %1241 = vset.pattern.permute.xlu0 0
    %1242 = vperm.xlu0 %1241, %v1237
    %v1243 = vpop.permute.xlu0 %1242
    %1244 = vset.pattern.permute.xlu0 0
    %1245 = vperm.xlu0 %1244, %v1238
    %v1246 = vpop.permute.xlu0 %1245
    %1247 = vset.pattern.permute.xlu0 0
    %1248 = vperm.xlu0 %1247, %v1239
    %v1249 = vpop.permute.xlu0 %1248
    %1250 = vset.pattern.permute.xlu0 0
    %1251 = vperm.xlu0 %1250, %v1240
    %v1252 = vpop.permute.xlu0 %1251
    %vm1253 = vcmp.eq.s32.totalorder %v1243, %v1223
    %vm1254 = vcmp.eq.s32.totalorder %v1246, %v1223
    %vm1255 = vcmp.eq.s32.totalorder %v1249, %v1223
    %vm1256 = vcmp.eq.s32.totalorder %v1252, %v1223
    %v1257 = vsel %vm1253, 1, 0
    %v1258 = vsel %vm1254, 1, 0
    %v1259 = vsel %vm1255, 1, 0
    %v1260 = vsel %vm1256, 1, 0
    %v1261 = vcvt.s32.f32 %v1257
    %v1262 = vcvt.s32.f32 %v1258
    %v1263 = vcvt.s32.f32 %v1259
    %v1264 = vcvt.s32.f32 %v1260
    %v1266 = vsel %vm293, %v1261, 0
    %v1269 = vsel %vm293, %v1262, 0
    %v1272 = vsel %vm293, %v1263, 0
    %v1275 = vsel %vm293, %v1264, 0
    %1277 = vmatprep.subr.mxu0 0.0
    %1278 = vmatpush1.msra.mxu0 %v1201
    %1279 = vmatprep.subr.mxu0 0.0
    %1280 = vmatpush1.msra.mxu0 %v1202
    %1281 = vmatprep.subr.mxu0 0.0
    %1282 = vmatpush1.msra.mxu0 0.0
    %1283 = vmatprep.subr.mxu0 0.0
    %1284 = vmatpush1.msra.mxu0 0.0
    %1285 = vmatprep.subr.mxu0 0.0
    %1286 = vmatpush1.msra.mxu0 0.0
    %1287 = vmatprep.subr.mxu0 0.0
    %1288 = vmatpush1.msra.mxu0 0.0
    %1289 = vmatprep.subr.mxu0 0.0
    %1290 = vmatpush1.msra.mxu0 0.0
    %1291 = vmatprep.subr.mxu0 0.0
    %1292 = vmatpush1.msra.mxu0 0.0
    %1293 = vmatprep.subr.mxu0 0.0
    %1294 = vmatpush1.msra.mxu0 0.0
    %1295 = vmatprep.subr.mxu0 0.0
    %1296 = vmatpush1.msra.mxu0 0.0
    %1297 = vmatprep.subr.mxu0 0.0
    %1298 = vmatpush1.msra.mxu0 0.0
    %1299 = vmatprep.subr.mxu0 0.0
    %1300 = vmatpush1.msra.mxu0 0.0
    %1301 = vmatprep.subr.mxu0 0.0
    %1302 = vmatpush1.msra.mxu0 0.0
    %1303 = vmatprep.subr.mxu0 0.0
    %1304 = vmatpush1.msra.mxu0 0.0
    %1305 = vmatprep.subr.mxu0 0.0
    %1306 = vmatpush1.msra.mxu0 0.0
    %1307 = vmatprep.subr.mxu0 0.0
    %1308 = vmatpush1.msra.mxu0 0.0
    %1309 = vmatprep.subr.mxu0 0.0
    %1310 = vmatpush1.msra.mxu0 0.0
    %1311 = vmatprep.subr.mxu0 0.0
    %1312 = vmatpush1.msra.mxu0 0.0
    %1313 = vmatprep.subr.mxu0 0.0
    %1314 = vmatpush1.msra.mxu0 0.0
    %1315 = vmatprep.subr.mxu0 0.0
    %1316 = vmatpush1.msra.mxu0 0.0
    %1317 = vmatprep.subr.mxu0 0.0
    %1318 = vmatpush1.msra.mxu0 0.0
    %1319 = vmatprep.subr.mxu0 0.0
    %1320 = vmatpush1.msra.mxu0 0.0
    %1321 = vmatprep.subr.mxu0 0.0
    %1322 = vmatpush1.msra.mxu0 0.0
    %1323 = vmatprep.subr.mxu0 0.0
    %1324 = vmatpush1.msra.mxu0 0.0
    %1325 = vmatprep.subr.mxu0 0.0
    %1326 = vmatpush1.msra.mxu0 0.0
    %1327 = vmatprep.subr.mxu0 0.0
    %1328 = vmatpush1.msra.mxu0 0.0
    %1329 = vmatprep.subr.mxu0 0.0
    %1330 = vmatpush1.msra.mxu0 0.0
    %1331 = vmatprep.subr.mxu0 0.0
    %1332 = vmatpush1.msra.mxu0 0.0
    %1333 = vmatprep.subr.mxu0 0.0
    %1334 = vmatpush1.msra.mxu0 0.0
    %1335 = vmatprep.subr.mxu0 0.0
    %1336 = vmatpush1.msra.mxu0 0.0
    %1337 = vmatprep.subr.mxu0 0.0
    %1338 = vmatpush1.msra.mxu0 0.0
    %1339 = vmatprep.subr.mxu0 0.0
    %1340 = vmatpush1.msra.mxu0 0.0
    %1341 = vmatprep.mubr.f32.mxu0 0.0
    %1342 = vmatmul.mubr.f32.gmra.mrb[0].mxu0 %v1266
    %v1343 = vpop.f32.mrb[0].mxu0
    %v1344 = vadd.f32 %v1203, %v1343
    %v1345 = vpop.f32.mrb[0].mxu0
    %1346 = vmatprep.mubr.f32.mxu0 0.0
    %1347 = vmatmul.mubr.f32.gmra.mrb[0].mxu0 %v1269
    %v1348 = vpop.f32.mrb[0].mxu0
    %v1349 = vadd.f32 %v1204, %v1348
    %v1350 = vpop.f32.mrb[0].mxu0
    %1351 = vmatprep.mubr.f32.mxu0 0.0
    %1352 = vmatmul.mubr.f32.gmra.mrb[0].mxu0 %v1272
    %v1353 = vpop.f32.mrb[0].mxu0
    %v1354 = vadd.f32 %v1205, %v1353
    %v1355 = vpop.f32.mrb[0].mxu0
    %1356 = vmatprep.mubr.f32.mxu0 0.0
    %1357 = vmatmul.mubr.f32.gmra.mrb[0].mxu0 %v1275
    %v1358 = vpop.f32.mrb[0].mxu0
    %v1359 = vadd.f32 %v1206, %v1358
    %v1360 = vpop.f32.mrb[0].mxu0
    %1361 = vdwg.mxu0
    %vm1362 = vcmp.eq.s32.totalorder %v1237, 1
    %vm1363 = vcmp.eq.s32.totalorder %v1238, 1
    %vm1364 = vcmp.eq.s32.totalorder %v1239, 1
    %vm1365 = vcmp.eq.s32.totalorder %v1240, 1
    %v1366 = vsel %vm1362, -1e+09, 0.0
    %v1367 = vsel %vm1363, -1e+09, 0.0
    %v1368 = vsel %vm1364, -1e+09, 0.0
    %v1369 = vsel %vm1365, -1e+09, 0.0
    %1370 = vxpose.xlu0.b32.start [1/16] %v1366, 128
    %1371 = vxpose.xlu0.b32.cont [2/16] %v1367, 128
    %1372 = vxpose.xlu0.b32.cont [3/16] %v1368, 128
    %1373 = vxpose.xlu0.b32.cont [4/16] %v1369, 128
    %1374 = vxpose.xlu0.b32.cont [5/16] 0.0, 128
    %1375 = vxpose.xlu0.b32.cont [6/16] 0.0, 128
    %1376 = vxpose.xlu0.b32.cont [7/16] 0.0, 128
    %1377 = vxpose.xlu0.b32.cont [8/16] 0.0, 128
    %1378 = vxpose.xlu0.b32.cont [9/16] 0.0, 128
    %1379 = vxpose.xlu0.b32.cont [10/16] 0.0, 128
    %1380 = vxpose.xlu0.b32.cont [11/16] 0.0, 128
    %1381 = vxpose.xlu0.b32.cont [12/16] 0.0, 128
    %1382 = vxpose.xlu0.b32.cont [13/16] 0.0, 128
    %1383 = vxpose.xlu0.b32.cont [14/16] 0.0, 128
    %1384 = vxpose.xlu0.b32.cont [15/16] 0.0, 128
    %1385 = vxpose.xlu0.b32.end [16/16] 0.0, 128
    %v1386 = vpop.trf.xlu0
    %v1387 = vpop.trf.xlu0
    %v1388 = vpop.trf.xlu0
    %v1389 = vpop.trf.xlu0
    %v1390 = vpop.trf.xlu0
    %v1391 = vpop.trf.xlu0
    %v1392 = vpop.trf.xlu0
    %v1393 = vpop.trf.xlu0
    %v1394 = vpop.trf.xlu0
    %v1395 = vpop.trf.xlu0
    %v1396 = vpop.trf.xlu0
    %v1397 = vpop.trf.xlu0
    %v1398 = vpop.trf.xlu0
    %v1399 = vpop.trf.xlu0
    %v1400 = vpop.trf.xlu0
    %v1401 = vpop.trf.xlu0
    %v1402 = vlaneseq
    %v1403 = vshrl.u32 %v1402, 7
    %v1404 = vsub.s32 0, %v1403
    %v1405 = vrot.slane %v1386, %v1404
    %v1406 = vadd.f32 %v1197, %v1405
    %v1407 = vadd.f32 %v1198, %v1405
    %v1408 = vadd.f32 %v1199, %v1405
    %v1409 = vadd.f32 %v1200, %v1405
    %v1410 = vld [vmem:[%s53] sm:$0xff]
    %v1411 = vld [vmem:[%s53 + $0x8] sm:$0xff]
    %v1412 = vld [vmem:[%s53 + $0x10] sm:$0xff]
    %v1413 = vld [vmem:[%s53 + $0x18] sm:$0xff]
    %v1414 = vld [vmem:[%s49] sm:$0x1]
    %v1416 = vlaneseq
    %v1417 = vshrl.u32 %v1416, 7
    %v1418 = vsub.s32 0, %v1417
    %v1419 = vrot.slane %v1414, %v1418
    %v1422 = vsel %vm201, %v1344, 0
    %v1425 = vsel %vm201, %v1349, 0
    %v1428 = vsel %vm201, %v1354, 0
    %v1431 = vsel %vm201, %v1359, 0
    %1433 = vmatprep.subr.mxu0 0.0
    %1434 = vmatpush1.msra.mxu0 %v1410
    %1435 = vmatprep.subr.mxu0 0.0
    %1436 = vmatpush1.msra.mxu0 %v1411
    %1437 = vmatprep.subr.mxu0 0.0
    %1438 = vmatpush1.msra.mxu0 %v1412
    %1439 = vmatprep.subr.mxu0 0.0
    %1440 = vmatpush1.msra.mxu0 %v1413
    %1441 = vmatprep.subr.mxu0 0.0
    %1442 = vmatpush1.msra.mxu0 0.0
    %1443 = vmatprep.subr.mxu0 0.0
    %1444 = vmatpush1.msra.mxu0 0.0
    %1445 = vmatprep.subr.mxu0 0.0
    %1446 = vmatpush1.msra.mxu0 0.0
    %1447 = vmatprep.subr.mxu0 0.0
    %1448 = vmatpush1.msra.mxu0 0.0
    %1449 = vmatprep.subr.mxu0 0.0
    %1450 = vmatpush1.msra.mxu0 0.0
    %1451 = vmatprep.subr.mxu0 0.0
    %1452 = vmatpush1.msra.mxu0 0.0
    %1453 = vmatprep.subr.mxu0 0.0
    %1454 = vmatpush1.msra.mxu0 0.0
    %1455 = vmatprep.subr.mxu0 0.0
    %1456 = vmatpush1.msra.mxu0 0.0
    %1457 = vmatprep.subr.mxu0 0.0
    %1458 = vmatpush1.msra.mxu0 0.0
    %1459 = vmatprep.subr.mxu0 0.0
    %1460 = vmatpush1.msra.mxu0 0.0
    %1461 = vmatprep.subr.mxu0 0.0
    %1462 = vmatpush1.msra.mxu0 0.0
    %1463 = vmatprep.subr.mxu0 0.0
    %1464 = vmatpush1.msra.mxu0 0.0
    %1465 = vmatprep.subr.mxu0 0.0
    %1466 = vmatpush1.msra.mxu0 0.0
    %1467 = vmatprep.subr.mxu0 0.0
    %1468 = vmatpush1.msra.mxu0 0.0
    %1469 = vmatprep.subr.mxu0 0.0
    %1470 = vmatpush1.msra.mxu0 0.0
    %1471 = vmatprep.subr.mxu0 0.0
    %1472 = vmatpush1.msra.mxu0 0.0
    %1473 = vmatprep.subr.mxu0 0.0
    %1474 = vmatpush1.msra.mxu0 0.0
    %1475 = vmatprep.subr.mxu0 0.0
    %1476 = vmatpush1.msra.mxu0 0.0
    %1477 = vmatprep.subr.mxu0 0.0
    %1478 = vmatpush1.msra.mxu0 0.0
    %1479 = vmatprep.subr.mxu0 0.0
    %1480 = vmatpush1.msra.mxu0 0.0
    %1481 = vmatprep.subr.mxu0 0.0
    %1482 = vmatpush1.msra.mxu0 0.0
    %1483 = vmatprep.subr.mxu0 0.0
    %1484 = vmatpush1.msra.mxu0 0.0
    %1485 = vmatprep.subr.mxu0 0.0
    %1486 = vmatpush1.msra.mxu0 0.0
    %1487 = vmatprep.subr.mxu0 0.0
    %1488 = vmatpush1.msra.mxu0 0.0
    %1489 = vmatprep.subr.mxu0 0.0
    %1490 = vmatpush1.msra.mxu0 0.0
    %1491 = vmatprep.subr.mxu0 0.0
    %1492 = vmatpush1.msra.mxu0 0.0
    %1493 = vmatprep.subr.mxu0 0.0
    %1494 = vmatpush1.msra.mxu0 0.0
    %1495 = vmatprep.subr.mxu0 0.0
    %1496 = vmatpush1.msra.mxu0 0.0
    %1497 = vmatprep.mubr.f32.mxu0 0.0
    %1498 = vmatmul.mubr.f32.gmra.mrb[0].mxu0 %v1422
    %v1499 = vpop.f32.mrb[0].mxu0
    %v1500 = vadd.f32 %v1419, %v1499
    %v1501 = vpop.f32.mrb[0].mxu0
    %1502 = vmatprep.mubr.f32.mxu0 0.0
    %1503 = vmatmul.mubr.f32.gmra.mrb[0].mxu0 %v1425
    %v1504 = vpop.f32.mrb[0].mxu0
    %v1505 = vadd.f32 %v1419, %v1504
    %v1506 = vpop.f32.mrb[0].mxu0
    %1507 = vmatprep.mubr.f32.mxu0 0.0
    %1508 = vmatmul.mubr.f32.gmra.mrb[0].mxu0 %v1428
    %v1509 = vpop.f32.mrb[0].mxu0
    %v1510 = vadd.f32 %v1419, %v1509
    %v1511 = vpop.f32.mrb[0].mxu0
    %1512 = vmatprep.mubr.f32.mxu0 0.0
    %1513 = vmatmul.mubr.f32.gmra.mrb[0].mxu0 %v1431
    %v1514 = vpop.f32.mrb[0].mxu0
    %v1515 = vadd.f32 %v1419, %v1514
    %v1516 = vpop.f32.mrb[0].mxu0
    %1517 = vdwg.mxu0
    %v1518 = vld [vmem:[%s51] sm:$0xff]
    %v1519 = vld [vmem:[%s51 + $0x8] sm:$0xff]
    %v1520 = vld [vmem:[%s51 + $0x10] sm:$0xff]
    %v1521 = vld [vmem:[%s51 + $0x18] sm:$0xff]
    %1526 = vrot.lane.b32.xlu0 %v1500, 96
    %v1527 = vpop.permute.xlu0 %1526
    %1528 = vrot.lane.b32.xlu0 %v1505, 96
    %v1529 = vpop.permute.xlu0 %1528
    %1530 = vrot.lane.b32.xlu0 %v1510, 96
    %v1531 = vpop.permute.xlu0 %1530
    %1532 = vrot.lane.b32.xlu0 %v1515, 96
    %v1533 = vpop.permute.xlu0 %1532
    %v1534 = vsel %vm293, %v1500, 0
    %v1536 = vsel %vm293, %v1505, 0
    %v1538 = vsel %vm293, %v1510, 0
    %v1540 = vsel %vm293, %v1515, 0
    %v1542 = vsel %vm293, %v1527, 0
    %v1544 = vsel %vm293, %v1529, 0
    %v1546 = vsel %vm293, %v1531, 0
    %v1548 = vsel %vm293, %v1533, 0
    %1550 = vmatprep.subr.mxu0 0.0
    %1551 = vmatpush1.xpose.msra.mxu0 %v1542
    %1552 = vmatprep.subr.mxu0 0.0
    %1553 = vmatpush1.xpose.msra.mxu0 %v1544
    %1554 = vmatprep.subr.mxu0 0.0
    %1555 = vmatpush1.xpose.msra.mxu0 %v1546
    %1556 = vmatprep.subr.mxu0 0.0
    %1557 = vmatpush1.xpose.msra.mxu0 %v1548
    %1558 = vmatprep.subr.mxu0 0.0
    %1559 = vmatpush1.xpose.msra.mxu0 0.0
    %1560 = vmatprep.subr.mxu0 0.0
    %1561 = vmatpush1.xpose.msra.mxu0 0.0
    %1562 = vmatprep.subr.mxu0 0.0
    %1563 = vmatpush1.xpose.msra.mxu0 0.0
    %1564 = vmatprep.subr.mxu0 0.0
    %1565 = vmatpush1.xpose.msra.mxu0 0.0
    %1566 = vmatprep.subr.mxu0 0.0
    %1567 = vmatpush1.xpose.msra.mxu0 0.0
    %1568 = vmatprep.subr.mxu0 0.0
    %1569 = vmatpush1.xpose.msra.mxu0 0.0
    %1570 = vmatprep.subr.mxu0 0.0
    %1571 = vmatpush1.xpose.msra.mxu0 0.0
    %1572 = vmatprep.subr.mxu0 0.0
    %1573 = vmatpush1.xpose.msra.mxu0 0.0
    %1574 = vmatprep.subr.mxu0 0.0
    %1575 = vmatpush1.xpose.msra.mxu0 0.0
    %1576 = vmatprep.subr.mxu0 0.0
    %1577 = vmatpush1.xpose.msra.mxu0 0.0
    %1578 = vmatprep.subr.mxu0 0.0
    %1579 = vmatpush1.xpose.msra.mxu0 0.0
    %1580 = vmatprep.subr.mxu0 0.0
    %1581 = vmatpush1.xpose.msra.mxu0 0.0
    %1582 = vmatprep.subr.mxu0 0.0
    %1583 = vmatpush1.xpose.msra.mxu0 0.0
    %1584 = vmatprep.subr.mxu0 0.0
    %1585 = vmatpush1.xpose.msra.mxu0 0.0
    %1586 = vmatprep.subr.mxu0 0.0
    %1587 = vmatpush1.xpose.msra.mxu0 0.0
    %1588 = vmatprep.subr.mxu0 0.0
    %1589 = vmatpush1.xpose.msra.mxu0 0.0
    %1590 = vmatprep.subr.mxu0 0.0
    %1591 = vmatpush1.xpose.msra.mxu0 0.0
    %1592 = vmatprep.subr.mxu0 0.0
    %1593 = vmatpush1.xpose.msra.mxu0 0.0
    %1594 = vmatprep.subr.mxu0 0.0
    %1595 = vmatpush1.xpose.msra.mxu0 0.0
    %1596 = vmatprep.subr.mxu0 0.0
    %1597 = vmatpush1.xpose.msra.mxu0 0.0
    %1598 = vmatprep.subr.mxu0 0.0
    %1599 = vmatpush1.xpose.msra.mxu0 0.0
    %1600 = vmatprep.subr.mxu0 0.0
    %1601 = vmatpush1.xpose.msra.mxu0 0.0
    %1602 = vmatprep.subr.mxu0 0.0
    %1603 = vmatpush1.xpose.msra.mxu0 0.0
    %1604 = vmatprep.subr.mxu0 0.0
    %1605 = vmatpush1.xpose.msra.mxu0 0.0
    %1606 = vmatprep.subr.mxu0 0.0
    %1607 = vmatpush1.xpose.msra.mxu0 0.0
    %1608 = vmatprep.subr.mxu0 0.0
    %1609 = vmatpush1.xpose.msra.mxu0 0.0
    %1610 = vmatprep.subr.mxu0 0.0
    %1611 = vmatpush1.xpose.msra.mxu0 0.0
    %1612 = vmatprep.subr.mxu0 0.0
    %1613 = vmatpush1.xpose.msra.mxu0 0.0
    %1614 = vmatprep.mubr.f32.mxu0 0.0
    %1615 = vmatmul.mubr.f32.gmra.mrb[0].mxu0 %v1534
    %v1616 = vpop.f32.mrb[0].mxu0
    %v1617 = vadd.f32 0.0, %v1616
    %v1618 = vpop.f32.mrb[0].mxu0
    %1619 = vmatprep.mubr.f32.mxu0 0.0
    %1620 = vmatmul.mubr.f32.gmra.mrb[0].mxu0 %v1536
    %v1621 = vpop.f32.mrb[0].mxu0
    %v1622 = vadd.f32 0.0, %v1621
    %v1623 = vpop.f32.mrb[0].mxu0
    %1624 = vmatprep.mubr.f32.mxu0 0.0
    %1625 = vmatmul.mubr.f32.gmra.mrb[0].mxu0 %v1538
    %v1626 = vpop.f32.mrb[0].mxu0
    %v1627 = vadd.f32 0.0, %v1626
    %v1628 = vpop.f32.mrb[0].mxu0
    %1629 = vmatprep.mubr.f32.mxu0 0.0
    %1630 = vmatmul.mubr.f32.gmra.mrb[0].mxu0 %v1540
    %v1631 = vpop.f32.mrb[0].mxu0
    %v1632 = vadd.f32 0.0, %v1631
    %v1633 = vpop.f32.mrb[0].mxu0
    %1634 = vdwg.mxu0
    %v1635 = vmul.f32 %v1617, 0.25
    %v1636 = vmul.f32 %v1622, 0.25
    %v1637 = vmul.f32 %v1627, 0.25
    %v1638 = vmul.f32 %v1632, 0.25
    %v1639 = vadd.f32 %v1635, %v1406
    %v1640 = vadd.f32 %v1636, %v1407
    %v1641 = vadd.f32 %v1637, %v1408
    %v1642 = vadd.f32 %v1638, %v1409
    %v1643 = vsel %vm201, %v1639, -inf
    %1644 = vmax.xlane.f32.xlu0 %v1643
    %v1645 = vpop.xlane.xlu0 %1644
    %v1646 = vsel %vm201, %v1640, -inf
    %1647 = vmax.xlane.f32.xlu0 %v1646
    %v1648 = vpop.xlane.xlu0 %1647
    %v1649 = vsel %vm201, %v1641, -inf
    %1650 = vmax.xlane.f32.xlu0 %v1649
    %v1651 = vpop.xlane.xlu0 %1650
    %v1652 = vsel %vm201, %v1642, -inf
    %1653 = vmax.xlane.f32.xlu0 %v1652
    %v1654 = vpop.xlane.xlu0 %1653
    %v1655 = vsub.f32 %v1639, %v1645
    %v1656 = vsub.f32 %v1640, %v1648
    %v1657 = vsub.f32 %v1641, %v1651
    %v1658 = vsub.f32 %v1642, %v1654
    %v1659 = vmul.f32 %v1655, 1.442695
    %v1660 = vpow.pop %v1659
    %v1661 = vmul.f32 %v1656, 1.442695
    %v1662 = vpow.pop %v1661
    %v1663 = vmul.f32 %v1657, 1.442695
    %v1664 = vpow.pop %v1663
    %v1665 = vmul.f32 %v1658, 1.442695
    %v1666 = vpow.pop %v1665
    %v1667 = vsel %vm201, %v1660, 0.0
    %1668 = vadd.xlane.f32.xlu0 %v1667
    %v1669 = vpop.xlane.xlu0 %1668
    %v1670 = vsel %vm201, %v1662, 0.0
    %1671 = vadd.xlane.f32.xlu0 %v1670
    %v1672 = vpop.xlane.xlu0 %1671
    %v1673 = vsel %vm201, %v1664, 0.0
    %1674 = vadd.xlane.f32.xlu0 %v1673
    %v1675 = vpop.xlane.xlu0 %1674
    %v1676 = vsel %vm201, %v1666, 0.0
    %1677 = vadd.xlane.f32.xlu0 %v1676
    %v1678 = vpop.xlane.xlu0 %1677
    %v1679 = vrcp.pop %v1669
    %v1680 = vmul.f32 %v1660, %v1679
    %v1681 = vrcp.pop %v1672
    %v1682 = vmul.f32 %v1662, %v1681
    %v1683 = vrcp.pop %v1675
    %v1684 = vmul.f32 %v1664, %v1683
    %v1685 = vrcp.pop %v1678
    %v1686 = vmul.f32 %v1666, %v1685
    %1687 = vrot.lane.b32.xlu0 %v1500, 64
    %v1688 = vpop.permute.xlu0 %1687
    %1689 = vrot.lane.b32.xlu0 %v1505, 64
    %v1690 = vpop.permute.xlu0 %1689
    %1691 = vrot.lane.b32.xlu0 %v1510, 64
    %v1692 = vpop.permute.xlu0 %1691
    %1693 = vrot.lane.b32.xlu0 %v1515, 64
    %v1694 = vpop.permute.xlu0 %1693
    %v1700 = vsel %vm201, %v1680, 0
    %v1703 = vsel %vm201, %v1682, 0
    %v1706 = vsel %vm201, %v1684, 0
    %v1709 = vsel %vm201, %v1686, 0
    %1711 = vmatprep.subr.mxu0 0.0
    %1712 = vmatpush1.msra.mxu0 %v1688
    %1713 = vmatprep.subr.mxu0 0.0
    %1714 = vmatpush1.msra.mxu0 %v1690
    %1715 = vmatprep.subr.mxu0 0.0
    %1716 = vmatpush1.msra.mxu0 %v1692
    %1717 = vmatprep.subr.mxu0 0.0
    %1718 = vmatpush1.msra.mxu0 %v1694
    %1719 = vmatprep.subr.mxu0 0.0
    %1720 = vmatpush1.msra.mxu0 0.0
    %1721 = vmatprep.subr.mxu0 0.0
    %1722 = vmatpush1.msra.mxu0 0.0
    %1723 = vmatprep.subr.mxu0 0.0
    %1724 = vmatpush1.msra.mxu0 0.0
    %1725 = vmatprep.subr.mxu0 0.0
    %1726 = vmatpush1.msra.mxu0 0.0
    %1727 = vmatprep.subr.mxu0 0.0
    %1728 = vmatpush1.msra.mxu0 0.0
    %1729 = vmatprep.subr.mxu0 0.0
    %1730 = vmatpush1.msra.mxu0 0.0
    %1731 = vmatprep.subr.mxu0 0.0
    %1732 = vmatpush1.msra.mxu0 0.0
    %1733 = vmatprep.subr.mxu0 0.0
    %1734 = vmatpush1.msra.mxu0 0.0
    %1735 = vmatprep.subr.mxu0 0.0
    %1736 = vmatpush1.msra.mxu0 0.0
    %1737 = vmatprep.subr.mxu0 0.0
    %1738 = vmatpush1.msra.mxu0 0.0
    %1739 = vmatprep.subr.mxu0 0.0
    %1740 = vmatpush1.msra.mxu0 0.0
    %1741 = vmatprep.subr.mxu0 0.0
    %1742 = vmatpush1.msra.mxu0 0.0
    %1743 = vmatprep.subr.mxu0 0.0
    %1744 = vmatpush1.msra.mxu0 0.0
    %1745 = vmatprep.subr.mxu0 0.0
    %1746 = vmatpush1.msra.mxu0 0.0
    %1747 = vmatprep.subr.mxu0 0.0
    %1748 = vmatpush1.msra.mxu0 0.0
    %1749 = vmatprep.subr.mxu0 0.0
    %1750 = vmatpush1.msra.mxu0 0.0
    %1751 = vmatprep.subr.mxu0 0.0
    %1752 = vmatpush1.msra.mxu0 0.0
    %1753 = vmatprep.subr.mxu0 0.0
    %1754 = vmatpush1.msra.mxu0 0.0
    %1755 = vmatprep.subr.mxu0 0.0
    %1756 = vmatpush1.msra.mxu0 0.0
    %1757 = vmatprep.subr.mxu0 0.0
    %1758 = vmatpush1.msra.mxu0 0.0
    %1759 = vmatprep.subr.mxu0 0.0
    %1760 = vmatpush1.msra.mxu0 0.0
    %1761 = vmatprep.subr.mxu0 0.0
    %1762 = vmatpush1.msra.mxu0 0.0
    %1763 = vmatprep.subr.mxu0 0.0
    %1764 = vmatpush1.msra.mxu0 0.0
    %1765 = vmatprep.subr.mxu0 0.0
    %1766 = vmatpush1.msra.mxu0 0.0
    %1767 = vmatprep.subr.mxu0 0.0
    %1768 = vmatpush1.msra.mxu0 0.0
    %1769 = vmatprep.subr.mxu0 0.0
    %1770 = vmatpush1.msra.mxu0 0.0
    %1771 = vmatprep.subr.mxu0 0.0
    %1772 = vmatpush1.msra.mxu0 0.0
    %1773 = vmatprep.subr.mxu0 0.0
    %1774 = vmatpush1.msra.mxu0 0.0
    %1775 = vmatprep.mubr.f32.mxu0 0.0
    %1776 = vmatmul.mubr.f32.gmra.mrb[0].mxu0 %v1700
    %v1777 = vpop.f32.mrb[0].mxu0
    %v1778 = vadd.f32 0.0, %v1777
    %v1779 = vpop.f32.mrb[0].mxu0
    %1780 = vmatprep.mubr.f32.mxu0 0.0
    %1781 = vmatmul.mubr.f32.gmra.mrb[0].mxu0 %v1703
    %v1782 = vpop.f32.mrb[0].mxu0
    %v1783 = vadd.f32 0.0, %v1782
    %v1784 = vpop.f32.mrb[0].mxu0
    %1785 = vmatprep.mubr.f32.mxu0 0.0
    %1786 = vmatmul.mubr.f32.gmra.mrb[0].mxu0 %v1706
    %v1787 = vpop.f32.mrb[0].mxu0
    %v1788 = vadd.f32 0.0, %v1787
    %v1789 = vpop.f32.mrb[0].mxu0
    %1790 = vmatprep.mubr.f32.mxu0 0.0
    %1791 = vmatmul.mubr.f32.gmra.mrb[0].mxu0 %v1709
    %v1792 = vpop.f32.mrb[0].mxu0
    %v1793 = vadd.f32 0.0, %v1792
    %v1794 = vpop.f32.mrb[0].mxu0
    %1795 = vdwg.mxu0
    %1796 = vrot.lane.b32.xlu0 %v1500, 112
    %v1797 = vpop.permute.xlu0 %1796
    %1798 = vrot.lane.b32.xlu0 %v1505, 112
    %v1799 = vpop.permute.xlu0 %1798
    %1800 = vrot.lane.b32.xlu0 %v1510, 112
    %v1801 = vpop.permute.xlu0 %1800
    %1802 = vrot.lane.b32.xlu0 %v1515, 112
    %v1803 = vpop.permute.xlu0 %1802
    %1804 = vrot.lane.b32.xlu0 %v1500, 80
    %v1805 = vpop.permute.xlu0 %1804
    %1806 = vrot.lane.b32.xlu0 %v1505, 80
    %v1807 = vpop.permute.xlu0 %1806
    %1808 = vrot.lane.b32.xlu0 %v1510, 80
    %v1809 = vpop.permute.xlu0 %1808
    %1810 = vrot.lane.b32.xlu0 %v1515, 80
    %v1811 = vpop.permute.xlu0 %1810
    %v1812 = vsel %vm293, %v1797, 0
    %v1814 = vsel %vm293, %v1799, 0
    %v1816 = vsel %vm293, %v1801, 0
    %v1818 = vsel %vm293, %v1803, 0
    %v1820 = vsel %vm293, %v1805, 0
    %v1822 = vsel %vm293, %v1807, 0
    %v1824 = vsel %vm293, %v1809, 0
    %v1826 = vsel %vm293, %v1811, 0
    %1828 = vmatprep.subr.mxu0 0.0
    %1829 = vmatpush1.xpose.msra.mxu0 %v1820
    %1830 = vmatprep.subr.mxu0 0.0
    %1831 = vmatpush1.xpose.msra.mxu0 %v1822
    %1832 = vmatprep.subr.mxu0 0.0
    %1833 = vmatpush1.xpose.msra.mxu0 %v1824
    %1834 = vmatprep.subr.mxu0 0.0
    %1835 = vmatpush1.xpose.msra.mxu0 %v1826
    %1836 = vmatprep.subr.mxu0 0.0
    %1837 = vmatpush1.xpose.msra.mxu0 0.0
    %1838 = vmatprep.subr.mxu0 0.0
    %1839 = vmatpush1.xpose.msra.mxu0 0.0
    %1840 = vmatprep.subr.mxu0 0.0
    %1841 = vmatpush1.xpose.msra.mxu0 0.0
    %1842 = vmatprep.subr.mxu0 0.0
    %1843 = vmatpush1.xpose.msra.mxu0 0.0
    %1844 = vmatprep.subr.mxu0 0.0
    %1845 = vmatpush1.xpose.msra.mxu0 0.0
    %1846 = vmatprep.subr.mxu0 0.0
    %1847 = vmatpush1.xpose.msra.mxu0 0.0
    %1848 = vmatprep.subr.mxu0 0.0
    %1849 = vmatpush1.xpose.msra.mxu0 0.0
    %1850 = vmatprep.subr.mxu0 0.0
    %1851 = vmatpush1.xpose.msra.mxu0 0.0
    %1852 = vmatprep.subr.mxu0 0.0
    %1853 = vmatpush1.xpose.msra.mxu0 0.0
    %1854 = vmatprep.subr.mxu0 0.0
    %1855 = vmatpush1.xpose.msra.mxu0 0.0
    %1856 = vmatprep.subr.mxu0 0.0
    %1857 = vmatpush1.xpose.msra.mxu0 0.0
    %1858 = vmatprep.subr.mxu0 0.0
    %1859 = vmatpush1.xpose.msra.mxu0 0.0
    %1860 = vmatprep.subr.mxu0 0.0
    %1861 = vmatpush1.xpose.msra.mxu0 0.0
    %1862 = vmatprep.subr.mxu0 0.0
    %1863 = vmatpush1.xpose.msra.mxu0 0.0
    %1864 = vmatprep.subr.mxu0 0.0
    %1865 = vmatpush1.xpose.msra.mxu0 0.0
    %1866 = vmatprep.subr.mxu0 0.0
    %1867 = vmatpush1.xpose.msra.mxu0 0.0
    %1868 = vmatprep.subr.mxu0 0.0
    %1869 = vmatpush1.xpose.msra.mxu0 0.0
    %1870 = vmatprep.subr.mxu0 0.0
    %1871 = vmatpush1.xpose.msra.mxu0 0.0
    %1872 = vmatprep.subr.mxu0 0.0
    %1873 = vmatpush1.xpose.msra.mxu0 0.0
    %1874 = vmatprep.subr.mxu0 0.0
    %1875 = vmatpush1.xpose.msra.mxu0 0.0
    %1876 = vmatprep.subr.mxu0 0.0
    %1877 = vmatpush1.xpose.msra.mxu0 0.0
    %1878 = vmatprep.subr.mxu0 0.0
    %1879 = vmatpush1.xpose.msra.mxu0 0.0
    %1880 = vmatprep.subr.mxu0 0.0
    %1881 = vmatpush1.xpose.msra.mxu0 0.0
    %1882 = vmatprep.subr.mxu0 0.0
    %1883 = vmatpush1.xpose.msra.mxu0 0.0
    %1884 = vmatprep.subr.mxu0 0.0
    %1885 = vmatpush1.xpose.msra.mxu0 0.0
    %1886 = vmatprep.subr.mxu0 0.0
    %1887 = vmatpush1.xpose.msra.mxu0 0.0
    %1888 = vmatprep.subr.mxu0 0.0
    %1889 = vmatpush1.xpose.msra.mxu0 0.0
    %1890 = vmatprep.subr.mxu0 0.0
    %1891 = vmatpush1.xpose.msra.mxu0 0.0
    %1892 = vmatprep.mubr.f32.mxu0 0.0
    %1893 = vmatmul.mubr.f32.gmra.mrb[0].mxu0 %v1812
    %v1894 = vpop.f32.mrb[0].mxu0
    %v1895 = vadd.f32 0.0, %v1894
    %v1896 = vpop.f32.mrb[0].mxu0
    %1897 = vmatprep.mubr.f32.mxu0 0.0
    %1898 = vmatmul.mubr.f32.gmra.mrb[0].mxu0 %v1814
    %v1899 = vpop.f32.mrb[0].mxu0
    %v1900 = vadd.f32 0.0, %v1899
    %v1901 = vpop.f32.mrb[0].mxu0
    %1902 = vmatprep.mubr.f32.mxu0 0.0
    %1903 = vmatmul.mubr.f32.gmra.mrb[0].mxu0 %v1816
    %v1904 = vpop.f32.mrb[0].mxu0
    %v1905 = vadd.f32 0.0, %v1904
    %v1906 = vpop.f32.mrb[0].mxu0
    %1907 = vmatprep.mubr.f32.mxu0 0.0
    %1908 = vmatmul.mubr.f32.gmra.mrb[0].mxu0 %v1818
    %v1909 = vpop.f32.mrb[0].mxu0
    %v1910 = vadd.f32 0.0, %v1909
    %v1911 = vpop.f32.mrb[0].mxu0
    %1912 = vdwg.mxu0
    %v1913 = vmul.f32 %v1895, 0.25
    %v1914 = vmul.f32 %v1900, 0.25
    %v1915 = vmul.f32 %v1905, 0.25
    %v1916 = vmul.f32 %v1910, 0.25
    %v1917 = vadd.f32 %v1913, %v1406
    %v1918 = vadd.f32 %v1914, %v1407
    %v1919 = vadd.f32 %v1915, %v1408
    %v1920 = vadd.f32 %v1916, %v1409
    %v1921 = vsel %vm201, %v1917, -inf
    %1922 = vmax.xlane.f32.xlu0 %v1921
    %v1923 = vpop.xlane.xlu0 %1922
    %v1924 = vsel %vm201, %v1918, -inf
    %1925 = vmax.xlane.f32.xlu0 %v1924
    %v1926 = vpop.xlane.xlu0 %1925
    %v1927 = vsel %vm201, %v1919, -inf
    %1928 = vmax.xlane.f32.xlu0 %v1927
    %v1929 = vpop.xlane.xlu0 %1928
    %v1930 = vsel %vm201, %v1920, -inf
    %1931 = vmax.xlane.f32.xlu0 %v1930
    %v1932 = vpop.xlane.xlu0 %1931
    %v1933 = vsub.f32 %v1917, %v1923
    %v1934 = vsub.f32 %v1918, %v1926
    %v1935 = vsub.f32 %v1919, %v1929
    %v1936 = vsub.f32 %v1920, %v1932
    %v1937 = vmul.f32 %v1933, 1.442695
    %v1938 = vpow.pop %v1937
    %v1939 = vmul.f32 %v1934, 1.442695
    %v1940 = vpow.pop %v1939
    %v1941 = vmul.f32 %v1935, 1.442695
    %v1942 = vpow.pop %v1941
    %v1943 = vmul.f32 %v1936, 1.442695
    %v1944 = vpow.pop %v1943
    %v1945 = vsel %vm201, %v1938, 0.0
    %1946 = vadd.xlane.f32.xlu0 %v1945
    %v1947 = vpop.xlane.xlu0 %1946
    %v1948 = vsel %vm201, %v1940, 0.0
    %1949 = vadd.xlane.f32.xlu0 %v1948
    %v1950 = vpop.xlane.xlu0 %1949
    %v1951 = vsel %vm201, %v1942, 0.0
    %1952 = vadd.xlane.f32.xlu0 %v1951
    %v1953 = vpop.xlane.xlu0 %1952
    %v1954 = vsel %vm201, %v1944, 0.0
    %1955 = vadd.xlane.f32.xlu0 %v1954
    %v1956 = vpop.xlane.xlu0 %1955
    %v1957 = vrcp.pop %v1947
    %v1958 = vmul.f32 %v1938, %v1957
    %v1959 = vrcp.pop %v1950
    %v1960 = vmul.f32 %v1940, %v1959
    %v1961 = vrcp.pop %v1953
    %v1962 = vmul.f32 %v1942, %v1961
    %v1963 = vrcp.pop %v1956
    %v1964 = vmul.f32 %v1944, %v1963
    %1965 = vrot.lane.b32.xlu0 %v1500, 48
    %v1966 = vpop.permute.xlu0 %1965
    %1967 = vrot.lane.b32.xlu0 %v1505, 48
    %v1968 = vpop.permute.xlu0 %1967
    %1969 = vrot.lane.b32.xlu0 %v1510, 48
    %v1970 = vpop.permute.xlu0 %1969
    %1971 = vrot.lane.b32.xlu0 %v1515, 48
    %v1972 = vpop.permute.xlu0 %1971
    %v1978 = vsel %vm201, %v1958, 0
    %v1981 = vsel %vm201, %v1960, 0
    %v1984 = vsel %vm201, %v1962, 0
    %v1987 = vsel %vm201, %v1964, 0
    %1989 = vmatprep.subr.mxu0 0.0
    %1990 = vmatpush1.msra.mxu0 %v1966
    %1991 = vmatprep.subr.mxu0 0.0
    %1992 = vmatpush1.msra.mxu0 %v1968
    %1993 = vmatprep.subr.mxu0 0.0
    %1994 = vmatpush1.msra.mxu0 %v1970
    %1995 = vmatprep.subr.mxu0 0.0
    %1996 = vmatpush1.msra.mxu0 %v1972
    %1997 = vmatprep.subr.mxu0 0.0
    %1998 = vmatpush1.msra.mxu0 0.0
    %1999 = vmatprep.subr.mxu0 0.0
    %2000 = vmatpush1.msra.mxu0 0.0
    %2001 = vmatprep.subr.mxu0 0.0
    %2002 = vmatpush1.msra.mxu0 0.0
    %2003 = vmatprep.subr.mxu0 0.0
    %2004 = vmatpush1.msra.mxu0 0.0
    %2005 = vmatprep.subr.mxu0 0.0
    %2006 = vmatpush1.msra.mxu0 0.0
    %2007 = vmatprep.subr.mxu0 0.0
    %2008 = vmatpush1.msra.mxu0 0.0
    %2009 = vmatprep.subr.mxu0 0.0
    %2010 = vmatpush1.msra.mxu0 0.0
    %2011 = vmatprep.subr.mxu0 0.0
    %2012 = vmatpush1.msra.mxu0 0.0
    %2013 = vmatprep.subr.mxu0 0.0
    %2014 = vmatpush1.msra.mxu0 0.0
    %2015 = vmatprep.subr.mxu0 0.0
    %2016 = vmatpush1.msra.mxu0 0.0
    %2017 = vmatprep.subr.mxu0 0.0
    %2018 = vmatpush1.msra.mxu0 0.0
    %2019 = vmatprep.subr.mxu0 0.0
    %2020 = vmatpush1.msra.mxu0 0.0
    %2021 = vmatprep.subr.mxu0 0.0
    %2022 = vmatpush1.msra.mxu0 0.0
    %2023 = vmatprep.subr.mxu0 0.0
    %2024 = vmatpush1.msra.mxu0 0.0
    %2025 = vmatprep.subr.mxu0 0.0
    %2026 = vmatpush1.msra.mxu0 0.0
    %2027 = vmatprep.subr.mxu0 0.0
    %2028 = vmatpush1.msra.mxu0 0.0
    %2029 = vmatprep.subr.mxu0 0.0
    %2030 = vmatpush1.msra.mxu0 0.0
    %2031 = vmatprep.subr.mxu0 0.0
    %2032 = vmatpush1.msra.mxu0 0.0
    %2033 = vmatprep.subr.mxu0 0.0
    %2034 = vmatpush1.msra.mxu0 0.0
    %2035 = vmatprep.subr.mxu0 0.0
    %2036 = vmatpush1.msra.mxu0 0.0
    %2037 = vmatprep.subr.mxu0 0.0
    %2038 = vmatpush1.msra.mxu0 0.0
    %2039 = vmatprep.subr.mxu0 0.0
    %2040 = vmatpush1.msra.mxu0 0.0
    %2041 = vmatprep.subr.mxu0 0.0
    %2042 = vmatpush1.msra.mxu0 0.0
    %2043 = vmatprep.subr.mxu0 0.0
    %2044 = vmatpush1.msra.mxu0 0.0
    %2045 = vmatprep.subr.mxu0 0.0
    %2046 = vmatpush1.msra.mxu0 0.0
    %2047 = vmatprep.subr.mxu0 0.0
    %2048 = vmatpush1.msra.mxu0 0.0
    %2049 = vmatprep.subr.mxu0 0.0
    %2050 = vmatpush1.msra.mxu0 0.0
    %2051 = vmatprep.subr.mxu0 0.0
    %2052 = vmatpush1.msra.mxu0 0.0
    %2053 = vmatprep.mubr.f32.mxu0 0.0
    %2054 = vmatmul.mubr.f32.gmra.mrb[0].mxu0 %v1978
    %v2055 = vpop.f32.mrb[0].mxu0
    %v2056 = vadd.f32 0.0, %v2055
    %v2057 = vpop.f32.mrb[0].mxu0
    %2058 = vmatprep.mubr.f32.mxu0 0.0
    %2059 = vmatmul.mubr.f32.gmra.mrb[0].mxu0 %v1981
    %v2060 = vpop.f32.mrb[0].mxu0
    %v2061 = vadd.f32 0.0, %v2060
    %v2062 = vpop.f32.mrb[0].mxu0
    %2063 = vmatprep.mubr.f32.mxu0 0.0
    %2064 = vmatmul.mubr.f32.gmra.mrb[0].mxu0 %v1984
    %v2065 = vpop.f32.mrb[0].mxu0
    %v2066 = vadd.f32 0.0, %v2065
    %v2067 = vpop.f32.mrb[0].mxu0
    %2068 = vmatprep.mubr.f32.mxu0 0.0
    %2069 = vmatmul.mubr.f32.gmra.mrb[0].mxu0 %v1987
    %v2070 = vpop.f32.mrb[0].mxu0
    %v2071 = vadd.f32 0.0, %v2070
    %v2072 = vpop.f32.mrb[0].mxu0
    %2073 = vdwg.mxu0
    %v2075 = vsel %vm293, %v2056, 0
    %v2078 = vsel %vm293, %v2061, 0
    %v2081 = vsel %vm293, %v2066, 0
    %v2084 = vsel %vm293, %v2071, 0
    %2086 = vmatprep.subr.mxu0 0.0
    %2087 = vmatpush1.msra.mxu0 %v1520
    %2088 = vmatprep.subr.mxu0 0.0
    %2089 = vmatpush1.msra.mxu0 %v1521
    %2090 = vmatprep.subr.mxu0 0.0
    %2091 = vmatpush1.msra.mxu0 0.0
    %2092 = vmatprep.subr.mxu0 0.0
    %2093 = vmatpush1.msra.mxu0 0.0
    %2094 = vmatprep.subr.mxu0 0.0
    %2095 = vmatpush1.msra.mxu0 0.0
    %2096 = vmatprep.subr.mxu0 0.0
    %2097 = vmatpush1.msra.mxu0 0.0
    %2098 = vmatprep.subr.mxu0 0.0
    %2099 = vmatpush1.msra.mxu0 0.0
    %2100 = vmatprep.subr.mxu0 0.0
    %2101 = vmatpush1.msra.mxu0 0.0
    %2102 = vmatprep.subr.mxu0 0.0
    %2103 = vmatpush1.msra.mxu0 0.0
    %2104 = vmatprep.subr.mxu0 0.0
    %2105 = vmatpush1.msra.mxu0 0.0
    %2106 = vmatprep.subr.mxu0 0.0
    %2107 = vmatpush1.msra.mxu0 0.0
    %2108 = vmatprep.subr.mxu0 0.0
    %2109 = vmatpush1.msra.mxu0 0.0
    %2110 = vmatprep.subr.mxu0 0.0
    %2111 = vmatpush1.msra.mxu0 0.0
    %2112 = vmatprep.subr.mxu0 0.0
    %2113 = vmatpush1.msra.mxu0 0.0
    %2114 = vmatprep.subr.mxu0 0.0
    %2115 = vmatpush1.msra.mxu0 0.0
    %2116 = vmatprep.subr.mxu0 0.0
    %2117 = vmatpush1.msra.mxu0 0.0
    %2118 = vmatprep.subr.mxu0 0.0
    %2119 = vmatpush1.msra.mxu0 0.0
    %2120 = vmatprep.subr.mxu0 0.0
    %2121 = vmatpush1.msra.mxu0 0.0
    %2122 = vmatprep.subr.mxu0 0.0
    %2123 = vmatpush1.msra.mxu0 0.0
    %2124 = vmatprep.subr.mxu0 0.0
    %2125 = vmatpush1.msra.mxu0 0.0
    %2126 = vmatprep.subr.mxu0 0.0
    %2127 = vmatpush1.msra.mxu0 0.0
    %2128 = vmatprep.subr.mxu0 0.0
    %2129 = vmatpush1.msra.mxu0 0.0
    %2130 = vmatprep.subr.mxu0 0.0
    %2131 = vmatpush1.msra.mxu0 0.0
    %2132 = vmatprep.subr.mxu0 0.0
    %2133 = vmatpush1.msra.mxu0 0.0
    %2134 = vmatprep.subr.mxu0 0.0
    %2135 = vmatpush1.msra.mxu0 0.0
    %2136 = vmatprep.subr.mxu0 0.0
    %2137 = vmatpush1.msra.mxu0 0.0
    %2138 = vmatprep.subr.mxu0 0.0
    %2139 = vmatpush1.msra.mxu0 0.0
    %2140 = vmatprep.subr.mxu0 0.0
    %2141 = vmatpush1.msra.mxu0 0.0
    %2142 = vmatprep.subr.mxu0 0.0
    %2143 = vmatpush1.msra.mxu0 0.0
    %2144 = vmatprep.subr.mxu0 0.0
    %2145 = vmatpush1.msra.mxu0 0.0
    %2146 = vmatprep.subr.mxu0 0.0
    %2147 = vmatpush1.msra.mxu0 0.0
    %2148 = vmatprep.subr.mxu0 0.0
    %2149 = vmatpush1.msra.mxu0 0.0
    %2150 = vmatprep.mubr.f32.mxu0 0.0
    %2151 = vmatmul.mubr.f32.gmra.mrb[0].mxu0 %v2075
    %v2152 = vpop.f32.mrb[0].mxu0
    %v2153 = vadd.f32 0.0, %v2152
    %v2154 = vpop.f32.mrb[0].mxu0
    %2155 = vmatprep.mubr.f32.mxu0 0.0
    %2156 = vmatmul.mubr.f32.gmra.mrb[0].mxu0 %v2078
    %v2157 = vpop.f32.mrb[0].mxu0
    %v2158 = vadd.f32 0.0, %v2157
    %v2159 = vpop.f32.mrb[0].mxu0
    %2160 = vmatprep.mubr.f32.mxu0 0.0
    %2161 = vmatmul.mubr.f32.gmra.mrb[0].mxu0 %v2081
    %v2162 = vpop.f32.mrb[0].mxu0
    %v2163 = vadd.f32 0.0, %v2162
    %v2164 = vpop.f32.mrb[0].mxu0
    %2165 = vmatprep.mubr.f32.mxu0 0.0
    %2166 = vmatmul.mubr.f32.gmra.mrb[0].mxu0 %v2084
    %v2167 = vpop.f32.mrb[0].mxu0
    %v2168 = vadd.f32 0.0, %v2167
    %v2169 = vpop.f32.mrb[0].mxu0
    %2170 = vdwg.mxu0
    %v2172 = vsel %vm293, %v1778, 0
    %v2175 = vsel %vm293, %v1783, 0
    %v2178 = vsel %vm293, %v1788, 0
    %v2181 = vsel %vm293, %v1793, 0
    %2183 = vmatprep.subr.mxu0 0.0
    %2184 = vmatpush1.msra.mxu0 %v1518
    %2185 = vmatprep.subr.mxu0 0.0
    %2186 = vmatpush1.msra.mxu0 %v1519
    %2187 = vmatprep.subr.mxu0 0.0
    %2188 = vmatpush1.msra.mxu0 0.0
    %2189 = vmatprep.subr.mxu0 0.0
    %2190 = vmatpush1.msra.mxu0 0.0
    %2191 = vmatprep.subr.mxu0 0.0
    %2192 = vmatpush1.msra.mxu0 0.0
    %2193 = vmatprep.subr.mxu0 0.0
    %2194 = vmatpush1.msra.mxu0 0.0
    %2195 = vmatprep.subr.mxu0 0.0
    %2196 = vmatpush1.msra.mxu0 0.0
    %2197 = vmatprep.subr.mxu0 0.0
    %2198 = vmatpush1.msra.mxu0 0.0
    %2199 = vmatprep.subr.mxu0 0.0
    %2200 = vmatpush1.msra.mxu0 0.0
    %2201 = vmatprep.subr.mxu0 0.0
    %2202 = vmatpush1.msra.mxu0 0.0
    %2203 = vmatprep.subr.mxu0 0.0
    %2204 = vmatpush1.msra.mxu0 0.0
    %2205 = vmatprep.subr.mxu0 0.0
    %2206 = vmatpush1.msra.mxu0 0.0
    %2207 = vmatprep.subr.mxu0 0.0
    %2208 = vmatpush1.msra.mxu0 0.0
    %2209 = vmatprep.subr.mxu0 0.0
    %2210 = vmatpush1.msra.mxu0 0.0
    %2211 = vmatprep.subr.mxu0 0.0
    %2212 = vmatpush1.msra.mxu0 0.0
    %2213 = vmatprep.subr.mxu0 0.0
    %2214 = vmatpush1.msra.mxu0 0.0
    %2215 = vmatprep.subr.mxu0 0.0
    %2216 = vmatpush1.msra.mxu0 0.0
    %2217 = vmatprep.subr.mxu0 0.0
    %2218 = vmatpush1.msra.mxu0 0.0
    %2219 = vmatprep.subr.mxu0 0.0
    %2220 = vmatpush1.msra.mxu0 0.0
    %2221 = vmatprep.subr.mxu0 0.0
    %2222 = vmatpush1.msra.mxu0 0.0
    %2223 = vmatprep.subr.mxu0 0.0
    %2224 = vmatpush1.msra.mxu0 0.0
    %2225 = vmatprep.subr.mxu0 0.0
    %2226 = vmatpush1.msra.mxu0 0.0
    %2227 = vmatprep.subr.mxu0 0.0
    %2228 = vmatpush1.msra.mxu0 0.0
    %2229 = vmatprep.subr.mxu0 0.0
    %2230 = vmatpush1.msra.mxu0 0.0
    %2231 = vmatprep.subr.mxu0 0.0
    %2232 = vmatpush1.msra.mxu0 0.0
    %2233 = vmatprep.subr.mxu0 0.0
    %2234 = vmatpush1.msra.mxu0 0.0
    %2235 = vmatprep.subr.mxu0 0.0
    %2236 = vmatpush1.msra.mxu0 0.0
    %2237 = vmatprep.subr.mxu0 0.0
    %2238 = vmatpush1.msra.mxu0 0.0
    %2239 = vmatprep.subr.mxu0 0.0
    %2240 = vmatpush1.msra.mxu0 0.0
    %2241 = vmatprep.subr.mxu0 0.0
    %2242 = vmatpush1.msra.mxu0 0.0
    %2243 = vmatprep.subr.mxu0 0.0
    %2244 = vmatpush1.msra.mxu0 0.0
    %2245 = vmatprep.subr.mxu0 0.0
    %2246 = vmatpush1.msra.mxu0 0.0
    %2247 = vmatprep.mubr.f32.mxu0 0.0
    %2248 = vmatmul.mubr.f32.gmra.mrb[0].mxu0 %v2172
    %v2249 = vpop.f32.mrb[0].mxu0
    %v2250 = vadd.f32 %v2153, %v2249
    %v2251 = vpop.f32.mrb[0].mxu0
    %2252 = vmatprep.mubr.f32.mxu0 0.0
    %2253 = vmatmul.mubr.f32.gmra.mrb[0].mxu0 %v2175
    %v2254 = vpop.f32.mrb[0].mxu0
    %v2255 = vadd.f32 %v2158, %v2254
    %v2256 = vpop.f32.mrb[0].mxu0
    %2257 = vmatprep.mubr.f32.mxu0 0.0
    %2258 = vmatmul.mubr.f32.gmra.mrb[0].mxu0 %v2178
    %v2259 = vpop.f32.mrb[0].mxu0
    %v2260 = vadd.f32 %v2163, %v2259
    %v2261 = vpop.f32.mrb[0].mxu0
    %2262 = vmatprep.mubr.f32.mxu0 0.0
    %2263 = vmatmul.mubr.f32.gmra.mrb[0].mxu0 %v2181
    %v2264 = vpop.f32.mrb[0].mxu0
    %v2265 = vadd.f32 %v2168, %v2264
    %v2266 = vpop.f32.mrb[0].mxu0
    %2267 = vdwg.mxu0
    %v2268 = vld [vmem:[%s47] sm:$0x1]
    %v2270 = vlaneseq
    %v2271 = vshrl.u32 %v2270, 7
    %v2272 = vsub.s32 0, %v2271
    %v2273 = vrot.slane %v2268, %v2272
    %v2275 = vadd.f32 %v2250, %v2273
    %v2276 = vadd.f32 %v2255, %v2273
    %v2277 = vadd.f32 %v2260, %v2273
    %v2278 = vadd.f32 %v2265, %v2273
    %v2279 = vadd.f32 %v1344, %v2275
    %v2280 = vadd.f32 %v1349, %v2276
    %v2281 = vadd.f32 %v1354, %v2277
    %v2282 = vadd.f32 %v1359, %v2278
    %v2283 = vld [vmem:[%s37] sm:$0x1]
    %v2284 = vld [vmem:[%s35] sm:$0x1]
    %v2285 = vsel %vm201, %v2279, 0.0
    %2286 = vadd.xlane.f32.xlu0 %v2285
    %v2287 = vpop.xlane.xlu0 %2286
    %v2288 = vsel %vm201, %v2280, 0.0
    %2289 = vadd.xlane.f32.xlu0 %v2288
    %v2290 = vpop.xlane.xlu0 %2289
    %v2291 = vsel %vm201, %v2281, 0.0
    %2292 = vadd.xlane.f32.xlu0 %v2291
    %v2293 = vpop.xlane.xlu0 %2292
    %v2294 = vsel %vm201, %v2282, 0.0
    %2295 = vadd.xlane.f32.xlu0 %v2294
    %v2296 = vpop.xlane.xlu0 %2295
    %v2297 = vmul.f32 %v2287, %v875
    %v2298 = vmul.f32 %v2290, %v875
    %v2299 = vmul.f32 %v2293, %v875
    %v2300 = vmul.f32 %v2296, %v875
    %v2301 = vsub.f32 %v2279, %v2297
    %v2302 = vsub.f32 %v2280, %v2298
    %v2303 = vsub.f32 %v2281, %v2299
    %v2304 = vsub.f32 %v2282, %v2300
    %v2305 = vmul.f32 %v2301, %v2301
    %v2306 = vmul.f32 %v2302, %v2302
    %v2307 = vmul.f32 %v2303, %v2303
    %v2308 = vmul.f32 %v2304, %v2304
    %v2309 = vsel %vm201, %v2305, 0.0
    %2310 = vadd.xlane.f32.xlu0 %v2309
    %v2311 = vpop.xlane.xlu0 %2310
    %v2312 = vsel %vm201, %v2306, 0.0
    %2313 = vadd.xlane.f32.xlu0 %v2312
    %v2314 = vpop.xlane.xlu0 %2313
    %v2315 = vsel %vm201, %v2307, 0.0
    %2316 = vadd.xlane.f32.xlu0 %v2315
    %v2317 = vpop.xlane.xlu0 %2316
    %v2318 = vsel %vm201, %v2308, 0.0
    %2319 = vadd.xlane.f32.xlu0 %v2318
    %v2320 = vpop.xlane.xlu0 %2319
    %v2321 = vmul.f32 %v2311, %v875
    %v2322 = vmul.f32 %v2314, %v875
    %v2323 = vmul.f32 %v2317, %v875
    %v2324 = vmul.f32 %v2320, %v875
    %v2325 = vadd.f32 %v2321, 1e-05
    %v2326 = vadd.f32 %v2322, 1e-05
    %v2327 = vadd.f32 %v2323, 1e-05
    %v2328 = vadd.f32 %v2324, 1e-05
    %v2329 = vrsqrt.pop %v2325
    %v2330 = vrsqrt.pop %v2326
    %v2331 = vrsqrt.pop %v2327
    %v2332 = vrsqrt.pop %v2328
    %v2333 = vmul.f32 %v2301, %v2329
    %v2334 = vmul.f32 %v2302, %v2330
    %v2335 = vmul.f32 %v2303, %v2331
    %v2336 = vmul.f32 %v2304, %v2332
    %v2338 = vlaneseq
    %v2339 = vshrl.u32 %v2338, 7
    %v2340 = vsub.s32 0, %v2339
    %v2341 = vrot.slane %v2283, %v2340
    %v2343 = vmul.f32 %v2333, %v2341
    %v2344 = vmul.f32 %v2334, %v2341
    %v2345 = vmul.f32 %v2335, %v2341
    %v2346 = vmul.f32 %v2336, %v2341
    %v2348 = vlaneseq
    %v2349 = vshrl.u32 %v2348, 7
    %v2350 = vsub.s32 0, %v2349
    %v2351 = vrot.slane %v2284, %v2350
    %v2353 = vadd.f32 %v2343, %v2351
    %v2354 = vadd.f32 %v2344, %v2351
    %v2355 = vadd.f32 %v2345, %v2351
    %v2356 = vadd.f32 %v2346, %v2351
    %v2357 = vld [vmem:[%s25] sm:$0xff]
    %v2358 = vld [vmem:[%s25 + $0x8] sm:$0xff]
    %v2359 = vld [vmem:[%s25 + $0x10] sm:$0xff]
    %v2360 = vld [vmem:[%s25 + $0x18] sm:$0xff]
    %v2361 = vld [vmem:[%s21] sm:$0x1]
    %v2363 = vlaneseq
    %v2364 = vshrl.u32 %v2363, 7
    %v2365 = vsub.s32 0, %v2364
    %v2366 = vrot.slane %v2361, %v2365
    %v2369 = vsel %vm201, %v2353, 0
    %v2372 = vsel %vm201, %v2354, 0
    %v2375 = vsel %vm201, %v2355, 0
    %v2378 = vsel %vm201, %v2356, 0
    %2380 = vmatprep.subr.mxu0 0.0
    %2381 = vmatpush1.msra.mxu0 %v2357
    %2382 = vmatprep.subr.mxu0 0.0
    %2383 = vmatpush1.msra.mxu0 %v2358
    %2384 = vmatprep.subr.mxu0 0.0
    %2385 = vmatpush1.msra.mxu0 %v2359
    %2386 = vmatprep.subr.mxu0 0.0
    %2387 = vmatpush1.msra.mxu0 %v2360
    %2388 = vmatprep.subr.mxu0 0.0
    %2389 = vmatpush1.msra.mxu0 0.0
    %2390 = vmatprep.subr.mxu0 0.0
    %2391 = vmatpush1.msra.mxu0 0.0
    %2392 = vmatprep.subr.mxu0 0.0
    %2393 = vmatpush1.msra.mxu0 0.0
    %2394 = vmatprep.subr.mxu0 0.0
    %2395 = vmatpush1.msra.mxu0 0.0
    %2396 = vmatprep.subr.mxu0 0.0
    %2397 = vmatpush1.msra.mxu0 0.0
    %2398 = vmatprep.subr.mxu0 0.0
    %2399 = vmatpush1.msra.mxu0 0.0
    %2400 = vmatprep.subr.mxu0 0.0
    %2401 = vmatpush1.msra.mxu0 0.0
    %2402 = vmatprep.subr.mxu0 0.0
    %2403 = vmatpush1.msra.mxu0 0.0
    %2404 = vmatprep.subr.mxu0 0.0
    %2405 = vmatpush1.msra.mxu0 0.0
    %2406 = vmatprep.subr.mxu0 0.0
    %2407 = vmatpush1.msra.mxu0 0.0
    %2408 = vmatprep.subr.mxu0 0.0
    %2409 = vmatpush1.msra.mxu0 0.0
    %2410 = vmatprep.subr.mxu0 0.0
    %2411 = vmatpush1.msra.mxu0 0.0
    %2412 = vmatprep.subr.mxu0 0.0
    %2413 = vmatpush1.msra.mxu0 0.0
    %2414 = vmatprep.subr.mxu0 0.0
    %2415 = vmatpush1.msra.mxu0 0.0
    %2416 = vmatprep.subr.mxu0 0.0
    %2417 = vmatpush1.msra.mxu0 0.0
    %2418 = vmatprep.subr.mxu0 0.0
    %2419 = vmatpush1.msra.mxu0 0.0
    %2420 = vmatprep.subr.mxu0 0.0
    %2421 = vmatpush1.msra.mxu0 0.0
    %2422 = vmatprep.subr.mxu0 0.0
    %2423 = vmatpush1.msra.mxu0 0.0
    %2424 = vmatprep.subr.mxu0 0.0
    %2425 = vmatpush1.msra.mxu0 0.0
    %2426 = vmatprep.subr.mxu0 0.0
    %2427 = vmatpush1.msra.mxu0 0.0
    %2428 = vmatprep.subr.mxu0 0.0
    %2429 = vmatpush1.msra.mxu0 0.0
    %2430 = vmatprep.subr.mxu0 0.0
    %2431 = vmatpush1.msra.mxu0 0.0
    %2432 = vmatprep.subr.mxu0 0.0
    %2433 = vmatpush1.msra.mxu0 0.0
    %2434 = vmatprep.subr.mxu0 0.0
    %2435 = vmatpush1.msra.mxu0 0.0
    %2436 = vmatprep.subr.mxu0 0.0
    %2437 = vmatpush1.msra.mxu0 0.0
    %2438 = vmatprep.subr.mxu0 0.0
    %2439 = vmatpush1.msra.mxu0 0.0
    %2440 = vmatprep.subr.mxu0 0.0
    %2441 = vmatpush1.msra.mxu0 0.0
    %2442 = vmatprep.subr.mxu0 0.0
    %2443 = vmatpush1.msra.mxu0 0.0
    %2444 = vmatprep.mubr.f32.mxu0 0.0
    %2445 = vmatmul.mubr.f32.gmra.mrb[0].mxu0 %v2369
    %v2446 = vpop.f32.mrb[0].mxu0
    %v2447 = vadd.f32 %v2366, %v2446
    %v2448 = vpop.f32.mrb[0].mxu0
    %2449 = vmatprep.mubr.f32.mxu0 0.0
    %2450 = vmatmul.mubr.f32.gmra.mrb[0].mxu0 %v2372
    %v2451 = vpop.f32.mrb[0].mxu0
    %v2452 = vadd.f32 %v2366, %v2451
    %v2453 = vpop.f32.mrb[0].mxu0
    %2454 = vmatprep.mubr.f32.mxu0 0.0
    %2455 = vmatmul.mubr.f32.gmra.mrb[0].mxu0 %v2375
    %v2456 = vpop.f32.mrb[0].mxu0
    %v2457 = vadd.f32 %v2366, %v2456
    %v2458 = vpop.f32.mrb[0].mxu0
    %2459 = vmatprep.mubr.f32.mxu0 0.0
    %2460 = vmatmul.mubr.f32.gmra.mrb[0].mxu0 %v2378
    %v2461 = vpop.f32.mrb[0].mxu0
    %v2462 = vadd.f32 %v2366, %v2461
    %v2463 = vpop.f32.mrb[0].mxu0
    %2464 = vdwg.mxu0
    %2469 = vrot.lane.b32.xlu0 %v2357, 96
    %v2470 = vpop.permute.xlu0 %2469
    %2471 = vrot.lane.b32.xlu0 %v2358, 96
    %v2472 = vpop.permute.xlu0 %2471
    %2473 = vrot.lane.b32.xlu0 %v2359, 96
    %v2474 = vpop.permute.xlu0 %2473
    %2475 = vrot.lane.b32.xlu0 %v2360, 96
    %v2476 = vpop.permute.xlu0 %2475
    %2481 = vrot.lane.b32.xlu0 %v2366, 96
    %v2482 = vpop.permute.xlu0 %2481
    %v2485 = vsel %vm201, %v1191, 0
    %v2488 = vsel %vm201, %v1192, 0
    %2490 = vmatprep.subr.mxu0 0.0
    %2491 = vmatpush1.msra.mxu0 %v2470
    %2492 = vmatprep.subr.mxu0 0.0
    %2493 = vmatpush1.msra.mxu0 %v2472
    %2494 = vmatprep.subr.mxu0 0.0
    %2495 = vmatpush1.msra.mxu0 %v2474
    %2496 = vmatprep.subr.mxu0 0.0
    %2497 = vmatpush1.msra.mxu0 %v2476
    %2498 = vmatprep.subr.mxu0 0.0
    %2499 = vmatpush1.msra.mxu0 0.0
    %2500 = vmatprep.subr.mxu0 0.0
    %2501 = vmatpush1.msra.mxu0 0.0
    %2502 = vmatprep.subr.mxu0 0.0
    %2503 = vmatpush1.msra.mxu0 0.0
    %2504 = vmatprep.subr.mxu0 0.0
    %2505 = vmatpush1.msra.mxu0 0.0
    %2506 = vmatprep.subr.mxu0 0.0
    %2507 = vmatpush1.msra.mxu0 0.0
    %2508 = vmatprep.subr.mxu0 0.0
    %2509 = vmatpush1.msra.mxu0 0.0
    %2510 = vmatprep.subr.mxu0 0.0
    %2511 = vmatpush1.msra.mxu0 0.0
    %2512 = vmatprep.subr.mxu0 0.0
    %2513 = vmatpush1.msra.mxu0 0.0
    %2514 = vmatprep.subr.mxu0 0.0
    %2515 = vmatpush1.msra.mxu0 0.0
    %2516 = vmatprep.subr.mxu0 0.0
    %2517 = vmatpush1.msra.mxu0 0.0
    %2518 = vmatprep.subr.mxu0 0.0
    %2519 = vmatpush1.msra.mxu0 0.0
    %2520 = vmatprep.subr.mxu0 0.0
    %2521 = vmatpush1.msra.mxu0 0.0
    %2522 = vmatprep.subr.mxu0 0.0
    %2523 = vmatpush1.msra.mxu0 0.0
    %2524 = vmatprep.subr.mxu0 0.0
    %2525 = vmatpush1.msra.mxu0 0.0
    %2526 = vmatprep.subr.mxu0 0.0
    %2527 = vmatpush1.msra.mxu0 0.0
    %2528 = vmatprep.subr.mxu0 0.0
    %2529 = vmatpush1.msra.mxu0 0.0
    %2530 = vmatprep.subr.mxu0 0.0
    %2531 = vmatpush1.msra.mxu0 0.0
    %2532 = vmatprep.subr.mxu0 0.0
    %2533 = vmatpush1.msra.mxu0 0.0
    %2534 = vmatprep.subr.mxu0 0.0
    %2535 = vmatpush1.msra.mxu0 0.0
    %2536 = vmatprep.subr.mxu0 0.0
    %2537 = vmatpush1.msra.mxu0 0.0
    %2538 = vmatprep.subr.mxu0 0.0
    %2539 = vmatpush1.msra.mxu0 0.0
    %2540 = vmatprep.subr.mxu0 0.0
    %2541 = vmatpush1.msra.mxu0 0.0
    %2542 = vmatprep.subr.mxu0 0.0
    %2543 = vmatpush1.msra.mxu0 0.0
    %2544 = vmatprep.subr.mxu0 0.0
    %2545 = vmatpush1.msra.mxu0 0.0
    %2546 = vmatprep.subr.mxu0 0.0
    %2547 = vmatpush1.msra.mxu0 0.0
    %2548 = vmatprep.subr.mxu0 0.0
    %2549 = vmatpush1.msra.mxu0 0.0
    %2550 = vmatprep.subr.mxu0 0.0
    %2551 = vmatpush1.msra.mxu0 0.0
    %2552 = vmatprep.subr.mxu0 0.0
    %2553 = vmatpush1.msra.mxu0 0.0
    %2554 = vmatprep.mubr.f32.mxu0 0.0
    %2555 = vmatmul.mubr.f32.gmra.mrb[0].mxu0 %v2485
    %v2556 = vpop.f32.mrb[0].mxu0
    %v2557 = vadd.f32 %v2482, %v2556
    %v2558 = vpop.f32.mrb[0].mxu0
    %2559 = vmatprep.mubr.f32.mxu0 0.0
    %2560 = vmatmul.mubr.f32.gmra.mrb[0].mxu0 %v2488
    %v2561 = vpop.f32.mrb[0].mxu0
    %v2562 = vadd.f32 %v2482, %v2561
    %v2563 = vpop.f32.mrb[0].mxu0
    %2564 = vdwg.mxu0
    %v2565 = vld [vmem:[%s23] sm:$0xff]
    %v2566 = vld [vmem:[%s23 + $0x8] sm:$0xff]
    %v2567 = vld [vmem:[%s23 + $0x10] sm:$0xff]
    %v2568 = vld [vmem:[%s23 + $0x18] sm:$0xff]
    %v2570 = vsel %vm293, %v2447, 0
    %v2573 = vsel %vm293, %v2452, 0
    %v2576 = vsel %vm293, %v2457, 0
    %v2579 = vsel %vm293, %v2462, 0
    %v2582 = vsel %vm293, %v2557, 0
    %v2585 = vsel %vm293, %v2562, 0
    %2587 = vmatprep.subr.mxu0 0.0
    %2588 = vmatpush1.xpose.msra.mxu0 %v2582
    %2589 = vmatprep.subr.mxu0 0.0
    %2590 = vmatpush1.xpose.msra.mxu0 %v2585
    %2591 = vmatprep.subr.mxu0 0.0
    %2592 = vmatpush1.xpose.msra.mxu0 0.0
    %2593 = vmatprep.subr.mxu0 0.0
    %2594 = vmatpush1.xpose.msra.mxu0 0.0
    %2595 = vmatprep.subr.mxu0 0.0
    %2596 = vmatpush1.xpose.msra.mxu0 0.0
    %2597 = vmatprep.subr.mxu0 0.0
    %2598 = vmatpush1.xpose.msra.mxu0 0.0
    %2599 = vmatprep.subr.mxu0 0.0
    %2600 = vmatpush1.xpose.msra.mxu0 0.0
    %2601 = vmatprep.subr.mxu0 0.0
    %2602 = vmatpush1.xpose.msra.mxu0 0.0
    %2603 = vmatprep.subr.mxu0 0.0
    %2604 = vmatpush1.xpose.msra.mxu0 0.0
    %2605 = vmatprep.subr.mxu0 0.0
    %2606 = vmatpush1.xpose.msra.mxu0 0.0
    %2607 = vmatprep.subr.mxu0 0.0
    %2608 = vmatpush1.xpose.msra.mxu0 0.0
    %2609 = vmatprep.subr.mxu0 0.0
    %2610 = vmatpush1.xpose.msra.mxu0 0.0
    %2611 = vmatprep.subr.mxu0 0.0
    %2612 = vmatpush1.xpose.msra.mxu0 0.0
    %2613 = vmatprep.subr.mxu0 0.0
    %2614 = vmatpush1.xpose.msra.mxu0 0.0
    %2615 = vmatprep.subr.mxu0 0.0
    %2616 = vmatpush1.xpose.msra.mxu0 0.0
    %2617 = vmatprep.subr.mxu0 0.0
    %2618 = vmatpush1.xpose.msra.mxu0 0.0
    %2619 = vmatprep.subr.mxu0 0.0
    %2620 = vmatpush1.xpose.msra.mxu0 0.0
    %2621 = vmatprep.subr.mxu0 0.0
    %2622 = vmatpush1.xpose.msra.mxu0 0.0
    %2623 = vmatprep.subr.mxu0 0.0
    %2624 = vmatpush1.xpose.msra.mxu0 0.0
    %2625 = vmatprep.subr.mxu0 0.0
    %2626 = vmatpush1.xpose.msra.mxu0 0.0
    %2627 = vmatprep.subr.mxu0 0.0
    %2628 = vmatpush1.xpose.msra.mxu0 0.0
    %2629 = vmatprep.subr.mxu0 0.0
    %2630 = vmatpush1.xpose.msra.mxu0 0.0
    %2631 = vmatprep.subr.mxu0 0.0
    %2632 = vmatpush1.xpose.msra.mxu0 0.0
    %2633 = vmatprep.subr.mxu0 0.0
    %2634 = vmatpush1.xpose.msra.mxu0 0.0
    %2635 = vmatprep.subr.mxu0 0.0
    %2636 = vmatpush1.xpose.msra.mxu0 0.0
    %2637 = vmatprep.subr.mxu0 0.0
    %2638 = vmatpush1.xpose.msra.mxu0 0.0
    %2639 = vmatprep.subr.mxu0 0.0
    %2640 = vmatpush1.xpose.msra.mxu0 0.0
    %2641 = vmatprep.subr.mxu0 0.0
    %2642 = vmatpush1.xpose.msra.mxu0 0.0
    %2643 = vmatprep.subr.mxu0 0.0
    %2644 = vmatpush1.xpose.msra.mxu0 0.0
    %2645 = vmatprep.subr.mxu0 0.0
    %2646 = vmatpush1.xpose.msra.mxu0 0.0
    %2647 = vmatprep.subr.mxu0 0.0
    %2648 = vmatpush1.xpose.msra.mxu0 0.0
    %2649 = vmatprep.subr.mxu0 0.0
    %2650 = vmatpush1.xpose.msra.mxu0 0.0
    %2651 = vmatprep.mubr.f32.mxu0 0.0
    %2652 = vmatmul.mubr.f32.gmra.mrb[0].mxu0 %v2570
    %v2653 = vpop.f32.mrb[0].mxu0
    %v2654 = vadd.f32 0.0, %v2653
    %v2655 = vpop.f32.mrb[0].mxu0
    %2656 = vmatprep.mubr.f32.mxu0 0.0
    %2657 = vmatmul.mubr.f32.gmra.mrb[0].mxu0 %v2573
    %v2658 = vpop.f32.mrb[0].mxu0
    %v2659 = vadd.f32 0.0, %v2658
    %v2660 = vpop.f32.mrb[0].mxu0
    %2661 = vmatprep.mubr.f32.mxu0 0.0
    %2662 = vmatmul.mubr.f32.gmra.mrb[0].mxu0 %v2576
    %v2663 = vpop.f32.mrb[0].mxu0
    %v2664 = vadd.f32 0.0, %v2663
    %v2665 = vpop.f32.mrb[0].mxu0
    %2666 = vmatprep.mubr.f32.mxu0 0.0
    %2667 = vmatmul.mubr.f32.gmra.mrb[0].mxu0 %v2579
    %v2668 = vpop.f32.mrb[0].mxu0
    %v2669 = vadd.f32 0.0, %v2668
    %v2670 = vpop.f32.mrb[0].mxu0
    %2671 = vdwg.mxu0
    %v2672 = vmul.f32 %v2654, 0.25
    %v2673 = vmul.f32 %v2659, 0.25
    %v2674 = vmul.f32 %v2664, 0.25
    %v2675 = vmul.f32 %v2669, 0.25
    %v2676 = vadd.f32 %v2672, %v1193
    %v2677 = vadd.f32 %v2673, %v1194
    %v2678 = vadd.f32 %v2674, %v1195
    %v2679 = vadd.f32 %v2675, %v1196
    %v2680 = vsel %vm293, %v2676, -inf
    %2681 = vmax.xlane.f32.xlu0 %v2680
    %v2682 = vpop.xlane.xlu0 %2681
    %v2683 = vsel %vm293, %v2677, -inf
    %2684 = vmax.xlane.f32.xlu0 %v2683
    %v2685 = vpop.xlane.xlu0 %2684
    %v2686 = vsel %vm293, %v2678, -inf
    %2687 = vmax.xlane.f32.xlu0 %v2686
    %v2688 = vpop.xlane.xlu0 %2687
    %v2689 = vsel %vm293, %v2679, -inf
    %2690 = vmax.xlane.f32.xlu0 %v2689
    %v2691 = vpop.xlane.xlu0 %2690
    %v2692 = vsub.f32 %v2676, %v2682
    %v2693 = vsub.f32 %v2677, %v2685
    %v2694 = vsub.f32 %v2678, %v2688
    %v2695 = vsub.f32 %v2679, %v2691
    %v2696 = vmul.f32 %v2692, 1.442695
    %v2697 = vpow.pop %v2696
    %v2698 = vmul.f32 %v2693, 1.442695
    %v2699 = vpow.pop %v2698
    %v2700 = vmul.f32 %v2694, 1.442695
    %v2701 = vpow.pop %v2700
    %v2702 = vmul.f32 %v2695, 1.442695
    %v2703 = vpow.pop %v2702
    %v2704 = vsel %vm293, %v2697, 0.0
    %2705 = vadd.xlane.f32.xlu0 %v2704
    %v2706 = vpop.xlane.xlu0 %2705
    %v2707 = vsel %vm293, %v2699, 0.0
    %2708 = vadd.xlane.f32.xlu0 %v2707
    %v2709 = vpop.xlane.xlu0 %2708
    %v2710 = vsel %vm293, %v2701, 0.0
    %2711 = vadd.xlane.f32.xlu0 %v2710
    %v2712 = vpop.xlane.xlu0 %2711
    %v2713 = vsel %vm293, %v2703, 0.0
    %2714 = vadd.xlane.f32.xlu0 %v2713
    %v2715 = vpop.xlane.xlu0 %2714
    %v2716 = vrcp.pop %v2706
    %v2717 = vmul.f32 %v2697, %v2716
    %v2718 = vrcp.pop %v2709
    %v2719 = vmul.f32 %v2699, %v2718
    %v2720 = vrcp.pop %v2712
    %v2721 = vmul.f32 %v2701, %v2720
    %v2722 = vrcp.pop %v2715
    %v2723 = vmul.f32 %v2703, %v2722
    %2724 = vrot.lane.b32.xlu0 %v2557, 96
    %v2725 = vpop.permute.xlu0 %2724
    %2726 = vrot.lane.b32.xlu0 %v2562, 96
    %v2727 = vpop.permute.xlu0 %2726
    %v2731 = vsel %vm293, %v2717, 0
    %v2734 = vsel %vm293, %v2719, 0
    %v2737 = vsel %vm293, %v2721, 0
    %v2740 = vsel %vm293, %v2723, 0
    %2742 = vmatprep.subr.mxu0 0.0
    %2743 = vmatpush1.msra.mxu0 %v2725
    %2744 = vmatprep.subr.mxu0 0.0
    %2745 = vmatpush1.msra.mxu0 %v2727
    %2746 = vmatprep.subr.mxu0 0.0
    %2747 = vmatpush1.msra.mxu0 0.0
    %2748 = vmatprep.subr.mxu0 0.0
    %2749 = vmatpush1.msra.mxu0 0.0
    %2750 = vmatprep.subr.mxu0 0.0
    %2751 = vmatpush1.msra.mxu0 0.0
    %2752 = vmatprep.subr.mxu0 0.0
    %2753 = vmatpush1.msra.mxu0 0.0
    %2754 = vmatprep.subr.mxu0 0.0
    %2755 = vmatpush1.msra.mxu0 0.0
    %2756 = vmatprep.subr.mxu0 0.0
    %2757 = vmatpush1.msra.mxu0 0.0
    %2758 = vmatprep.subr.mxu0 0.0
    %2759 = vmatpush1.msra.mxu0 0.0
    %2760 = vmatprep.subr.mxu0 0.0
    %2761 = vmatpush1.msra.mxu0 0.0
    %2762 = vmatprep.subr.mxu0 0.0
    %2763 = vmatpush1.msra.mxu0 0.0
    %2764 = vmatprep.subr.mxu0 0.0
    %2765 = vmatpush1.msra.mxu0 0.0
    %2766 = vmatprep.subr.mxu0 0.0
    %2767 = vmatpush1.msra.mxu0 0.0
    %2768 = vmatprep.subr.mxu0 0.0
    %2769 = vmatpush1.msra.mxu0 0.0
    %2770 = vmatprep.subr.mxu0 0.0
    %2771 = vmatpush1.msra.mxu0 0.0
    %2772 = vmatprep.subr.mxu0 0.0
    %2773 = vmatpush1.msra.mxu0 0.0
    %2774 = vmatprep.subr.mxu0 0.0
    %2775 = vmatpush1.msra.mxu0 0.0
    %2776 = vmatprep.subr.mxu0 0.0
    %2777 = vmatpush1.msra.mxu0 0.0
    %2778 = vmatprep.subr.mxu0 0.0
    %2779 = vmatpush1.msra.mxu0 0.0
    %2780 = vmatprep.subr.mxu0 0.0
    %2781 = vmatpush1.msra.mxu0 0.0
    %2782 = vmatprep.subr.mxu0 0.0
    %2783 = vmatpush1.msra.mxu0 0.0
    %2784 = vmatprep.subr.mxu0 0.0
    %2785 = vmatpush1.msra.mxu0 0.0
    %2786 = vmatprep.subr.mxu0 0.0
    %2787 = vmatpush1.msra.mxu0 0.0
    %2788 = vmatprep.subr.mxu0 0.0
    %2789 = vmatpush1.msra.mxu0 0.0
    %2790 = vmatprep.subr.mxu0 0.0
    %2791 = vmatpush1.msra.mxu0 0.0
    %2792 = vmatprep.subr.mxu0 0.0
    %2793 = vmatpush1.msra.mxu0 0.0
    %2794 = vmatprep.subr.mxu0 0.0
    %2795 = vmatpush1.msra.mxu0 0.0
    %2796 = vmatprep.subr.mxu0 0.0
    %2797 = vmatpush1.msra.mxu0 0.0
    %2798 = vmatprep.subr.mxu0 0.0
    %2799 = vmatpush1.msra.mxu0 0.0
    %2800 = vmatprep.subr.mxu0 0.0
    %2801 = vmatpush1.msra.mxu0 0.0
    %2802 = vmatprep.subr.mxu0 0.0
    %2803 = vmatpush1.msra.mxu0 0.0
    %2804 = vmatprep.subr.mxu0 0.0
    %2805 = vmatpush1.msra.mxu0 0.0
    %2806 = vmatprep.mubr.f32.mxu0 0.0
    %2807 = vmatmul.mubr.f32.gmra.mrb[0].mxu0 %v2731
    %v2808 = vpop.f32.mrb[0].mxu0
    %v2809 = vadd.f32 0.0, %v2808
    %v2810 = vpop.f32.mrb[0].mxu0
    %2811 = vmatprep.mubr.f32.mxu0 0.0
    %2812 = vmatmul.mubr.f32.gmra.mrb[0].mxu0 %v2734
    %v2813 = vpop.f32.mrb[0].mxu0
    %v2814 = vadd.f32 0.0, %v2813
    %v2815 = vpop.f32.mrb[0].mxu0
    %2816 = vmatprep.mubr.f32.mxu0 0.0
    %2817 = vmatmul.mubr.f32.gmra.mrb[0].mxu0 %v2737
    %v2818 = vpop.f32.mrb[0].mxu0
    %v2819 = vadd.f32 0.0, %v2818
    %v2820 = vpop.f32.mrb[0].mxu0
    %2821 = vmatprep.mubr.f32.mxu0 0.0
    %2822 = vmatmul.mubr.f32.gmra.mrb[0].mxu0 %v2740
    %v2823 = vpop.f32.mrb[0].mxu0
    %v2824 = vadd.f32 0.0, %v2823
    %v2825 = vpop.f32.mrb[0].mxu0
    %2826 = vdwg.mxu0
    %2827 = vrot.lane.b32.xlu0 %v2447, 112
    %v2828 = vpop.permute.xlu0 %2827
    %2829 = vrot.lane.b32.xlu0 %v2452, 112
    %v2830 = vpop.permute.xlu0 %2829
    %2831 = vrot.lane.b32.xlu0 %v2457, 112
    %v2832 = vpop.permute.xlu0 %2831
    %2833 = vrot.lane.b32.xlu0 %v2462, 112
    %v2834 = vpop.permute.xlu0 %2833
    %2835 = vrot.lane.b32.xlu0 %v2557, 112
    %v2836 = vpop.permute.xlu0 %2835
    %2837 = vrot.lane.b32.xlu0 %v2562, 112
    %v2838 = vpop.permute.xlu0 %2837
    %v2839 = vsel %vm293, %v2828, 0
    %v2841 = vsel %vm293, %v2830, 0
    %v2843 = vsel %vm293, %v2832, 0
    %v2845 = vsel %vm293, %v2834, 0
    %v2847 = vsel %vm293, %v2836, 0
    %v2849 = vsel %vm293, %v2838, 0
    %2851 = vmatprep.subr.mxu0 0.0
    %2852 = vmatpush1.xpose.msra.mxu0 %v2847
    %2853 = vmatprep.subr.mxu0 0.0
    %2854 = vmatpush1.xpose.msra.mxu0 %v2849
    %2855 = vmatprep.subr.mxu0 0.0
    %2856 = vmatpush1.xpose.msra.mxu0 0.0
    %2857 = vmatprep.subr.mxu0 0.0
    %2858 = vmatpush1.xpose.msra.mxu0 0.0
    %2859 = vmatprep.subr.mxu0 0.0
    %2860 = vmatpush1.xpose.msra.mxu0 0.0
    %2861 = vmatprep.subr.mxu0 0.0
    %2862 = vmatpush1.xpose.msra.mxu0 0.0
    %2863 = vmatprep.subr.mxu0 0.0
    %2864 = vmatpush1.xpose.msra.mxu0 0.0
    %2865 = vmatprep.subr.mxu0 0.0
    %2866 = vmatpush1.xpose.msra.mxu0 0.0
    %2867 = vmatprep.subr.mxu0 0.0
    %2868 = vmatpush1.xpose.msra.mxu0 0.0
    %2869 = vmatprep.subr.mxu0 0.0
    %2870 = vmatpush1.xpose.msra.mxu0 0.0
    %2871 = vmatprep.subr.mxu0 0.0
    %2872 = vmatpush1.xpose.msra.mxu0 0.0
    %2873 = vmatprep.subr.mxu0 0.0
    %2874 = vmatpush1.xpose.msra.mxu0 0.0
    %2875 = vmatprep.subr.mxu0 0.0
    %2876 = vmatpush1.xpose.msra.mxu0 0.0
    %2877 = vmatprep.subr.mxu0 0.0
    %2878 = vmatpush1.xpose.msra.mxu0 0.0
    %2879 = vmatprep.subr.mxu0 0.0
    %2880 = vmatpush1.xpose.msra.mxu0 0.0
    %2881 = vmatprep.subr.mxu0 0.0
    %2882 = vmatpush1.xpose.msra.mxu0 0.0
    %2883 = vmatprep.subr.mxu0 0.0
    %2884 = vmatpush1.xpose.msra.mxu0 0.0
    %2885 = vmatprep.subr.mxu0 0.0
    %2886 = vmatpush1.xpose.msra.mxu0 0.0
    %2887 = vmatprep.subr.mxu0 0.0
    %2888 = vmatpush1.xpose.msra.mxu0 0.0
    %2889 = vmatprep.subr.mxu0 0.0
    %2890 = vmatpush1.xpose.msra.mxu0 0.0
    %2891 = vmatprep.subr.mxu0 0.0
    %2892 = vmatpush1.xpose.msra.mxu0 0.0
    %2893 = vmatprep.subr.mxu0 0.0
    %2894 = vmatpush1.xpose.msra.mxu0 0.0
    %2895 = vmatprep.subr.mxu0 0.0
    %2896 = vmatpush1.xpose.msra.mxu0 0.0
    %2897 = vmatprep.subr.mxu0 0.0
    %2898 = vmatpush1.xpose.msra.mxu0 0.0
    %2899 = vmatprep.subr.mxu0 0.0
    %2900 = vmatpush1.xpose.msra.mxu0 0.0
    %2901 = vmatprep.subr.mxu0 0.0
    %2902 = vmatpush1.xpose.msra.mxu0 0.0
    %2903 = vmatprep.subr.mxu0 0.0
    %2904 = vmatpush1.xpose.msra.mxu0 0.0
    %2905 = vmatprep.subr.mxu0 0.0
    %2906 = vmatpush1.xpose.msra.mxu0 0.0
    %2907 = vmatprep.subr.mxu0 0.0
    %2908 = vmatpush1.xpose.msra.mxu0 0.0
    %2909 = vmatprep.subr.mxu0 0.0
    %2910 = vmatpush1.xpose.msra.mxu0 0.0
    %2911 = vmatprep.subr.mxu0 0.0
    %2912 = vmatpush1.xpose.msra.mxu0 0.0
    %2913 = vmatprep.subr.mxu0 0.0
    %2914 = vmatpush1.xpose.msra.mxu0 0.0
    %2915 = vmatprep.mubr.f32.mxu0 0.0
    %2916 = vmatmul.mubr.f32.gmra.mrb[0].mxu0 %v2839
    %v2917 = vpop.f32.mrb[0].mxu0
    %v2918 = vadd.f32 0.0, %v2917
    %v2919 = vpop.f32.mrb[0].mxu0
    %2920 = vmatprep.mubr.f32.mxu0 0.0
    %2921 = vmatmul.mubr.f32.gmra.mrb[0].mxu0 %v2841
    %v2922 = vpop.f32.mrb[0].mxu0
    %v2923 = vadd.f32 0.0, %v2922
    %v2924 = vpop.f32.mrb[0].mxu0
    %2925 = vmatprep.mubr.f32.mxu0 0.0
    %2926 = vmatmul.mubr.f32.gmra.mrb[0].mxu0 %v2843
    %v2927 = vpop.f32.mrb[0].mxu0
    %v2928 = vadd.f32 0.0, %v2927
    %v2929 = vpop.f32.mrb[0].mxu0
    %2930 = vmatprep.mubr.f32.mxu0 0.0
    %2931 = vmatmul.mubr.f32.gmra.mrb[0].mxu0 %v2845
    %v2932 = vpop.f32.mrb[0].mxu0
    %v2933 = vadd.f32 0.0, %v2932
    %v2934 = vpop.f32.mrb[0].mxu0
    %2935 = vdwg.mxu0
    %v2936 = vmul.f32 %v2918, 0.25
    %v2937 = vmul.f32 %v2923, 0.25
    %v2938 = vmul.f32 %v2928, 0.25
    %v2939 = vmul.f32 %v2933, 0.25
    %v2940 = vadd.f32 %v2936, %v1193
    %v2941 = vadd.f32 %v2937, %v1194
    %v2942 = vadd.f32 %v2938, %v1195
    %v2943 = vadd.f32 %v2939, %v1196
    %v2944 = vsel %vm293, %v2940, -inf
    %2945 = vmax.xlane.f32.xlu0 %v2944
    %v2946 = vpop.xlane.xlu0 %2945
    %v2947 = vsel %vm293, %v2941, -inf
    %2948 = vmax.xlane.f32.xlu0 %v2947
    %v2949 = vpop.xlane.xlu0 %2948
    %v2950 = vsel %vm293, %v2942, -inf
    %2951 = vmax.xlane.f32.xlu0 %v2950
    %v2952 = vpop.xlane.xlu0 %2951
    %v2953 = vsel %vm293, %v2943, -inf
    %2954 = vmax.xlane.f32.xlu0 %v2953
    %v2955 = vpop.xlane.xlu0 %2954
    %v2956 = vsub.f32 %v2940, %v2946
    %v2957 = vsub.f32 %v2941, %v2949
    %v2958 = vsub.f32 %v2942, %v2952
    %v2959 = vsub.f32 %v2943, %v2955
    %v2960 = vmul.f32 %v2956, 1.442695
    %v2961 = vpow.pop %v2960
    %v2962 = vmul.f32 %v2957, 1.442695
    %v2963 = vpow.pop %v2962
    %v2964 = vmul.f32 %v2958, 1.442695
    %v2965 = vpow.pop %v2964
    %v2966 = vmul.f32 %v2959, 1.442695
    %v2967 = vpow.pop %v2966
    %v2968 = vsel %vm293, %v2961, 0.0
    %2969 = vadd.xlane.f32.xlu0 %v2968
    %v2970 = vpop.xlane.xlu0 %2969
    %v2971 = vsel %vm293, %v2963, 0.0
    %2972 = vadd.xlane.f32.xlu0 %v2971
    %v2973 = vpop.xlane.xlu0 %2972
    %v2974 = vsel %vm293, %v2965, 0.0
    %2975 = vadd.xlane.f32.xlu0 %v2974
    %v2976 = vpop.xlane.xlu0 %2975
    %v2977 = vsel %vm293, %v2967, 0.0
    %2978 = vadd.xlane.f32.xlu0 %v2977
    %v2979 = vpop.xlane.xlu0 %2978
    %v2980 = vrcp.pop %v2970
    %v2981 = vmul.f32 %v2961, %v2980
    %v2982 = vrcp.pop %v2973
    %v2983 = vmul.f32 %v2963, %v2982
    %v2984 = vrcp.pop %v2976
    %v2985 = vmul.f32 %v2965, %v2984
    %v2986 = vrcp.pop %v2979
    %v2987 = vmul.f32 %v2967, %v2986
    %2988 = vrot.lane.b32.xlu0 %v2557, 80
    %v2989 = vpop.permute.xlu0 %2988
    %2990 = vrot.lane.b32.xlu0 %v2562, 80
    %v2991 = vpop.permute.xlu0 %2990
    %v2995 = vsel %vm293, %v2981, 0
    %v2998 = vsel %vm293, %v2983, 0
    %v3001 = vsel %vm293, %v2985, 0
    %v3004 = vsel %vm293, %v2987, 0
    %3006 = vmatprep.subr.mxu0 0.0
    %3007 = vmatpush1.msra.mxu0 %v2989
    %3008 = vmatprep.subr.mxu0 0.0
    %3009 = vmatpush1.msra.mxu0 %v2991
    %3010 = vmatprep.subr.mxu0 0.0
    %3011 = vmatpush1.msra.mxu0 0.0
    %3012 = vmatprep.subr.mxu0 0.0
    %3013 = vmatpush1.msra.mxu0 0.0
    %3014 = vmatprep.subr.mxu0 0.0
    %3015 = vmatpush1.msra.mxu0 0.0
    %3016 = vmatprep.subr.mxu0 0.0
    %3017 = vmatpush1.msra.mxu0 0.0
    %3018 = vmatprep.subr.mxu0 0.0
    %3019 = vmatpush1.msra.mxu0 0.0
    %3020 = vmatprep.subr.mxu0 0.0
    %3021 = vmatpush1.msra.mxu0 0.0
    %3022 = vmatprep.subr.mxu0 0.0
    %3023 = vmatpush1.msra.mxu0 0.0
    %3024 = vmatprep.subr.mxu0 0.0
    %3025 = vmatpush1.msra.mxu0 0.0
    %3026 = vmatprep.subr.mxu0 0.0
    %3027 = vmatpush1.msra.mxu0 0.0
    %3028 = vmatprep.subr.mxu0 0.0
    %3029 = vmatpush1.msra.mxu0 0.0
    %3030 = vmatprep.subr.mxu0 0.0
    %3031 = vmatpush1.msra.mxu0 0.0
    %3032 = vmatprep.subr.mxu0 0.0
    %3033 = vmatpush1.msra.mxu0 0.0
    %3034 = vmatprep.subr.mxu0 0.0
    %3035 = vmatpush1.msra.mxu0 0.0
    %3036 = vmatprep.subr.mxu0 0.0
    %3037 = vmatpush1.msra.mxu0 0.0
    %3038 = vmatprep.subr.mxu0 0.0
    %3039 = vmatpush1.msra.mxu0 0.0
    %3040 = vmatprep.subr.mxu0 0.0
    %3041 = vmatpush1.msra.mxu0 0.0
    %3042 = vmatprep.subr.mxu0 0.0
    %3043 = vmatpush1.msra.mxu0 0.0
    %3044 = vmatprep.subr.mxu0 0.0
    %3045 = vmatpush1.msra.mxu0 0.0
    %3046 = vmatprep.subr.mxu0 0.0
    %3047 = vmatpush1.msra.mxu0 0.0
    %3048 = vmatprep.subr.mxu0 0.0
    %3049 = vmatpush1.msra.mxu0 0.0
    %3050 = vmatprep.subr.mxu0 0.0
    %3051 = vmatpush1.msra.mxu0 0.0
    %3052 = vmatprep.subr.mxu0 0.0
    %3053 = vmatpush1.msra.mxu0 0.0
    %3054 = vmatprep.subr.mxu0 0.0
    %3055 = vmatpush1.msra.mxu0 0.0
    %3056 = vmatprep.subr.mxu0 0.0
    %3057 = vmatpush1.msra.mxu0 0.0
    %3058 = vmatprep.subr.mxu0 0.0
    %3059 = vmatpush1.msra.mxu0 0.0
    %3060 = vmatprep.subr.mxu0 0.0
    %3061 = vmatpush1.msra.mxu0 0.0
    %3062 = vmatprep.subr.mxu0 0.0
    %3063 = vmatpush1.msra.mxu0 0.0
    %3064 = vmatprep.subr.mxu0 0.0
    %3065 = vmatpush1.msra.mxu0 0.0
    %3066 = vmatprep.subr.mxu0 0.0
    %3067 = vmatpush1.msra.mxu0 0.0
    %3068 = vmatprep.subr.mxu0 0.0
    %3069 = vmatpush1.msra.mxu0 0.0
    %3070 = vmatprep.mubr.f32.mxu0 0.0
    %3071 = vmatmul.mubr.f32.gmra.mrb[0].mxu0 %v2995
    %v3072 = vpop.f32.mrb[0].mxu0
    %v3073 = vadd.f32 0.0, %v3072
    %v3074 = vpop.f32.mrb[0].mxu0
    %3075 = vmatprep.mubr.f32.mxu0 0.0
    %3076 = vmatmul.mubr.f32.gmra.mrb[0].mxu0 %v2998
    %v3077 = vpop.f32.mrb[0].mxu0
    %v3078 = vadd.f32 0.0, %v3077
    %v3079 = vpop.f32.mrb[0].mxu0
    %3080 = vmatprep.mubr.f32.mxu0 0.0
    %3081 = vmatmul.mubr.f32.gmra.mrb[0].mxu0 %v3001
    %v3082 = vpop.f32.mrb[0].mxu0
    %v3083 = vadd.f32 0.0, %v3082
    %v3084 = vpop.f32.mrb[0].mxu0
    %3085 = vmatprep.mubr.f32.mxu0 0.0
    %3086 = vmatmul.mubr.f32.gmra.mrb[0].mxu0 %v3004
    %v3087 = vpop.f32.mrb[0].mxu0
    %v3088 = vadd.f32 0.0, %v3087
    %v3089 = vpop.f32.mrb[0].mxu0
    %3090 = vdwg.mxu0
    %v3092 = vsel %vm293, %v3073, 0
    %v3095 = vsel %vm293, %v3078, 0
    %v3098 = vsel %vm293, %v3083, 0
    %v3101 = vsel %vm293, %v3088, 0
    %3103 = vmatprep.subr.mxu0 0.0
    %3104 = vmatpush1.msra.mxu0 %v2567
    %3105 = vmatprep.subr.mxu0 0.0
    %3106 = vmatpush1.msra.mxu0 %v2568
    %3107 = vmatprep.subr.mxu0 0.0
    %3108 = vmatpush1.msra.mxu0 0.0
    %3109 = vmatprep.subr.mxu0 0.0
    %3110 = vmatpush1.msra.mxu0 0.0
    %3111 = vmatprep.subr.mxu0 0.0
    %3112 = vmatpush1.msra.mxu0 0.0
    %3113 = vmatprep.subr.mxu0 0.0
    %3114 = vmatpush1.msra.mxu0 0.0
    %3115 = vmatprep.subr.mxu0 0.0
    %3116 = vmatpush1.msra.mxu0 0.0
    %3117 = vmatprep.subr.mxu0 0.0
    %3118 = vmatpush1.msra.mxu0 0.0
    %3119 = vmatprep.subr.mxu0 0.0
    %3120 = vmatpush1.msra.mxu0 0.0
    %3121 = vmatprep.subr.mxu0 0.0
    %3122 = vmatpush1.msra.mxu0 0.0
    %3123 = vmatprep.subr.mxu0 0.0
    %3124 = vmatpush1.msra.mxu0 0.0
    %3125 = vmatprep.subr.mxu0 0.0
    %3126 = vmatpush1.msra.mxu0 0.0
    %3127 = vmatprep.subr.mxu0 0.0
    %3128 = vmatpush1.msra.mxu0 0.0
    %3129 = vmatprep.subr.mxu0 0.0
    %3130 = vmatpush1.msra.mxu0 0.0
    %3131 = vmatprep.subr.mxu0 0.0
    %3132 = vmatpush1.msra.mxu0 0.0
    %3133 = vmatprep.subr.mxu0 0.0
    %3134 = vmatpush1.msra.mxu0 0.0
    %3135 = vmatprep.subr.mxu0 0.0
    %3136 = vmatpush1.msra.mxu0 0.0
    %3137 = vmatprep.subr.mxu0 0.0
    %3138 = vmatpush1.msra.mxu0 0.0
    %3139 = vmatprep.subr.mxu0 0.0
    %3140 = vmatpush1.msra.mxu0 0.0
    %3141 = vmatprep.subr.mxu0 0.0
    %3142 = vmatpush1.msra.mxu0 0.0
    %3143 = vmatprep.subr.mxu0 0.0
    %3144 = vmatpush1.msra.mxu0 0.0
    %3145 = vmatprep.subr.mxu0 0.0
    %3146 = vmatpush1.msra.mxu0 0.0
    %3147 = vmatprep.subr.mxu0 0.0
    %3148 = vmatpush1.msra.mxu0 0.0
    %3149 = vmatprep.subr.mxu0 0.0
    %3150 = vmatpush1.msra.mxu0 0.0
    %3151 = vmatprep.subr.mxu0 0.0
    %3152 = vmatpush1.msra.mxu0 0.0
    %3153 = vmatprep.subr.mxu0 0.0
    %3154 = vmatpush1.msra.mxu0 0.0
    %3155 = vmatprep.subr.mxu0 0.0
    %3156 = vmatpush1.msra.mxu0 0.0
    %3157 = vmatprep.subr.mxu0 0.0
    %3158 = vmatpush1.msra.mxu0 0.0
    %3159 = vmatprep.subr.mxu0 0.0
    %3160 = vmatpush1.msra.mxu0 0.0
    %3161 = vmatprep.subr.mxu0 0.0
    %3162 = vmatpush1.msra.mxu0 0.0
    %3163 = vmatprep.subr.mxu0 0.0
    %3164 = vmatpush1.msra.mxu0 0.0
    %3165 = vmatprep.subr.mxu0 0.0
    %3166 = vmatpush1.msra.mxu0 0.0
    %3167 = vmatprep.mubr.f32.mxu0 0.0
    %3168 = vmatmul.mubr.f32.gmra.mrb[0].mxu0 %v3092
    %v3169 = vpop.f32.mrb[0].mxu0
    %v3170 = vadd.f32 0.0, %v3169
    %v3171 = vpop.f32.mrb[0].mxu0
    %3172 = vmatprep.mubr.f32.mxu0 0.0
    %3173 = vmatmul.mubr.f32.gmra.mrb[0].mxu0 %v3095
    %v3174 = vpop.f32.mrb[0].mxu0
    %v3175 = vadd.f32 0.0, %v3174
    %v3176 = vpop.f32.mrb[0].mxu0
    %3177 = vmatprep.mubr.f32.mxu0 0.0
    %3178 = vmatmul.mubr.f32.gmra.mrb[0].mxu0 %v3098
    %v3179 = vpop.f32.mrb[0].mxu0
    %v3180 = vadd.f32 0.0, %v3179
    %v3181 = vpop.f32.mrb[0].mxu0
    %3182 = vmatprep.mubr.f32.mxu0 0.0
    %3183 = vmatmul.mubr.f32.gmra.mrb[0].mxu0 %v3101
    %v3184 = vpop.f32.mrb[0].mxu0
    %v3185 = vadd.f32 0.0, %v3184
    %v3186 = vpop.f32.mrb[0].mxu0
    %3187 = vdwg.mxu0
    %v3189 = vsel %vm293, %v2809, 0
    %v3192 = vsel %vm293, %v2814, 0
    %v3195 = vsel %vm293, %v2819, 0
    %v3198 = vsel %vm293, %v2824, 0
    %3200 = vmatprep.subr.mxu0 0.0
    %3201 = vmatpush1.msra.mxu0 %v2565
    %3202 = vmatprep.subr.mxu0 0.0
    %3203 = vmatpush1.msra.mxu0 %v2566
    %3204 = vmatprep.subr.mxu0 0.0
    %3205 = vmatpush1.msra.mxu0 0.0
    %3206 = vmatprep.subr.mxu0 0.0
    %3207 = vmatpush1.msra.mxu0 0.0
    %3208 = vmatprep.subr.mxu0 0.0
    %3209 = vmatpush1.msra.mxu0 0.0
    %3210 = vmatprep.subr.mxu0 0.0
    %3211 = vmatpush1.msra.mxu0 0.0
    %3212 = vmatprep.subr.mxu0 0.0
    %3213 = vmatpush1.msra.mxu0 0.0
    %3214 = vmatprep.subr.mxu0 0.0
    %3215 = vmatpush1.msra.mxu0 0.0
    %3216 = vmatprep.subr.mxu0 0.0
    %3217 = vmatpush1.msra.mxu0 0.0
    %3218 = vmatprep.subr.mxu0 0.0
    %3219 = vmatpush1.msra.mxu0 0.0
    %3220 = vmatprep.subr.mxu0 0.0
    %3221 = vmatpush1.msra.mxu0 0.0
    %3222 = vmatprep.subr.mxu0 0.0
    %3223 = vmatpush1.msra.mxu0 0.0
    %3224 = vmatprep.subr.mxu0 0.0
    %3225 = vmatpush1.msra.mxu0 0.0
    %3226 = vmatprep.subr.mxu0 0.0
    %3227 = vmatpush1.msra.mxu0 0.0
    %3228 = vmatprep.subr.mxu0 0.0
    %3229 = vmatpush1.msra.mxu0 0.0
    %3230 = vmatprep.subr.mxu0 0.0
    %3231 = vmatpush1.msra.mxu0 0.0
    %3232 = vmatprep.subr.mxu0 0.0
    %3233 = vmatpush1.msra.mxu0 0.0
    %3234 = vmatprep.subr.mxu0 0.0
    %3235 = vmatpush1.msra.mxu0 0.0
    %3236 = vmatprep.subr.mxu0 0.0
    %3237 = vmatpush1.msra.mxu0 0.0
    %3238 = vmatprep.subr.mxu0 0.0
    %3239 = vmatpush1.msra.mxu0 0.0
    %3240 = vmatprep.subr.mxu0 0.0
    %3241 = vmatpush1.msra.mxu0 0.0
    %3242 = vmatprep.subr.mxu0 0.0
    %3243 = vmatpush1.msra.mxu0 0.0
    %3244 = vmatprep.subr.mxu0 0.0
    %3245 = vmatpush1.msra.mxu0 0.0
    %3246 = vmatprep.subr.mxu0 0.0
    %3247 = vmatpush1.msra.mxu0 0.0
    %3248 = vmatprep.subr.mxu0 0.0
    %3249 = vmatpush1.msra.mxu0 0.0
    %3250 = vmatprep.subr.mxu0 0.0
    %3251 = vmatpush1.msra.mxu0 0.0
    %3252 = vmatprep.subr.mxu0 0.0
    %3253 = vmatpush1.msra.mxu0 0.0
    %3254 = vmatprep.subr.mxu0 0.0
    %3255 = vmatpush1.msra.mxu0 0.0
    %3256 = vmatprep.subr.mxu0 0.0
    %3257 = vmatpush1.msra.mxu0 0.0
    %3258 = vmatprep.subr.mxu0 0.0
    %3259 = vmatpush1.msra.mxu0 0.0
    %3260 = vmatprep.subr.mxu0 0.0
    %3261 = vmatpush1.msra.mxu0 0.0
    %3262 = vmatprep.subr.mxu0 0.0
    %3263 = vmatpush1.msra.mxu0 0.0
    %3264 = vmatprep.mubr.f32.mxu0 0.0
    %3265 = vmatmul.mubr.f32.gmra.mrb[0].mxu0 %v3189
    %v3266 = vpop.f32.mrb[0].mxu0
    %v3267 = vadd.f32 %v3170, %v3266
    %v3268 = vpop.f32.mrb[0].mxu0
    %3269 = vmatprep.mubr.f32.mxu0 0.0
    %3270 = vmatmul.mubr.f32.gmra.mrb[0].mxu0 %v3192
    %v3271 = vpop.f32.mrb[0].mxu0
    %v3272 = vadd.f32 %v3175, %v3271
    %v3273 = vpop.f32.mrb[0].mxu0
    %3274 = vmatprep.mubr.f32.mxu0 0.0
    %3275 = vmatmul.mubr.f32.gmra.mrb[0].mxu0 %v3195
    %v3276 = vpop.f32.mrb[0].mxu0
    %v3277 = vadd.f32 %v3180, %v3276
    %v3278 = vpop.f32.mrb[0].mxu0
    %3279 = vmatprep.mubr.f32.mxu0 0.0
    %3280 = vmatmul.mubr.f32.gmra.mrb[0].mxu0 %v3198
    %v3281 = vpop.f32.mrb[0].mxu0
    %v3282 = vadd.f32 %v3185, %v3281
    %v3283 = vpop.f32.mrb[0].mxu0
    %3284 = vdwg.mxu0
    %v3285 = vld [vmem:[%s19] sm:$0x1]
    %v3287 = vlaneseq
    %v3288 = vshrl.u32 %v3287, 7
    %v3289 = vsub.s32 0, %v3288
    %v3290 = vrot.slane %v3285, %v3289
    %v3292 = vadd.f32 %v3267, %v3290
    %v3293 = vadd.f32 %v3272, %v3290
    %v3294 = vadd.f32 %v3277, %v3290
    %v3295 = vadd.f32 %v3282, %v3290
    %v3296 = vadd.f32 %v2353, %v3292
    %v3297 = vadd.f32 %v2354, %v3293
    %v3298 = vadd.f32 %v2355, %v3294
    %v3299 = vadd.f32 %v2356, %v3295
    %v3300 = vld [vmem:[%s41] sm:$0x1]
    %v3301 = vld [vmem:[%s39] sm:$0x1]
    %v3302 = vsel %vm201, %v3296, 0.0
    %3303 = vadd.xlane.f32.xlu0 %v3302
    %v3304 = vpop.xlane.xlu0 %3303
    %v3305 = vsel %vm201, %v3297, 0.0
    %3306 = vadd.xlane.f32.xlu0 %v3305
    %v3307 = vpop.xlane.xlu0 %3306
    %v3308 = vsel %vm201, %v3298, 0.0
    %3309 = vadd.xlane.f32.xlu0 %v3308
    %v3310 = vpop.xlane.xlu0 %3309
    %v3311 = vsel %vm201, %v3299, 0.0
    %3312 = vadd.xlane.f32.xlu0 %v3311
    %v3313 = vpop.xlane.xlu0 %3312
    %v3314 = vmul.f32 %v3304, %v875
    %v3315 = vmul.f32 %v3307, %v875
    %v3316 = vmul.f32 %v3310, %v875
    %v3317 = vmul.f32 %v3313, %v875
    %v3318 = vsub.f32 %v3296, %v3314
    %v3319 = vsub.f32 %v3297, %v3315
    %v3320 = vsub.f32 %v3298, %v3316
    %v3321 = vsub.f32 %v3299, %v3317
    %v3322 = vmul.f32 %v3318, %v3318
    %v3323 = vmul.f32 %v3319, %v3319
    %v3324 = vmul.f32 %v3320, %v3320
    %v3325 = vmul.f32 %v3321, %v3321
    %v3326 = vsel %vm201, %v3322, 0.0
    %3327 = vadd.xlane.f32.xlu0 %v3326
    %v3328 = vpop.xlane.xlu0 %3327
    %v3329 = vsel %vm201, %v3323, 0.0
    %3330 = vadd.xlane.f32.xlu0 %v3329
    %v3331 = vpop.xlane.xlu0 %3330
    %v3332 = vsel %vm201, %v3324, 0.0
    %3333 = vadd.xlane.f32.xlu0 %v3332
    %v3334 = vpop.xlane.xlu0 %3333
    %v3335 = vsel %vm201, %v3325, 0.0
    %3336 = vadd.xlane.f32.xlu0 %v3335
    %v3337 = vpop.xlane.xlu0 %3336
    %v3338 = vmul.f32 %v3328, %v875
    %v3339 = vmul.f32 %v3331, %v875
    %v3340 = vmul.f32 %v3334, %v875
    %v3341 = vmul.f32 %v3337, %v875
    %v3342 = vadd.f32 %v3338, 1e-05
    %v3343 = vadd.f32 %v3339, 1e-05
    %v3344 = vadd.f32 %v3340, 1e-05
    %v3345 = vadd.f32 %v3341, 1e-05
    %v3346 = vrsqrt.pop %v3342
    %v3347 = vrsqrt.pop %v3343
    %v3348 = vrsqrt.pop %v3344
    %v3349 = vrsqrt.pop %v3345
    %v3350 = vmul.f32 %v3318, %v3346
    %v3351 = vmul.f32 %v3319, %v3347
    %v3352 = vmul.f32 %v3320, %v3348
    %v3353 = vmul.f32 %v3321, %v3349
    %v3355 = vlaneseq
    %v3356 = vshrl.u32 %v3355, 7
    %v3357 = vsub.s32 0, %v3356
    %v3358 = vrot.slane %v3300, %v3357
    %v3360 = vmul.f32 %v3350, %v3358
    %v3361 = vmul.f32 %v3351, %v3358
    %v3362 = vmul.f32 %v3352, %v3358
    %v3363 = vmul.f32 %v3353, %v3358
    %v3365 = vlaneseq
    %v3366 = vshrl.u32 %v3365, 7
    %v3367 = vsub.s32 0, %v3366
    %v3368 = vrot.slane %v3301, %v3367
    %v3370 = vadd.f32 %v3360, %v3368
    %v3371 = vadd.f32 %v3361, %v3368
    %v3372 = vadd.f32 %v3362, %v3368
    %v3373 = vadd.f32 %v3363, %v3368
    %v3374 = vld [vmem:[%s31] sm:$0xff]
    %v3375 = vld [vmem:[%s31 + $0x8] sm:$0xff]
    %v3376 = vld [vmem:[%s31 + $0x10] sm:$0xff]
    %v3377 = vld [vmem:[%s31 + $0x18] sm:$0xff]
    %v3378 = vld [vmem:[%s27] sm:$0x1]
    %v3380 = vlaneseq
    %v3381 = vshrl.u32 %v3380, 7
    %v3382 = vsub.s32 0, %v3381
    %v3383 = vrot.slane %v3378, %v3382
    %v3386 = vsel %vm201, %v3370, 0
    %v3389 = vsel %vm201, %v3371, 0
    %v3392 = vsel %vm201, %v3372, 0
    %v3395 = vsel %vm201, %v3373, 0
    %3397 = vmatprep.subr.mxu0 0.0
    %3398 = vmatpush1.msra.mxu0 %v3374
    %3399 = vmatprep.subr.mxu0 0.0
    %3400 = vmatpush1.msra.mxu0 %v3375
    %3401 = vmatprep.subr.mxu0 0.0
    %3402 = vmatpush1.msra.mxu0 %v3376
    %3403 = vmatprep.subr.mxu0 0.0
    %3404 = vmatpush1.msra.mxu0 %v3377
    %3405 = vmatprep.subr.mxu0 0.0
    %3406 = vmatpush1.msra.mxu0 0.0
    %3407 = vmatprep.subr.mxu0 0.0
    %3408 = vmatpush1.msra.mxu0 0.0
    %3409 = vmatprep.subr.mxu0 0.0
    %3410 = vmatpush1.msra.mxu0 0.0
    %3411 = vmatprep.subr.mxu0 0.0
    %3412 = vmatpush1.msra.mxu0 0.0
    %3413 = vmatprep.subr.mxu0 0.0
    %3414 = vmatpush1.msra.mxu0 0.0
    %3415 = vmatprep.subr.mxu0 0.0
    %3416 = vmatpush1.msra.mxu0 0.0
    %3417 = vmatprep.subr.mxu0 0.0
    %3418 = vmatpush1.msra.mxu0 0.0
    %3419 = vmatprep.subr.mxu0 0.0
    %3420 = vmatpush1.msra.mxu0 0.0
    %3421 = vmatprep.subr.mxu0 0.0
    %3422 = vmatpush1.msra.mxu0 0.0
    %3423 = vmatprep.subr.mxu0 0.0
    %3424 = vmatpush1.msra.mxu0 0.0
    %3425 = vmatprep.subr.mxu0 0.0
    %3426 = vmatpush1.msra.mxu0 0.0
    %3427 = vmatprep.subr.mxu0 0.0
    %3428 = vmatpush1.msra.mxu0 0.0
    %3429 = vmatprep.subr.mxu0 0.0
    %3430 = vmatpush1.msra.mxu0 0.0
    %3431 = vmatprep.subr.mxu0 0.0
    %3432 = vmatpush1.msra.mxu0 0.0
    %3433 = vmatprep.subr.mxu0 0.0
    %3434 = vmatpush1.msra.mxu0 0.0
    %3435 = vmatprep.subr.mxu0 0.0
    %3436 = vmatpush1.msra.mxu0 0.0
    %3437 = vmatprep.subr.mxu0 0.0
    %3438 = vmatpush1.msra.mxu0 0.0
    %3439 = vmatprep.subr.mxu0 0.0
    %3440 = vmatpush1.msra.mxu0 0.0
    %3441 = vmatprep.subr.mxu0 0.0
    %3442 = vmatpush1.msra.mxu0 0.0
    %3443 = vmatprep.subr.mxu0 0.0
    %3444 = vmatpush1.msra.mxu0 0.0
    %3445 = vmatprep.subr.mxu0 0.0
    %3446 = vmatpush1.msra.mxu0 0.0
    %3447 = vmatprep.subr.mxu0 0.0
    %3448 = vmatpush1.msra.mxu0 0.0
    %3449 = vmatprep.subr.mxu0 0.0
    %3450 = vmatpush1.msra.mxu0 0.0
    %3451 = vmatprep.subr.mxu0 0.0
    %3452 = vmatpush1.msra.mxu0 0.0
    %3453 = vmatprep.subr.mxu0 0.0
    %3454 = vmatpush1.msra.mxu0 0.0
    %3455 = vmatprep.subr.mxu0 0.0
    %3456 = vmatpush1.msra.mxu0 0.0
    %3457 = vmatprep.subr.mxu0 0.0
    %3458 = vmatpush1.msra.mxu0 0.0
    %3459 = vmatprep.subr.mxu0 0.0
    %3460 = vmatpush1.msra.mxu0 0.0
    %3461 = vmatprep.mubr.f32.mxu0 0.0
    %3462 = vmatmul.mubr.f32.gmra.mrb[0].mxu0 %v3386
    %v3463 = vpop.f32.mrb[0].mxu0
    %v3464 = vadd.f32 %v3383, %v3463
    %v3465 = vpop.f32.mrb[0].mxu0
    %3466 = vmatprep.mubr.f32.mxu0 0.0
    %3467 = vmatmul.mubr.f32.gmra.mrb[0].mxu0 %v3389
    %v3468 = vpop.f32.mrb[0].mxu0
    %v3469 = vadd.f32 %v3383, %v3468
    %v3470 = vpop.f32.mrb[0].mxu0
    %3471 = vmatprep.mubr.f32.mxu0 0.0
    %3472 = vmatmul.mubr.f32.gmra.mrb[0].mxu0 %v3392
    %v3473 = vpop.f32.mrb[0].mxu0
    %v3474 = vadd.f32 %v3383, %v3473
    %v3475 = vpop.f32.mrb[0].mxu0
    %3476 = vmatprep.mubr.f32.mxu0 0.0
    %3477 = vmatmul.mubr.f32.gmra.mrb[0].mxu0 %v3395
    %v3478 = vpop.f32.mrb[0].mxu0
    %v3479 = vadd.f32 %v3383, %v3478
    %v3480 = vpop.f32.mrb[0].mxu0
    %3481 = vdwg.mxu0
    %v3482 = vmax.f32 %v3464, 0.0
    %v3483 = vmax.f32 %v3469, 0.0
    %v3484 = vmax.f32 %v3474, 0.0
    %v3485 = vmax.f32 %v3479, 0.0
    %v3486 = vld [vmem:[%s33] sm:$0xff]
    %v3487 = vld [vmem:[%s33 + $0x8] sm:$0xff]
    %v3488 = vld [vmem:[%s33 + $0x10] sm:$0xff]
    %v3489 = vld [vmem:[%s33 + $0x18] sm:$0xff]
    %v3490 = vld [vmem:[%s33 + $0x20] sm:$0xff]
    %v3491 = vld [vmem:[%s33 + $0x28] sm:$0xff]
    %v3492 = vld [vmem:[%s33 + $0x30] sm:$0xff]
    %v3493 = vld [vmem:[%s33 + $0x38] sm:$0xff]
    %v3494 = vld [vmem:[%s29] sm:$0x1]
    %v3496 = vlaneseq
    %v3497 = vshrl.u32 %v3496, 7
    %v3498 = vsub.s32 0, %v3497
    %v3499 = vrot.slane %v3494, %v3498
    %v3502 = vsel %vm1021, %v3482, 0
    %v3505 = vsel %vm1021, %v3483, 0
    %v3508 = vsel %vm1021, %v3484, 0
    %v3511 = vsel %vm1021, %v3485, 0
    %3513 = vmatprep.subr.mxu0 0.0
    %3514 = vmatpush1.msra.mxu0 %v3486
    %3515 = vmatprep.subr.mxu0 0.0
    %3516 = vmatpush1.msra.mxu0 %v3487
    %3517 = vmatprep.subr.mxu0 0.0
    %3518 = vmatpush1.msra.mxu0 %v3488
    %3519 = vmatprep.subr.mxu0 0.0
    %3520 = vmatpush1.msra.mxu0 %v3489
    %3521 = vmatprep.subr.mxu0 0.0
    %3522 = vmatpush1.msra.mxu0 %v3490
    %3523 = vmatprep.subr.mxu0 0.0
    %3524 = vmatpush1.msra.mxu0 %v3491
    %3525 = vmatprep.subr.mxu0 0.0
    %3526 = vmatpush1.msra.mxu0 %v3492
    %3527 = vmatprep.subr.mxu0 0.0
    %3528 = vmatpush1.msra.mxu0 %v3493
    %3529 = vmatprep.subr.mxu0 0.0
    %3530 = vmatpush1.msra.mxu0 0.0
    %3531 = vmatprep.subr.mxu0 0.0
    %3532 = vmatpush1.msra.mxu0 0.0
    %3533 = vmatprep.subr.mxu0 0.0
    %3534 = vmatpush1.msra.mxu0 0.0
    %3535 = vmatprep.subr.mxu0 0.0
    %3536 = vmatpush1.msra.mxu0 0.0
    %3537 = vmatprep.subr.mxu0 0.0
    %3538 = vmatpush1.msra.mxu0 0.0
    %3539 = vmatprep.subr.mxu0 0.0
    %3540 = vmatpush1.msra.mxu0 0.0
    %3541 = vmatprep.subr.mxu0 0.0
    %3542 = vmatpush1.msra.mxu0 0.0
    %3543 = vmatprep.subr.mxu0 0.0
    %3544 = vmatpush1.msra.mxu0 0.0
    %3545 = vmatprep.subr.mxu0 0.0
    %3546 = vmatpush1.msra.mxu0 0.0
    %3547 = vmatprep.subr.mxu0 0.0
    %3548 = vmatpush1.msra.mxu0 0.0
    %3549 = vmatprep.subr.mxu0 0.0
    %3550 = vmatpush1.msra.mxu0 0.0
    %3551 = vmatprep.subr.mxu0 0.0
    %3552 = vmatpush1.msra.mxu0 0.0
    %3553 = vmatprep.subr.mxu0 0.0
    %3554 = vmatpush1.msra.mxu0 0.0
    %3555 = vmatprep.subr.mxu0 0.0
    %3556 = vmatpush1.msra.mxu0 0.0
    %3557 = vmatprep.subr.mxu0 0.0
    %3558 = vmatpush1.msra.mxu0 0.0
    %3559 = vmatprep.subr.mxu0 0.0
    %3560 = vmatpush1.msra.mxu0 0.0
    %3561 = vmatprep.subr.mxu0 0.0
    %3562 = vmatpush1.msra.mxu0 0.0
    %3563 = vmatprep.subr.mxu0 0.0
    %3564 = vmatpush1.msra.mxu0 0.0
    %3565 = vmatprep.subr.mxu0 0.0
    %3566 = vmatpush1.msra.mxu0 0.0
    %3567 = vmatprep.subr.mxu0 0.0
    %3568 = vmatpush1.msra.mxu0 0.0
    %3569 = vmatprep.subr.mxu0 0.0
    %3570 = vmatpush1.msra.mxu0 0.0
    %3571 = vmatprep.subr.mxu0 0.0
    %3572 = vmatpush1.msra.mxu0 0.0
    %3573 = vmatprep.subr.mxu0 0.0
    %3574 = vmatpush1.msra.mxu0 0.0
    %3575 = vmatprep.subr.mxu0 0.0
    %3576 = vmatpush1.msra.mxu0 0.0
    %3577 = vmatprep.mubr.f32.mxu0 0.0
    %3578 = vmatmul.mubr.f32.gmra.mrb[0].mxu0 %v3502
    %v3579 = vpop.f32.mrb[0].mxu0
    %v3580 = vadd.f32 %v3499, %v3579
    %v3581 = vpop.f32.mrb[0].mxu0
    %3582 = vmatprep.mubr.f32.mxu0 0.0
    %3583 = vmatmul.mubr.f32.gmra.mrb[0].mxu0 %v3505
    %v3584 = vpop.f32.mrb[0].mxu0
    %v3585 = vadd.f32 %v3499, %v3584
    %v3586 = vpop.f32.mrb[0].mxu0
    %3587 = vmatprep.mubr.f32.mxu0 0.0
    %3588 = vmatmul.mubr.f32.gmra.mrb[0].mxu0 %v3508
    %v3589 = vpop.f32.mrb[0].mxu0
    %v3590 = vadd.f32 %v3499, %v3589
    %v3591 = vpop.f32.mrb[0].mxu0
    %3592 = vmatprep.mubr.f32.mxu0 0.0
    %3593 = vmatmul.mubr.f32.gmra.mrb[0].mxu0 %v3511
    %v3594 = vpop.f32.mrb[0].mxu0
    %v3595 = vadd.f32 %v3499, %v3594
    %v3596 = vpop.f32.mrb[0].mxu0
    %3597 = vdwg.mxu0
    %v3598 = vadd.f32 %v3370, %v3580
    %v3599 = vadd.f32 %v3371, %v3585
    %v3600 = vadd.f32 %v3372, %v3590
    %v3601 = vadd.f32 %v3373, %v3595
    %v3602 = vld [vmem:[%s45] sm:$0x1]
    %v3603 = vld [vmem:[%s43] sm:$0x1]
    %v3604 = vsel %vm201, %v3598, 0.0
    %3605 = vadd.xlane.f32.xlu0 %v3604
    %v3606 = vpop.xlane.xlu0 %3605
    %v3607 = vsel %vm201, %v3599, 0.0
    %3608 = vadd.xlane.f32.xlu0 %v3607
    %v3609 = vpop.xlane.xlu0 %3608
    %v3610 = vsel %vm201, %v3600, 0.0
    %3611 = vadd.xlane.f32.xlu0 %v3610
    %v3612 = vpop.xlane.xlu0 %3611
    %v3613 = vsel %vm201, %v3601, 0.0
    %3614 = vadd.xlane.f32.xlu0 %v3613
    %v3615 = vpop.xlane.xlu0 %3614
    %v3616 = vmul.f32 %v3606, %v875
    %v3617 = vmul.f32 %v3609, %v875
    %v3618 = vmul.f32 %v3612, %v875
    %v3619 = vmul.f32 %v3615, %v875
    %v3620 = vsub.f32 %v3598, %v3616
    %v3621 = vsub.f32 %v3599, %v3617
    %v3622 = vsub.f32 %v3600, %v3618
    %v3623 = vsub.f32 %v3601, %v3619
    %v3624 = vmul.f32 %v3620, %v3620
    %v3625 = vmul.f32 %v3621, %v3621
    %v3626 = vmul.f32 %v3622, %v3622
    %v3627 = vmul.f32 %v3623, %v3623
    %v3628 = vsel %vm201, %v3624, 0.0
    %3629 = vadd.xlane.f32.xlu0 %v3628
    %v3630 = vpop.xlane.xlu0 %3629
    %v3631 = vsel %vm201, %v3625, 0.0
    %3632 = vadd.xlane.f32.xlu0 %v3631
    %v3633 = vpop.xlane.xlu0 %3632
    %v3634 = vsel %vm201, %v3626, 0.0
    %3635 = vadd.xlane.f32.xlu0 %v3634
    %v3636 = vpop.xlane.xlu0 %3635
    %v3637 = vsel %vm201, %v3627, 0.0
    %3638 = vadd.xlane.f32.xlu0 %v3637
    %v3639 = vpop.xlane.xlu0 %3638
    %v3640 = vmul.f32 %v3630, %v875
    %v3641 = vmul.f32 %v3633, %v875
    %v3642 = vmul.f32 %v3636, %v875
    %v3643 = vmul.f32 %v3639, %v875
    %v3644 = vadd.f32 %v3640, 1e-05
    %v3645 = vadd.f32 %v3641, 1e-05
    %v3646 = vadd.f32 %v3642, 1e-05
    %v3647 = vadd.f32 %v3643, 1e-05
    %v3648 = vrsqrt.pop %v3644
    %v3649 = vrsqrt.pop %v3645
    %v3650 = vrsqrt.pop %v3646
    %v3651 = vrsqrt.pop %v3647
    %v3652 = vmul.f32 %v3620, %v3648
    %v3653 = vmul.f32 %v3621, %v3649
    %v3654 = vmul.f32 %v3622, %v3650
    %v3655 = vmul.f32 %v3623, %v3651
    %v3657 = vlaneseq
    %v3658 = vshrl.u32 %v3657, 7
    %v3659 = vsub.s32 0, %v3658
    %v3660 = vrot.slane %v3602, %v3659
    %v3662 = vmul.f32 %v3652, %v3660
    %v3663 = vmul.f32 %v3653, %v3660
    %v3664 = vmul.f32 %v3654, %v3660
    %v3665 = vmul.f32 %v3655, %v3660
    %v3667 = vlaneseq
    %v3668 = vshrl.u32 %v3667, 7
    %v3669 = vsub.s32 0, %v3668
    %v3670 = vrot.slane %v3603, %v3669
    %v3672 = vadd.f32 %v3662, %v3670
    %v3673 = vadd.f32 %v3663, %v3670
    %v3674 = vadd.f32 %v3664, %v3670
    %v3675 = vadd.f32 %v3665, %v3670
    %v3676 = vsel %vm201, %v3672, 0.0
    %3677 = vadd.xlane.f32.xlu0 %v3676
    %v3678 = vpop.xlane.xlu0 %3677
    %v3679 = vsel %vm201, %v3673, 0.0
    %3680 = vadd.xlane.f32.xlu0 %v3679
    %v3681 = vpop.xlane.xlu0 %3680
    %v3682 = vsel %vm201, %v3674, 0.0
    %3683 = vadd.xlane.f32.xlu0 %v3682
    %v3684 = vpop.xlane.xlu0 %3683
    %v3685 = vsel %vm201, %v3675, 0.0
    %3686 = vadd.xlane.f32.xlu0 %v3685
    %v3687 = vpop.xlane.xlu0 %3686
    %v3688 = vmul.f32 %v3678, %v875
    %v3689 = vmul.f32 %v3681, %v875
    %v3690 = vmul.f32 %v3684, %v875
    %v3691 = vmul.f32 %v3687, %v875
    %v3692 = vsub.f32 %v3672, %v3688
    %v3693 = vsub.f32 %v3673, %v3689
    %v3694 = vsub.f32 %v3674, %v3690
    %v3695 = vsub.f32 %v3675, %v3691
    %v3696 = vmul.f32 %v3692, %v3692
    %v3697 = vmul.f32 %v3693, %v3693
    %v3698 = vmul.f32 %v3694, %v3694
    %v3699 = vmul.f32 %v3695, %v3695
    %v3700 = vsel %vm201, %v3696, 0.0
    %3701 = vadd.xlane.f32.xlu0 %v3700
    %v3702 = vpop.xlane.xlu0 %3701
    %v3703 = vsel %vm201, %v3697, 0.0
    %3704 = vadd.xlane.f32.xlu0 %v3703
    %v3705 = vpop.xlane.xlu0 %3704
    %v3706 = vsel %vm201, %v3698, 0.0
    %3707 = vadd.xlane.f32.xlu0 %v3706
    %v3708 = vpop.xlane.xlu0 %3707
    %v3709 = vsel %vm201, %v3699, 0.0
    %3710 = vadd.xlane.f32.xlu0 %v3709
    %v3711 = vpop.xlane.xlu0 %3710
    %v3712 = vmul.f32 %v3702, %v875
    %v3713 = vmul.f32 %v3705, %v875
    %v3714 = vmul.f32 %v3708, %v875
    %v3715 = vmul.f32 %v3711, %v875
    %v3716 = vadd.f32 %v3712, 1e-05
    %v3717 = vadd.f32 %v3713, 1e-05
    %v3718 = vadd.f32 %v3714, 1e-05
    %v3719 = vadd.f32 %v3715, 1e-05
    %v3720 = vrsqrt.pop %v3716
    %v3721 = vrsqrt.pop %v3717
    %v3722 = vrsqrt.pop %v3718
    %v3723 = vrsqrt.pop %v3719
    %v3724 = vmul.f32 %v3692, %v3720
    %v3725 = vmul.f32 %v3693, %v3721
    %v3726 = vmul.f32 %v3694, %v3722
    %v3727 = vmul.f32 %v3695, %v3723
    %v3729 = vlaneseq
    %v3730 = vshrl.u32 %v3729, 7
    %v3731 = vsub.s32 0, %v3730
    %v3732 = vrot.slane %v1220, %v3731
    %v3734 = vmul.f32 %v3724, %v3732
    %v3735 = vmul.f32 %v3725, %v3732
    %v3736 = vmul.f32 %v3726, %v3732
    %v3737 = vmul.f32 %v3727, %v3732
    %v3739 = vlaneseq
    %v3740 = vshrl.u32 %v3739, 7
    %v3741 = vsub.s32 0, %v3740
    %v3742 = vrot.slane %v1221, %v3741
    %v3744 = vadd.f32 %v3734, %v3742
    %v3745 = vadd.f32 %v3735, %v3742
    %v3746 = vadd.f32 %v3736, %v3742
    %v3747 = vadd.f32 %v3737, %v3742
    %v3748 = vmul.u32 %v1225, 16
    %v3749 = vstv %s1232
    %v3750 = vadd.s32 %v3748, %v3749
    %vm3751 = vcmp.eq.s32.totalorder %v1223, %v3750
    %v3752 = vsel %vm3751, 1, 0
    %v3753 = vcvt.s32.f32 %v3752
    %v3755 = vsel %vm201, %v3753, 0
    %3757 = vmatprep.subr.mxu0 0.0
    %3758 = vmatpush1.msra.mxu0 %v3744
    %3759 = vmatprep.subr.mxu0 0.0
    %3760 = vmatpush1.msra.mxu0 %v3745
    %3761 = vmatprep.subr.mxu0 0.0
    %3762 = vmatpush1.msra.mxu0 %v3746
    %3763 = vmatprep.subr.mxu0 0.0
    %3764 = vmatpush1.msra.mxu0 %v3747
    %3765 = vmatprep.subr.mxu0 0.0
    %3766 = vmatpush1.msra.mxu0 0.0
    %3767 = vmatprep.subr.mxu0 0.0
    %3768 = vmatpush1.msra.mxu0 0.0
    %3769 = vmatprep.subr.mxu0 0.0
    %3770 = vmatpush1.msra.mxu0 0.0
    %3771 = vmatprep.subr.mxu0 0.0
    %3772 = vmatpush1.msra.mxu0 0.0
    %3773 = vmatprep.subr.mxu0 0.0
    %3774 = vmatpush1.msra.mxu0 0.0
    %3775 = vmatprep.subr.mxu0 0.0
    %3776 = vmatpush1.msra.mxu0 0.0
    %3777 = vmatprep.subr.mxu0 0.0
    %3778 = vmatpush1.msra.mxu0 0.0
    %3779 = vmatprep.subr.mxu0 0.0
    %3780 = vmatpush1.msra.mxu0 0.0
    %3781 = vmatprep.subr.mxu0 0.0
    %3782 = vmatpush1.msra.mxu0 0.0
    %3783 = vmatprep.subr.mxu0 0.0
    %3784 = vmatpush1.msra.mxu0 0.0
    %3785 = vmatprep.subr.mxu0 0.0
    %3786 = vmatpush1.msra.mxu0 0.0
    %3787 = vmatprep.subr.mxu0 0.0
    %3788 = vmatpush1.msra.mxu0 0.0
    %3789 = vmatprep.subr.mxu0 0.0
    %3790 = vmatpush1.msra.mxu0 0.0
    %3791 = vmatprep.subr.mxu0 0.0
    %3792 = vmatpush1.msra.mxu0 0.0
    %3793 = vmatprep.subr.mxu0 0.0
    %3794 = vmatpush1.msra.mxu0 0.0
    %3795 = vmatprep.subr.mxu0 0.0
    %3796 = vmatpush1.msra.mxu0 0.0
    %3797 = vmatprep.subr.mxu0 0.0
    %3798 = vmatpush1.msra.mxu0 0.0
    %3799 = vmatprep.subr.mxu0 0.0
    %3800 = vmatpush1.msra.mxu0 0.0
    %3801 = vmatprep.subr.mxu0 0.0
    %3802 = vmatpush1.msra.mxu0 0.0
    %3803 = vmatprep.subr.mxu0 0.0
    %3804 = vmatpush1.msra.mxu0 0.0
    %3805 = vmatprep.subr.mxu0 0.0
    %3806 = vmatpush1.msra.mxu0 0.0
    %3807 = vmatprep.subr.mxu0 0.0
    %3808 = vmatpush1.msra.mxu0 0.0
    %3809 = vmatprep.subr.mxu0 0.0
    %3810 = vmatpush1.msra.mxu0 0.0
    %3811 = vmatprep.subr.mxu0 0.0
    %3812 = vmatpush1.msra.mxu0 0.0
    %3813 = vmatprep.subr.mxu0 0.0
    %3814 = vmatpush1.msra.mxu0 0.0
    %3815 = vmatprep.subr.mxu0 0.0
    %3816 = vmatpush1.msra.mxu0 0.0
    %3817 = vmatprep.subr.mxu0 0.0
    %3818 = vmatpush1.msra.mxu0 0.0
    %3819 = vmatprep.subr.mxu0 0.0
    %3820 = vmatpush1.msra.mxu0 0.0
    %3821 = vmatprep.mubr.f32.mxu0 0.0
    %3822 = vmatmul.mubr.f32.gmra.mrb[0].mxu0 %v3755
    %v3823 = vpop.f32.mrb[0].mxu0
    %v3824 = vadd.f32 0.0, %v3823
    %v3825 = vpop.f32.mrb[0].mxu0
    %3826 = vdwg.mxu0
    %v3828 = vlaneseq
    %v3829 = vshrl.u32 %v3828, 7
    %v3830 = vsub.s32 0, %v3829
    %v3831 = vrot.slane %v1219, %v3830
    %v3834 = vsel %vm201, %v3824, 0
    %3836 = vmatprep.subr.mxu0 0.0
    %3837 = vmatpush1.msra.mxu0 %v1215
    %3838 = vmatprep.subr.mxu0 0.0
    %3839 = vmatpush1.msra.mxu0 %v1216
    %3840 = vmatprep.subr.mxu0 0.0
    %3841 = vmatpush1.msra.mxu0 %v1217
    %3842 = vmatprep.subr.mxu0 0.0
    %3843 = vmatpush1.msra.mxu0 %v1218
    %3844 = vmatprep.subr.mxu0 0.0
    %3845 = vmatpush1.msra.mxu0 0.0
    %3846 = vmatprep.subr.mxu0 0.0
    %3847 = vmatpush1.msra.mxu0 0.0
    %3848 = vmatprep.subr.mxu0 0.0
    %3849 = vmatpush1.msra.mxu0 0.0
    %3850 = vmatprep.subr.mxu0 0.0
    %3851 = vmatpush1.msra.mxu0 0.0
    %3852 = vmatprep.subr.mxu0 0.0
    %3853 = vmatpush1.msra.mxu0 0.0
    %3854 = vmatprep.subr.mxu0 0.0
    %3855 = vmatpush1.msra.mxu0 0.0
    %3856 = vmatprep.subr.mxu0 0.0
    %3857 = vmatpush1.msra.mxu0 0.0
    %3858 = vmatprep.subr.mxu0 0.0
    %3859 = vmatpush1.msra.mxu0 0.0
    %3860 = vmatprep.subr.mxu0 0.0
    %3861 = vmatpush1.msra.mxu0 0.0
    %3862 = vmatprep.subr.mxu0 0.0
    %3863 = vmatpush1.msra.mxu0 0.0
    %3864 = vmatprep.subr.mxu0 0.0
    %3865 = vmatpush1.msra.mxu0 0.0
    %3866 = vmatprep.subr.mxu0 0.0
    %3867 = vmatpush1.msra.mxu0 0.0
    %3868 = vmatprep.subr.mxu0 0.0
    %3869 = vmatpush1.msra.mxu0 0.0
    %3870 = vmatprep.subr.mxu0 0.0
    %3871 = vmatpush1.msra.mxu0 0.0
    %3872 = vmatprep.subr.mxu0 0.0
    %3873 = vmatpush1.msra.mxu0 0.0
    %3874 = vmatprep.subr.mxu0 0.0
    %3875 = vmatpush1.msra.mxu0 0.0
    %3876 = vmatprep.subr.mxu0 0.0
    %3877 = vmatpush1.msra.mxu0 0.0
    %3878 = vmatprep.subr.mxu0 0.0
    %3879 = vmatpush1.msra.mxu0 0.0
    %3880 = vmatprep.subr.mxu0 0.0
    %3881 = vmatpush1.msra.mxu0 0.0
    %3882 = vmatprep.subr.mxu0 0.0
    %3883 = vmatpush1.msra.mxu0 0.0
    %3884 = vmatprep.subr.mxu0 0.0
    %3885 = vmatpush1.msra.mxu0 0.0
    %3886 = vmatprep.subr.mxu0 0.0
    %3887 = vmatpush1.msra.mxu0 0.0
    %3888 = vmatprep.subr.mxu0 0.0
    %3889 = vmatpush1.msra.mxu0 0.0
    %3890 = vmatprep.subr.mxu0 0.0
    %3891 = vmatpush1.msra.mxu0 0.0
    %3892 = vmatprep.subr.mxu0 0.0
    %3893 = vmatpush1.msra.mxu0 0.0
    %3894 = vmatprep.subr.mxu0 0.0
    %3895 = vmatpush1.msra.mxu0 0.0
    %3896 = vmatprep.subr.mxu0 0.0
    %3897 = vmatpush1.msra.mxu0 0.0
    %3898 = vmatprep.subr.mxu0 0.0
    %3899 = vmatpush1.msra.mxu0 0.0
    %3900 = vmatprep.mubr.f32.mxu0 0.0
    %3901 = vmatmul.mubr.f32.gmra.mrb[0].mxu0 %v3834
    %v3902 = vpop.f32.mrb[0].mxu0
    %v3903 = vadd.f32 %v3831, %v3902
    %v3904 = vpop.f32.mrb[0].mxu0
    %3905 = vdwg.mxu0
    %vm3906 = vcmask 123904
    %v3907 = vsel %vm3906, %v3903, -inf
    %3908 = vmax.xlane.f32.xlu0 %v3907
    %v3909 = vpop.xlane.xlu0 %3908
    %vm3910 = vcmp.ge.f32.partialorder %v3903, %v3909
    %v3911 = vsel %vm3910, %v1226, 16.0
    %v3912 = vsel %vm3906, %v3911, inf
    %3913 = vmin.xlane.f32.xlu0 %v3912
    %v3914 = vpop.xlane.xlu0 %3913
    %vm3915 = vcmask 15360
    %v3917 = vsel %vm3915, %v1211, 0
    %v3920 = vsel %vm3915, %v1212, 0
    %v3923 = vsel %vm3915, %v1213, 0
    %v3926 = vsel %vm3915, %v1214, 0
    %vm3928 = vcmask 1041408
    %v3930 = vsel %vm3928, %v3914, 0
    %3932 = vmatprep.subr.mxu0 0.0
    %3933 = vmatpush1.msra.mxu0 %v3930
    %3934 = vmatprep.subr.mxu0 0.0
    %3935 = vmatpush1.msra.mxu0 0.0
    %3936 = vmatprep.subr.mxu0 0.0
    %3937 = vmatpush1.msra.mxu0 0.0
    %3938 = vmatprep.subr.mxu0 0.0
    %3939 = vmatpush1.msra.mxu0 0.0
    %3940 = vmatprep.subr.mxu0 0.0
    %3941 = vmatpush1.msra.mxu0 0.0
    %3942 = vmatprep.subr.mxu0 0.0
    %3943 = vmatpush1.msra.mxu0 0.0
    %3944 = vmatprep.subr.mxu0 0.0
    %3945 = vmatpush1.msra.mxu0 0.0
    %3946 = vmatprep.subr.mxu0 0.0
    %3947 = vmatpush1.msra.mxu0 0.0
    %3948 = vmatprep.subr.mxu0 0.0
    %3949 = vmatpush1.msra.mxu0 0.0
    %3950 = vmatprep.subr.mxu0 0.0
    %3951 = vmatpush1.msra.mxu0 0.0
    %3952 = vmatprep.subr.mxu0 0.0
    %3953 = vmatpush1.msra.mxu0 0.0
    %3954 = vmatprep.subr.mxu0 0.0
    %3955 = vmatpush1.msra.mxu0 0.0
    %3956 = vmatprep.subr.mxu0 0.0
    %3957 = vmatpush1.msra.mxu0 0.0
    %3958 = vmatprep.subr.mxu0 0.0
    %3959 = vmatpush1.msra.mxu0 0.0
    %3960 = vmatprep.subr.mxu0 0.0
    %3961 = vmatpush1.msra.mxu0 0.0
    %3962 = vmatprep.subr.mxu0 0.0
    %3963 = vmatpush1.msra.mxu0 0.0
    %3964 = vmatprep.subr.mxu0 0.0
    %3965 = vmatpush1.msra.mxu0 0.0
    %3966 = vmatprep.subr.mxu0 0.0
    %3967 = vmatpush1.msra.mxu0 0.0
    %3968 = vmatprep.subr.mxu0 0.0
    %3969 = vmatpush1.msra.mxu0 0.0
    %3970 = vmatprep.subr.mxu0 0.0
    %3971 = vmatpush1.msra.mxu0 0.0
    %3972 = vmatprep.subr.mxu0 0.0
    %3973 = vmatpush1.msra.mxu0 0.0
    %3974 = vmatprep.subr.mxu0 0.0
    %3975 = vmatpush1.msra.mxu0 0.0
    %3976 = vmatprep.subr.mxu0 0.0
    %3977 = vmatpush1.msra.mxu0 0.0
    %3978 = vmatprep.subr.mxu0 0.0
    %3979 = vmatpush1.msra.mxu0 0.0
    %3980 = vmatprep.subr.mxu0 0.0
    %3981 = vmatpush1.msra.mxu0 0.0
    %3982 = vmatprep.subr.mxu0 0.0
    %3983 = vmatpush1.msra.mxu0 0.0
    %3984 = vmatprep.subr.mxu0 0.0
    %3985 = vmatpush1.msra.mxu0 0.0
    %3986 = vmatprep.subr.mxu0 0.0
    %3987 = vmatpush1.msra.mxu0 0.0
    %3988 = vmatprep.subr.mxu0 0.0
    %3989 = vmatpush1.msra.mxu0 0.0
    %3990 = vmatprep.subr.mxu0 0.0
    %3991 = vmatpush1.msra.mxu0 0.0
    %3992 = vmatprep.subr.mxu0 0.0
    %3993 = vmatpush1.msra.mxu0 0.0
    %3994 = vmatprep.subr.mxu0 0.0
    %3995 = vmatpush1.msra.mxu0 0.0
    %3996 = vmatprep.mubr.f32.mxu0 0.0
    %3997 = vmatmul.mubr.f32.gmra.mrb[0].mxu0 %v3917
    %v3998 = vpop.f32.mrb[0].mxu0
    %v3999 = vadd.f32 0.5, %v3998
    %v4000 = vpop.f32.mrb[0].mxu0
    %4001 = vmatprep.mubr.f32.mxu0 0.0
    %4002 = vmatmul.mubr.f32.gmra.mrb[0].mxu0 %v3920
    %v4003 = vpop.f32.mrb[0].mxu0
    %v4004 = vadd.f32 0.5, %v4003
    %v4005 = vpop.f32.mrb[0].mxu0
    %4006 = vmatprep.mubr.f32.mxu0 0.0
    %4007 = vmatmul.mubr.f32.gmra.mrb[0].mxu0 %v3923
    %v4008 = vpop.f32.mrb[0].mxu0
    %v4009 = vadd.f32 0.5, %v4008
    %v4010 = vpop.f32.mrb[0].mxu0
    %4011 = vmatprep.mubr.f32.mxu0 0.0
    %4012 = vmatmul.mubr.f32.gmra.mrb[0].mxu0 %v3926
    %v4013 = vpop.f32.mrb[0].mxu0
    %v4014 = vadd.f32 0.5, %v4013
    %v4015 = vpop.f32.mrb[0].mxu0
    %4016 = vdwg.mxu0
    %v4017 = vcvt.f32.s32.to.zero.pseudo %v3999
    %v4018 = vcvt.f32.s32.to.zero.pseudo %v4004
    %v4019 = vcvt.f32.s32.to.zero.pseudo %v4009
    %v4020 = vcvt.f32.s32.to.zero.pseudo %v4014
    %s4021 = sadd.s32 %s1232, 1
    %v4022 = vstv %s4021
    %vm4023 = vcmp.eq.s32.totalorder %v1207, %v4022
    %vm4024 = vcmp.eq.s32.totalorder %v1208, %v4022
    %vm4025 = vcmp.eq.s32.totalorder %v1209, %v4022
    %vm4026 = vcmp.eq.s32.totalorder %v1210, %v4022
    %v4027 = vsel %vm4023, %v4017, %v1237
    %v4028 = vsel %vm4024, %v4018, %v1238
    %v4029 = vsel %vm4025, %v4019, %v1239
    %v4030 = vsel %vm4026, %v4020, %v1240
  $region186: #{seq2seq_trainer_forward.1} parent=0 // loop_footer
    %s1236 = sadd.s32 1, %s1232
  $region187: #{seq2seq_trainer_forward.1} parent=0 // loop_footer_branch
    %1231 = sbr.rel target = $region183
  $region188: #{seq2seq_trainer_forward.1} parent=0 // loop_exit
    _
  %vm4031 = vcmask 7168
  %4032 = vst.msk [vmem:[%s91] sm:$0xff] %vm4031, %v1237
  %4033 = vst.msk [vmem:[%s91 + $0x8] sm:$0xff] %vm4031, %v1238
  %4034 = vst.msk [vmem:[%s91 + $0x10] sm:$0xff] %vm4031, %v1239
  %4035 = vst.msk [vmem:[%s91 + $0x18] sm:$0xff] %vm4031, %v1240
  // Predicated region
  $region189: #{seq2seq_trainer_forward.1} parent=0 // pred_check
    _
  $region190: #{seq2seq_trainer_forward.1} parent=0 // pred_check_branch
    %4037 = sbr.rel (0) target = $region192
  $region191: #{seq2seq_trainer_forward.1} parent=0 // pred_region
    _
  $region192: #{seq2seq_trainer_forward.1} parent=0 // pred_fallthru
    _
  // Predicated region
  $region193: #{seq2seq_trainer_forward.1} parent=0 // pred_check
    _
  $region194: #{seq2seq_trainer_forward.1} parent=0 // pred_check_branch
    %4039 = sbr.rel (0) target = $region196
  $region195: #{seq2seq_trainer_forward.1} parent=0 // pred_region
    _
  $region196: #{seq2seq_trainer_forward.1} parent=0 // pred_fallthru
    _

</llo_original>
